<compile_context>
chip_gen: v7x
topology: tpu7x:2x2x1
jax: 0.10.0
libtpu: 0.0.40
codegen_flags: <defaults>
</compile_context>

<pallas_src>
import math
import jax
import jax.numpy as jnp
from jax.experimental import pallas as pl
from jax.experimental.pallas import tpu as pltpu


def pinn_mlp_kernel(x_ref, bs_ref, ph_ref,
                    w1_ref, b1_ref,
                    w2_ref, b2_ref,
                    w3_ref, b3_ref,
                    w4_ref, b4_ref,
                    w5_ref, b5_ref,
                    o_ref):
    # x block: (1, 1, tm) lane-dense row of collocation points.
    x_row = x_ref[0]                                           # (1, tm)

    # Fourier features in transposed (feature, batch) layout.
    # bs = 2*pi*[B; B]  (2n, 1),  ph = [0; pi/2]  (2n, 1):
    #   sin(bs * x + ph) == [sin(2*pi*B*x); cos(2*pi*B*x)]  -> (2n, tm)
    feat = jnp.sin(bs_ref[...] * x_row + ph_ref[...])

    # Layer 1: single fused K=2n MXU contraction, then hidden layers, all
    # (out, in) @ (in, tm) with f32 accumulation. tanh operands are lane-dense.
    h = jnp.tanh(jnp.dot(w1_ref[...], feat,
                         preferred_element_type=jnp.float32) + b1_ref[...])
    h = jnp.tanh(jnp.dot(w2_ref[...], h,
                         preferred_element_type=jnp.float32) + b2_ref[...])
    h = jnp.tanh(jnp.dot(w3_ref[...], h,
                         preferred_element_type=jnp.float32) + b3_ref[...])
    h = jnp.tanh(jnp.dot(w4_ref[...], h,
                         preferred_element_type=jnp.float32) + b4_ref[...])

    # Output layer: (1, n) @ (n, tm) -> lane-dense (1, tm) row; unmasked store.
    out = jnp.dot(w5_ref[...], h,
                  preferred_element_type=jnp.float32) + b5_ref[...]
    o_ref[0] = out.astype(o_ref.dtype)


def _pick_tm(n_rows):
    # Batch rides the lane axis, so prefer lane-aligned (multiple-of-128) tiles.
    # Cap at 512 so the live (2n, tm) Fourier features + (n, tm) hiddens stay
    # within the 64-vreg file (no spills), and keep >= 2 grid steps when N
    # allows so v7x megacore can shard the parallel axis.
    cap = 512
    if n_rows >= 256:
        cap = min(cap, n_rows // 2)
    for cand in (512, 384, 256, 128, 64, 32, 16, 8):
        if cand <= cap and cand <= n_rows and n_rows % cand == 0:
            return cand
    return n_rows


def pinn_mlp(x, params, *, tm=None):
    """x: (N, 1) float32 collocation points. params: dict (see init_params).

    Returns (N, 1) float32, identical to the PyTorch forward.
    """
    N = x.shape[0]
    if tm is None:
        tm = _pick_tm(N)
    assert N % tm == 0, "batch must be divisible by row tile"
    grid = N // tm
    n = params["B"].shape[1]

    # --- host-side layout prep (tiny, one-time per call) ---------------------
    # batch on the lane axis
    x3 = x.reshape(grid, 1, tm)
    # 2*pi folded into B; cos half realised as sin with a pi/2 phase
    b_col = (2.0 * math.pi) * params["B"].reshape(n, 1)               # (n, 1)
    bs = jnp.concatenate([b_col, b_col], axis=0)                      # (2n, 1)
    ph = jnp.concatenate(
        [jnp.zeros((n, 1), jnp.float32),
         jnp.full((n, 1), 0.5 * math.pi, jnp.float32)], axis=0)       # (2n, 1)
    # weights transposed to PyTorch-native (out, in); biases as (out, 1) columns
    w1 = params["w1"].T                                               # (n, 2n)
    w2 = params["w2"].T
    w3 = params["w3"].T
    w4 = params["w4"].T
    w5 = params["w5"].T                                               # (1, n)
    b1 = params["b1"].reshape(n, 1)
    b2 = params["b2"].reshape(n, 1)
    b3 = params["b3"].reshape(n, 1)
    b4 = params["b4"].reshape(n, 1)
    b5 = params["b5"].reshape(1, 1)

    consts = (bs, ph, w1, b1, w2, b2, w3, b3, w4, b4, w5, b5)

    x_spec = pl.BlockSpec((1, 1, tm), lambda i: (i, 0, 0))
    out_spec = pl.BlockSpec((1, 1, tm), lambda i: (i, 0, 0))

    def build(single_buffer_consts):
        def const_spec(a):
            nd = a.ndim
            if single_buffer_consts:
                return pl.BlockSpec(a.shape, lambda i: (0,) * nd,
                                    pipeline_mode=pl.Buffered(1))
            return pl.BlockSpec(a.shape, lambda i: (0,) * nd)

        in_specs = [x_spec] + [const_spec(a) for a in consts]
        return pl.pallas_call(
            pinn_mlp_kernel,
            out_shape=jax.ShapeDtypeStruct((grid, 1, tm), jnp.float32),
            grid_spec=pltpu.PrefetchScalarGridSpec(
                num_scalar_prefetch=0,
                grid=(grid,),
                in_specs=in_specs,
                out_specs=out_spec,
            ),
            compiler_params=pltpu.CompilerParams(
                dimension_semantics=("parallel",)),
        )

    try:
        # Constant-index weight blocks: request single-buffer pipelining (they
        # never change across the grid, so double-buffering is pure overhead).
        out = build(single_buffer_consts=True)(x3, *consts)
    except Exception:
        # Fallback for jax versions without single-buffer pipeline_mode support.
        out = build(single_buffer_consts=False)(x3, *consts)

    return out.reshape(N, 1)


def init_params(key, neurons, trig_scale):
    """Deterministic synthetic init matching the PyTorch module's shapes.

    Weights stored as (in, out); biases as (1, out) — the wrapper transposes.
    """
    ks = jax.random.split(key, 11)

    def linear(kw, kb, fan_in, fan_out):
        # PyTorch nn.Linear default: U(-1/sqrt(fan_in), 1/sqrt(fan_in))
        bound = 1.0 / math.sqrt(fan_in)
        w = jax.random.uniform(kw, (fan_in, fan_out), jnp.float32, -bound, bound)
        b = jax.random.uniform(kb, (1, fan_out), jnp.float32, -bound, bound)
        return w, b

    B = trig_scale * jax.random.normal(ks[0], (1, neurons), jnp.float32)
    w1, b1 = linear(ks[1], ks[2], 2 * neurons, neurons)
    w2, b2 = linear(ks[3], ks[4], neurons, neurons)
    w3, b3 = linear(ks[5], ks[6], neurons, neurons)
    w4, b4 = linear(ks[7], ks[8], neurons, neurons)
    w5, b5 = linear(ks[9], ks[10], neurons, 1)
    return dict(B=B, w1=w1, b1=b1, w2=w2, b2=b2, w3=w3, b3=b3,
                w4=w4, b4=b4, w5=w5, b5=b5)


def reference_forward(x, p):
    """Pure-JAX reference identical to the PyTorch forward."""
    x_proj = 2.0 * math.pi * x @ p["B"]
    h = jnp.concatenate([jnp.sin(x_proj), jnp.cos(x_proj)], axis=-1)
    h = jnp.tanh(h @ p["w1"] + p["b1"])
    h = jnp.tanh(h @ p["w2"] + p["b2"])
    h = jnp.tanh(h @ p["w3"] + p["b3"])
    h = jnp.tanh(h @ p["w4"] + p["b4"])
    return h @ p["w5"] + p["b5"]


if __name__ == "__main__":
    key = jax.random.PRNGKey(0)
    k_param, k_x = jax.random.split(key)

    neurons = 32       # mapping_size / hidden width
    trig_scale = 1.0
    N = 128            # batch of scalar collocation points

    params = init_params(k_param, neurons, trig_scale)
    x = jax.random.uniform(k_x, (N, 1), jnp.float32)

    out = jax.block_until_ready(pinn_mlp(x, params))   # tm auto-picked -> 128, grid = 1
    ref = reference_forward(x, params)

    assert out.shape == (N, 1)
    err = float(jnp.max(jnp.abs(out - ref)))
    assert err < 5e-5, f"mismatch vs reference (max abs err {err:.3e})"
    print("KERNEL_OK")
</pallas_src>

<mosaic_0001>
module attributes {stable_mosaic.version = 11 : i64} {
  func.func @pinn_mlp_kernel(%arg0: i32, %arg1: memref<1x1x128xf32, #tpu.memory_space<vmem>>, %arg2: memref<64x1xf32, #tpu.memory_space<vmem>>, %arg3: memref<64x1xf32, #tpu.memory_space<vmem>>, %arg4: memref<32x64xf32, #tpu.memory_space<vmem>>, %arg5: memref<32x1xf32, #tpu.memory_space<vmem>>, %arg6: memref<32x32xf32, #tpu.memory_space<vmem>>, %arg7: memref<32x1xf32, #tpu.memory_space<vmem>>, %arg8: memref<32x32xf32, #tpu.memory_space<vmem>>, %arg9: memref<32x1xf32, #tpu.memory_space<vmem>>, %arg10: memref<32x32xf32, #tpu.memory_space<vmem>>, %arg11: memref<32x1xf32, #tpu.memory_space<vmem>>, %arg12: memref<1x32xf32, #tpu.memory_space<vmem>>, %arg13: memref<1x1xf32, #tpu.memory_space<vmem>>, %arg14: memref<1x1x128xf32, #tpu.memory_space<vmem>>) attributes {dimension_semantics = [#tpu.dimension_semantics<parallel>], iteration_bounds = array<i64: 1>, scalar_prefetch = 0 : i64, scratch_operands = 0 : i64, tpu.core_type = #tpu.core_type<tc>, window_params = [{transform_indices = @transform_0, window_bounds = array<i64: 1, 1, 128>}, {pipeline_mode = #tpu.pipeline_mode<synchronous>, transform_indices = @transform_1, window_bounds = array<i64: 64, 1>}, {pipeline_mode = #tpu.pipeline_mode<synchronous>, transform_indices = @transform_2, window_bounds = array<i64: 64, 1>}, {pipeline_mode = #tpu.pipeline_mode<synchronous>, transform_indices = @transform_3, window_bounds = array<i64: 32, 64>}, {pipeline_mode = #tpu.pipeline_mode<synchronous>, transform_indices = @transform_4, window_bounds = array<i64: 32, 1>}, {pipeline_mode = #tpu.pipeline_mode<synchronous>, transform_indices = @transform_5, window_bounds = array<i64: 32, 32>}, {pipeline_mode = #tpu.pipeline_mode<synchronous>, transform_indices = @transform_6, window_bounds = array<i64: 32, 1>}, {pipeline_mode = #tpu.pipeline_mode<synchronous>, transform_indices = @transform_7, window_bounds = array<i64: 32, 32>}, {pipeline_mode = #tpu.pipeline_mode<synchronous>, transform_indices = @transform_8, window_bounds = array<i64: 32, 1>}, {pipeline_mode = #tpu.pipeline_mode<synchronous>, transform_indices = @transform_9, window_bounds = array<i64: 32, 32>}, {pipeline_mode = #tpu.pipeline_mode<synchronous>, transform_indices = @transform_10, window_bounds = array<i64: 32, 1>}, {pipeline_mode = #tpu.pipeline_mode<synchronous>, transform_indices = @transform_11, window_bounds = array<i64: 1, 32>}, {pipeline_mode = #tpu.pipeline_mode<synchronous>, transform_indices = @transform_12, window_bounds = array<i64: 1, 1>}, {transform_indices = @transform_13, window_bounds = array<i64: 1, 1, 128>}]} {
    %c0 = arith.constant 0 : index
    %c0_0 = arith.constant 0 : index
    %c0_1 = arith.constant 0 : index
    %0 = vector.load %arg1[%c0, %c0_0, %c0_1] : memref<1x1x128xf32, #tpu.memory_space<vmem>>, vector<1x1x128xf32>
    %1 = vector.shape_cast %0 : vector<1x1x128xf32> to vector<1x128xf32>
    %c0_2 = arith.constant 0 : index
    %c0_3 = arith.constant 0 : index
    %2 = vector.load %arg2[%c0_2, %c0_3] : memref<64x1xf32, #tpu.memory_space<vmem>>, vector<64x1xf32>
    %3 = vector.broadcast %2 : vector<64x1xf32> to vector<64x128xf32>
    %4 = vector.broadcast %1 : vector<1x128xf32> to vector<64x128xf32>
    %5 = arith.mulf %3, %4 : vector<64x128xf32>
    %c0_4 = arith.constant 0 : index
    %c0_5 = arith.constant 0 : index
    %6 = vector.load %arg3[%c0_4, %c0_5] : memref<64x1xf32, #tpu.memory_space<vmem>>, vector<64x1xf32>
    %7 = vector.broadcast %6 : vector<64x1xf32> to vector<64x128xf32>
    %8 = arith.addf %5, %7 : vector<64x128xf32>
    %9 = math.sin %8 : vector<64x128xf32>
    %c0_6 = arith.constant 0 : index
    %c0_7 = arith.constant 0 : index
    %10 = vector.load %arg4[%c0_6, %c0_7] : memref<32x64xf32, #tpu.memory_space<vmem>>, vector<32x64xf32>
    %cst = arith.constant dense<0.000000e+00> : vector<32x128xf32>
    %11 = tpu.matmul %10, %9, %cst {dimension_numbers = #tpu.dot_dimension_numbers<[1], [0], [0], [1], [0, 0, 1, 1], [], []>} : vector<32x64xf32>, vector<64x128xf32>, vector<32x128xf32> -> vector<32x128xf32>
    %c0_8 = arith.constant 0 : index
    %c0_9 = arith.constant 0 : index
    %12 = vector.load %arg5[%c0_8, %c0_9] : memref<32x1xf32, #tpu.memory_space<vmem>>, vector<32x1xf32>
    %13 = vector.broadcast %12 : vector<32x1xf32> to vector<32x128xf32>
    %14 = arith.addf %11, %13 : vector<32x128xf32>
    %15 = math.tanh %14 : vector<32x128xf32>
    %c0_10 = arith.constant 0 : index
    %c0_11 = arith.constant 0 : index
    %16 = vector.load %arg6[%c0_10, %c0_11] : memref<32x32xf32, #tpu.memory_space<vmem>>, vector<32x32xf32>
    %cst_12 = arith.constant dense<0.000000e+00> : vector<32x128xf32>
    %17 = tpu.matmul %16, %15, %cst_12 {dimension_numbers = #tpu.dot_dimension_numbers<[1], [0], [0], [1], [0, 0, 1, 1], [], []>} : vector<32x32xf32>, vector<32x128xf32>, vector<32x128xf32> -> vector<32x128xf32>
    %c0_13 = arith.constant 0 : index
    %c0_14 = arith.constant 0 : index
    %18 = vector.load %arg7[%c0_13, %c0_14] : memref<32x1xf32, #tpu.memory_space<vmem>>, vector<32x1xf32>
    %19 = vector.broadcast %18 : vector<32x1xf32> to vector<32x128xf32>
    %20 = arith.addf %17, %19 : vector<32x128xf32>
    %21 = math.tanh %20 : vector<32x128xf32>
    %c0_15 = arith.constant 0 : index
    %c0_16 = arith.constant 0 : index
    %22 = vector.load %arg8[%c0_15, %c0_16] : memref<32x32xf32, #tpu.memory_space<vmem>>, vector<32x32xf32>
    %cst_17 = arith.constant dense<0.000000e+00> : vector<32x128xf32>
    %23 = tpu.matmul %22, %21, %cst_17 {dimension_numbers = #tpu.dot_dimension_numbers<[1], [0], [0], [1], [0, 0, 1, 1], [], []>} : vector<32x32xf32>, vector<32x128xf32>, vector<32x128xf32> -> vector<32x128xf32>
    %c0_18 = arith.constant 0 : index
    %c0_19 = arith.constant 0 : index
    %24 = vector.load %arg9[%c0_18, %c0_19] : memref<32x1xf32, #tpu.memory_space<vmem>>, vector<32x1xf32>
    %25 = vector.broadcast %24 : vector<32x1xf32> to vector<32x128xf32>
    %26 = arith.addf %23, %25 : vector<32x128xf32>
    %27 = math.tanh %26 : vector<32x128xf32>
    %c0_20 = arith.constant 0 : index
    %c0_21 = arith.constant 0 : index
    %28 = vector.load %arg10[%c0_20, %c0_21] : memref<32x32xf32, #tpu.memory_space<vmem>>, vector<32x32xf32>
    %cst_22 = arith.constant dense<0.000000e+00> : vector<32x128xf32>
    %29 = tpu.matmul %28, %27, %cst_22 {dimension_numbers = #tpu.dot_dimension_numbers<[1], [0], [0], [1], [0, 0, 1, 1], [], []>} : vector<32x32xf32>, vector<32x128xf32>, vector<32x128xf32> -> vector<32x128xf32>
    %c0_23 = arith.constant 0 : index
    %c0_24 = arith.constant 0 : index
    %30 = vector.load %arg11[%c0_23, %c0_24] : memref<32x1xf32, #tpu.memory_space<vmem>>, vector<32x1xf32>
    %31 = vector.broadcast %30 : vector<32x1xf32> to vector<32x128xf32>
    %32 = arith.addf %29, %31 : vector<32x128xf32>
    %33 = math.tanh %32 : vector<32x128xf32>
    %c0_25 = arith.constant 0 : index
    %c0_26 = arith.constant 0 : index
    %34 = vector.load %arg12[%c0_25, %c0_26] : memref<1x32xf32, #tpu.memory_space<vmem>>, vector<1x32xf32>
    %cst_27 = arith.constant dense<0.000000e+00> : vector<1x128xf32>
    %35 = tpu.matmul %34, %33, %cst_27 {dimension_numbers = #tpu.dot_dimension_numbers<[1], [0], [0], [1], [0, 0, 1, 1], [], []>} : vector<1x32xf32>, vector<32x128xf32>, vector<1x128xf32> -> vector<1x128xf32>
    %c0_28 = arith.constant 0 : index
    %c0_29 = arith.constant 0 : index
    %36 = vector.load %arg13[%c0_28, %c0_29] : memref<1x1xf32, #tpu.memory_space<vmem>>, vector<1x1xf32>
    %37 = vector.broadcast %36 : vector<1x1xf32> to vector<1x128xf32>
    %38 = arith.addf %35, %37 : vector<1x128xf32>
    %c0_30 = arith.constant 0 : index
    %c0_31 = arith.constant 0 : index
    %c0_32 = arith.constant 0 : index
    %39 = vector.load %arg14[%c0_30, %c0_31, %c0_32] : memref<1x1x128xf32, #tpu.memory_space<vmem>>, vector<1x1x128xf32>
    %40 = vector.shape_cast %39 : vector<1x1x128xf32> to vector<1x128xf32>
    %41 = vector.shape_cast %38 : vector<1x128xf32> to vector<1x1x128xf32>
    tpu.vector_store %arg14[%c0_30, %c0_31, %c0_32], %41 {strides = array<i32>} : memref<1x1x128xf32, #tpu.memory_space<vmem>>, vector<1x1x128xf32>,
    return
  }
  func.func @transform_0(%arg0: i32) -> (i32, i32, i32) {
    %c0_i32 = arith.constant 0 : i32
    %c0_i32_0 = arith.constant 0 : i32
    %c0_i32_1 = arith.constant 0 : i32
    return %arg0, %c0_i32, %c0_i32_0 : i32, i32, i32
  }
  func.func @transform_1(%arg0: i32) -> (i32, i32) {
    %c0_i32 = arith.constant 0 : i32
    %c0_i32_0 = arith.constant 0 : i32
    %c0_i32_1 = arith.constant 0 : i32
    return %c0_i32, %c0_i32_0 : i32, i32
  }
  func.func @transform_2(%arg0: i32) -> (i32, i32) {
    %c0_i32 = arith.constant 0 : i32
    %c0_i32_0 = arith.constant 0 : i32
    %c0_i32_1 = arith.constant 0 : i32
    return %c0_i32, %c0_i32_0 : i32, i32
  }
  func.func @transform_3(%arg0: i32) -> (i32, i32) {
    %c0_i32 = arith.constant 0 : i32
    %c0_i32_0 = arith.constant 0 : i32
    %c0_i32_1 = arith.constant 0 : i32
    return %c0_i32, %c0_i32_0 : i32, i32
  }
  func.func @transform_4(%arg0: i32) -> (i32, i32) {
    %c0_i32 = arith.constant 0 : i32
    %c0_i32_0 = arith.constant 0 : i32
    %c0_i32_1 = arith.constant 0 : i32
    return %c0_i32, %c0_i32_0 : i32, i32
  }
  func.func @transform_5(%arg0: i32) -> (i32, i32) {
    %c0_i32 = arith.constant 0 : i32
    %c0_i32_0 = arith.constant 0 : i32
    %c0_i32_1 = arith.constant 0 : i32
    return %c0_i32, %c0_i32_0 : i32, i32
  }
  func.func @transform_6(%arg0: i32) -> (i32, i32) {
    %c0_i32 = arith.constant 0 : i32
    %c0_i32_0 = arith.constant 0 : i32
    %c0_i32_1 = arith.constant 0 : i32
    return %c0_i32, %c0_i32_0 : i32, i32
  }
  func.func @transform_7(%arg0: i32) -> (i32, i32) {
    %c0_i32 = arith.constant 0 : i32
    %c0_i32_0 = arith.constant 0 : i32
    %c0_i32_1 = arith.constant 0 : i32
    return %c0_i32, %c0_i32_0 : i32, i32
  }
  func.func @transform_8(%arg0: i32) -> (i32, i32) {
    %c0_i32 = arith.constant 0 : i32
    %c0_i32_0 = arith.constant 0 : i32
    %c0_i32_1 = arith.constant 0 : i32
    return %c0_i32, %c0_i32_0 : i32, i32
  }
  func.func @transform_9(%arg0: i32) -> (i32, i32) {
    %c0_i32 = arith.constant 0 : i32
    %c0_i32_0 = arith.constant 0 : i32
    %c0_i32_1 = arith.constant 0 : i32
    return %c0_i32, %c0_i32_0 : i32, i32
  }
  func.func @transform_10(%arg0: i32) -> (i32, i32) {
    %c0_i32 = arith.constant 0 : i32
    %c0_i32_0 = arith.constant 0 : i32
    %c0_i32_1 = arith.constant 0 : i32
    return %c0_i32, %c0_i32_0 : i32, i32
  }
  func.func @transform_11(%arg0: i32) -> (i32, i32) {
    %c0_i32 = arith.constant 0 : i32
    %c0_i32_0 = arith.constant 0 : i32
    %c0_i32_1 = arith.constant 0 : i32
    return %c0_i32, %c0_i32_0 : i32, i32
  }
  func.func @transform_12(%arg0: i32) -> (i32, i32) {
    %c0_i32 = arith.constant 0 : i32
    %c0_i32_0 = arith.constant 0 : i32
    %c0_i32_1 = arith.constant 0 : i32
    return %c0_i32, %c0_i32_0 : i32, i32
  }
  func.func @transform_13(%arg0: i32) -> (i32, i32, i32) {
    %c0_i32 = arith.constant 0 : i32
    %c0_i32_0 = arith.constant 0 : i32
    %c0_i32_1 = arith.constant 0 : i32
    return %arg0, %c0_i32, %c0_i32_0 : i32, i32, i32
  }
}

module attributes {stable_mosaic.version = 11 : i64} {
  func.func @pinn_mlp_kernel(%arg0: i32, %arg1: memref<1x1x128xf32, #tpu.memory_space<vmem>>, %arg2: memref<64x1xf32, #tpu.memory_space<vmem>>, %arg3: memref<64x1xf32, #tpu.memory_space<vmem>>, %arg4: memref<32x64xf32, #tpu.memory_space<vmem>>, %arg5: memref<32x1xf32, #tpu.memory_space<vmem>>, %arg6: memref<32x32xf32, #tpu.memory_space<vmem>>, %arg7: memref<32x1xf32, #tpu.memory_space<vmem>>, %arg8: memref<32x32xf32, #tpu.memory_space<vmem>>, %arg9: memref<32x1xf32, #tpu.memory_space<vmem>>, %arg10: memref<32x32xf32, #tpu.memory_space<vmem>>, %arg11: memref<32x1xf32, #tpu.memory_space<vmem>>, %arg12: memref<1x32xf32, #tpu.memory_space<vmem>>, %arg13: memref<1x1xf32, #tpu.memory_space<vmem>>, %arg14: memref<1x1x128xf32, #tpu.memory_space<vmem>>) attributes {dimension_semantics = [#tpu.dimension_semantics<parallel>], iteration_bounds = array<i64: 1>, scalar_prefetch = 0 : i64, scratch_operands = 0 : i64, tpu.core_type = #tpu.core_type<tc>, window_params = [{transform_indices = @transform_0, window_bounds = array<i64: 1, 1, 128>}, {pipeline_mode = #tpu.pipeline_mode<synchronous>, transform_indices = @transform_1, window_bounds = array<i64: 64, 1>}, {pipeline_mode = #tpu.pipeline_mode<synchronous>, transform_indices = @transform_2, window_bounds = array<i64: 64, 1>}, {pipeline_mode = #tpu.pipeline_mode<synchronous>, transform_indices = @transform_3, window_bounds = array<i64: 32, 64>}, {pipeline_mode = #tpu.pipeline_mode<synchronous>, transform_indices = @transform_4, window_bounds = array<i64: 32, 1>}, {pipeline_mode = #tpu.pipeline_mode<synchronous>, transform_indices = @transform_5, window_bounds = array<i64: 32, 32>}, {pipeline_mode = #tpu.pipeline_mode<synchronous>, transform_indices = @transform_6, window_bounds = array<i64: 32, 1>}, {pipeline_mode = #tpu.pipeline_mode<synchronous>, transform_indices = @transform_7, window_bounds = array<i64: 32, 32>}, {pipeline_mode = #tpu.pipeline_mode<synchronous>, transform_indices = @transform_8, window_bounds = array<i64: 32, 1>}, {pipeline_mode = #tpu.pipeline_mode<synchronous>, transform_indices = @transform_9, window_bounds = array<i64: 32, 32>}, {pipeline_mode = #tpu.pipeline_mode<synchronous>, transform_indices = @transform_10, window_bounds = array<i64: 32, 1>}, {pipeline_mode = #tpu.pipeline_mode<synchronous>, transform_indices = @transform_11, window_bounds = array<i64: 1, 32>}, {pipeline_mode = #tpu.pipeline_mode<synchronous>, transform_indices = @transform_12, window_bounds = array<i64: 1, 1>}, {transform_indices = @transform_13, window_bounds = array<i64: 1, 1, 128>}]} {
    %c0 = arith.constant 0 : index
    %c0_0 = arith.constant 0 : index
    %c0_1 = arith.constant 0 : index
    %0 = vector.load %arg1[%c0, %c0_0, %c0_1] : memref<1x1x128xf32, #tpu.memory_space<vmem>>, vector<1x1x128xf32>
    %1 = vector.shape_cast %0 : vector<1x1x128xf32> to vector<1x128xf32>
    %c0_2 = arith.constant 0 : index
    %c0_3 = arith.constant 0 : index
    %2 = vector.load %arg2[%c0_2, %c0_3] : memref<64x1xf32, #tpu.memory_space<vmem>>, vector<64x1xf32>
    %3 = vector.broadcast %2 : vector<64x1xf32> to vector<64x128xf32>
    %4 = vector.broadcast %1 : vector<1x128xf32> to vector<64x128xf32>
    %5 = arith.mulf %3, %4 : vector<64x128xf32>
    %c0_4 = arith.constant 0 : index
    %c0_5 = arith.constant 0 : index
    %6 = vector.load %arg3[%c0_4, %c0_5] : memref<64x1xf32, #tpu.memory_space<vmem>>, vector<64x1xf32>
    %7 = vector.broadcast %6 : vector<64x1xf32> to vector<64x128xf32>
    %8 = arith.addf %5, %7 : vector<64x128xf32>
    %9 = math.sin %8 : vector<64x128xf32>
    %c0_6 = arith.constant 0 : index
    %c0_7 = arith.constant 0 : index
    %10 = vector.load %arg4[%c0_6, %c0_7] : memref<32x64xf32, #tpu.memory_space<vmem>>, vector<32x64xf32>
    %cst = arith.constant dense<0.000000e+00> : vector<32x128xf32>
    %11 = tpu.matmul %10, %9, %cst {dimension_numbers = #tpu.dot_dimension_numbers<[1], [0], [0], [1], [0, 0, 1, 1], [], []>} : vector<32x64xf32>, vector<64x128xf32>, vector<32x128xf32> -> vector<32x128xf32>
    %c0_8 = arith.constant 0 : index
    %c0_9 = arith.constant 0 : index
    %12 = vector.load %arg5[%c0_8, %c0_9] : memref<32x1xf32, #tpu.memory_space<vmem>>, vector<32x1xf32>
    %13 = vector.broadcast %12 : vector<32x1xf32> to vector<32x128xf32>
    %14 = arith.addf %11, %13 : vector<32x128xf32>
    %15 = math.tanh %14 : vector<32x128xf32>
    %c0_10 = arith.constant 0 : index
    %c0_11 = arith.constant 0 : index
    %16 = vector.load %arg6[%c0_10, %c0_11] : memref<32x32xf32, #tpu.memory_space<vmem>>, vector<32x32xf32>
    %cst_12 = arith.constant dense<0.000000e+00> : vector<32x128xf32>
    %17 = tpu.matmul %16, %15, %cst_12 {dimension_numbers = #tpu.dot_dimension_numbers<[1], [0], [0], [1], [0, 0, 1, 1], [], []>} : vector<32x32xf32>, vector<32x128xf32>, vector<32x128xf32> -> vector<32x128xf32>
    %c0_13 = arith.constant 0 : index
    %c0_14 = arith.constant 0 : index
    %18 = vector.load %arg7[%c0_13, %c0_14] : memref<32x1xf32, #tpu.memory_space<vmem>>, vector<32x1xf32>
    %19 = vector.broadcast %18 : vector<32x1xf32> to vector<32x128xf32>
    %20 = arith.addf %17, %19 : vector<32x128xf32>
    %21 = math.tanh %20 : vector<32x128xf32>
    %c0_15 = arith.constant 0 : index
    %c0_16 = arith.constant 0 : index
    %22 = vector.load %arg8[%c0_15, %c0_16] : memref<32x32xf32, #tpu.memory_space<vmem>>, vector<32x32xf32>
    %cst_17 = arith.constant dense<0.000000e+00> : vector<32x128xf32>
    %23 = tpu.matmul %22, %21, %cst_17 {dimension_numbers = #tpu.dot_dimension_numbers<[1], [0], [0], [1], [0, 0, 1, 1], [], []>} : vector<32x32xf32>, vector<32x128xf32>, vector<32x128xf32> -> vector<32x128xf32>
    %c0_18 = arith.constant 0 : index
    %c0_19 = arith.constant 0 : index
    %24 = vector.load %arg9[%c0_18, %c0_19] : memref<32x1xf32, #tpu.memory_space<vmem>>, vector<32x1xf32>
    %25 = vector.broadcast %24 : vector<32x1xf32> to vector<32x128xf32>
    %26 = arith.addf %23, %25 : vector<32x128xf32>
    %27 = math.tanh %26 : vector<32x128xf32>
    %c0_20 = arith.constant 0 : index
    %c0_21 = arith.constant 0 : index
    %28 = vector.load %arg10[%c0_20, %c0_21] : memref<32x32xf32, #tpu.memory_space<vmem>>, vector<32x32xf32>
    %cst_22 = arith.constant dense<0.000000e+00> : vector<32x128xf32>
    %29 = tpu.matmul %28, %27, %cst_22 {dimension_numbers = #tpu.dot_dimension_numbers<[1], [0], [0], [1], [0, 0, 1, 1], [], []>} : vector<32x32xf32>, vector<32x128xf32>, vector<32x128xf32> -> vector<32x128xf32>
    %c0_23 = arith.constant 0 : index
    %c0_24 = arith.constant 0 : index
    %30 = vector.load %arg11[%c0_23, %c0_24] : memref<32x1xf32, #tpu.memory_space<vmem>>, vector<32x1xf32>
    %31 = vector.broadcast %30 : vector<32x1xf32> to vector<32x128xf32>
    %32 = arith.addf %29, %31 : vector<32x128xf32>
    %33 = math.tanh %32 : vector<32x128xf32>
    %c0_25 = arith.constant 0 : index
    %c0_26 = arith.constant 0 : index
    %34 = vector.load %arg12[%c0_25, %c0_26] : memref<1x32xf32, #tpu.memory_space<vmem>>, vector<1x32xf32>
    %cst_27 = arith.constant dense<0.000000e+00> : vector<1x128xf32>
    %35 = tpu.matmul %34, %33, %cst_27 {dimension_numbers = #tpu.dot_dimension_numbers<[1], [0], [0], [1], [0, 0, 1, 1], [], []>} : vector<1x32xf32>, vector<32x128xf32>, vector<1x128xf32> -> vector<1x128xf32>
    %c0_28 = arith.constant 0 : index
    %c0_29 = arith.constant 0 : index
    %36 = vector.load %arg13[%c0_28, %c0_29] : memref<1x1xf32, #tpu.memory_space<vmem>>, vector<1x1xf32>
    %37 = vector.broadcast %36 : vector<1x1xf32> to vector<1x128xf32>
    %38 = arith.addf %35, %37 : vector<1x128xf32>
    %c0_30 = arith.constant 0 : index
    %c0_31 = arith.constant 0 : index
    %c0_32 = arith.constant 0 : index
    %39 = vector.load %arg14[%c0_30, %c0_31, %c0_32] : memref<1x1x128xf32, #tpu.memory_space<vmem>>, vector<1x1x128xf32>
    %40 = vector.shape_cast %39 : vector<1x1x128xf32> to vector<1x128xf32>
    %41 = vector.shape_cast %38 : vector<1x128xf32> to vector<1x1x128xf32>
    tpu.vector_store %arg14[%c0_30, %c0_31, %c0_32], %41 {strides = array<i32>} : memref<1x1x128xf32, #tpu.memory_space<vmem>>, vector<1x1x128xf32>,
    return
  }
  func.func @transform_0(%arg0: i32) -> (i32, i32, i32) {
    %c0_i32 = arith.constant 0 : i32
    %c0_i32_0 = arith.constant 0 : i32
    %c0_i32_1 = arith.constant 0 : i32
    return %arg0, %c0_i32, %c0_i32_0 : i32, i32, i32
  }
  func.func @transform_1(%arg0: i32) -> (i32, i32) {
    %c0_i32 = arith.constant 0 : i32
    %c0_i32_0 = arith.constant 0 : i32
    %c0_i32_1 = arith.constant 0 : i32
    return %c0_i32, %c0_i32_0 : i32, i32
  }
  func.func @transform_2(%arg0: i32) -> (i32, i32) {
    %c0_i32 = arith.constant 0 : i32
    %c0_i32_0 = arith.constant 0 : i32
    %c0_i32_1 = arith.constant 0 : i32
    return %c0_i32, %c0_i32_0 : i32, i32
  }
  func.func @transform_3(%arg0: i32) -> (i32, i32) {
    %c0_i32 = arith.constant 0 : i32
    %c0_i32_0 = arith.constant 0 : i32
    %c0_i32_1 = arith.constant 0 : i32
    return %c0_i32, %c0_i32_0 : i32, i32
  }
  func.func @transform_4(%arg0: i32) -> (i32, i32) {
    %c0_i32 = arith.constant 0 : i32
    %c0_i32_0 = arith.constant 0 : i32
    %c0_i32_1 = arith.constant 0 : i32
    return %c0_i32, %c0_i32_0 : i32, i32
  }
  func.func @transform_5(%arg0: i32) -> (i32, i32) {
    %c0_i32 = arith.constant 0 : i32
    %c0_i32_0 = arith.constant 0 : i32
    %c0_i32_1 = arith.constant 0 : i32
    return %c0_i32, %c0_i32_0 : i32, i32
  }
  func.func @transform_6(%arg0: i32) -> (i32, i32) {
    %c0_i32 = arith.constant 0 : i32
    %c0_i32_0 = arith.constant 0 : i32
    %c0_i32_1 = arith.constant 0 : i32
    return %c0_i32, %c0_i32_0 : i32, i32
  }
  func.func @transform_7(%arg0: i32) -> (i32, i32) {
    %c0_i32 = arith.constant 0 : i32
    %c0_i32_0 = arith.constant 0 : i32
    %c0_i32_1 = arith.constant 0 : i32
    return %c0_i32, %c0_i32_0 : i32, i32
  }
  func.func @transform_8(%arg0: i32) -> (i32, i32) {
    %c0_i32 = arith.constant 0 : i32
    %c0_i32_0 = arith.constant 0 : i32
    %c0_i32_1 = arith.constant 0 : i32
    return %c0_i32, %c0_i32_0 : i32, i32
  }
  func.func @transform_9(%arg0: i32) -> (i32, i32) {
    %c0_i32 = arith.constant 0 : i32
    %c0_i32_0 = arith.constant 0 : i32
    %c0_i32_1 = arith.constant 0 : i32
    return %c0_i32, %c0_i32_0 : i32, i32
  }
  func.func @transform_10(%arg0: i32) -> (i32, i32) {
    %c0_i32 = arith.constant 0 : i32
    %c0_i32_0 = arith.constant 0 : i32
    %c0_i32_1 = arith.constant 0 : i32
    return %c0_i32, %c0_i32_0 : i32, i32
  }
  func.func @transform_11(%arg0: i32) -> (i32, i32) {
    %c0_i32 = arith.constant 0 : i32
    %c0_i32_0 = arith.constant 0 : i32
    %c0_i32_1 = arith.constant 0 : i32
    return %c0_i32, %c0_i32_0 : i32, i32
  }
  func.func @transform_12(%arg0: i32) -> (i32, i32) {
    %c0_i32 = arith.constant 0 : i32
    %c0_i32_0 = arith.constant 0 : i32
    %c0_i32_1 = arith.constant 0 : i32
    return %c0_i32, %c0_i32_0 : i32, i32
  }
  func.func @transform_13(%arg0: i32) -> (i32, i32, i32) {
    %c0_i32 = arith.constant 0 : i32
    %c0_i32_0 = arith.constant 0 : i32
    %c0_i32_1 = arith.constant 0 : i32
    return %arg0, %c0_i32, %c0_i32_0 : i32, i32, i32
  }
}

</mosaic_0001>

<llo_original>
// kernel: tpu_custom_call.1
$region0: #{tpu_custom_call.1}
  #allocation0 [shape = 'u32[]', space=smem, size = 0x4, offset = 0x4, fixed_abs, tag = 'smem constant byte address 0x4 - core index']
  #allocation1 [shape = 'u32[144,128]{1,0:T(1,128)}', space=vmem, size = 0x12000, scoped, tag = 'internal scratch']
  #allocation2 [shape = 'f32[1,1]{1,0:T(1,128)S(1)}', space=vmem, size = 0x200, scoped, tag = 'scoped memory for tpu_custom_call.1']
  %s0 = inlined_call_operand.vmem [shape: f32[1,1,128], index: 0, kind: input, shape index: {}]
  %s1 = inlined_call_operand.vmem [shape: f32[64,1], index: 1, kind: input, shape index: {}]
  %s2 = inlined_call_operand.vmem [shape: f32[64,1], index: 2, kind: input, shape index: {}]
  %s3 = inlined_call_operand.vmem [shape: f32[32,64], index: 3, kind: input, shape index: {}]
  %s4 = inlined_call_operand.vmem [shape: f32[32,1], index: 4, kind: input, shape index: {}]
  %s5 = inlined_call_operand.vmem [shape: f32[32,32], index: 5, kind: input, shape index: {}]
  %s6 = inlined_call_operand.vmem [shape: f32[32,1], index: 6, kind: input, shape index: {}]
  %s7 = inlined_call_operand.vmem [shape: f32[32,32], index: 7, kind: input, shape index: {}]
  %s8 = inlined_call_operand.vmem [shape: f32[32,1], index: 8, kind: input, shape index: {}]
  %s9 = inlined_call_operand.vmem [shape: f32[32,32], index: 9, kind: input, shape index: {}]
  %s10 = inlined_call_operand.vmem [shape: f32[32,1], index: 10, kind: input, shape index: {}]
  %s11 = inlined_call_operand.vmem [shape: f32[1,32], index: 11, kind: input, shape index: {}]
  %s12 = inlined_call_operand.<no memory space> [shape: f32[1,1], index: 12, kind: input, shape index: {}]
  %s13 = inlined_call_operand.hbm [shape: f32[1,1,128], index: 13, kind: output, shape index: {}]
  %s14 = sld [smem:[#allocation0]]
  $region62: #{tpu_custom_call.1} parent=0
    _
  %s16 = ssub.s32 1, %s14
  %s17 = scalar_select 0, %s16, %s14
  %v18 = vstv %s12
  %19 = vst [vmem:[#allocation2] sm:$0x1] %v18
  $region1: #{tpu_custom_call.1} parent=0
    #allocation3 [shape = 'u8[512]{0}', space=vmem, size = 0x400, scoped, tag = 'output window, operand 0, single buffered']
    #allocation4 [shape = 's32[1]{0}', space=sflag, size = 0x4, scoped, tag = 'scoped memory for tpu_custom_call.1']
    %20 = vsyncpa [#allocation4], 0
    // Predicated region
    $region2: #{tpu_custom_call.1} parent=1 // pred_check
      _
    $region3: #{tpu_custom_call.1} parent=1 // pred_check_branch
      %22 = sbr.rel (0) target = $region5
    $region4: #{tpu_custom_call.1} parent=1 // pred_region
      _
    $region5: #{tpu_custom_call.1} parent=1 // pred_fallthru
      _
    // Predicated region
    $region6: #{tpu_custom_call.1} parent=1 // pred_check
      _
    $region7: #{tpu_custom_call.1} parent=1 // pred_check_branch
      %24 = sbr.rel (0) target = $region9
    $region8: #{tpu_custom_call.1} parent=1 // pred_region
      _
    $region9: #{tpu_custom_call.1} parent=1 // pred_fallthru
      _
    // Predicated region
    $region10: #{tpu_custom_call.1} parent=1 // pred_check
      _
    $region11: #{tpu_custom_call.1} parent=1 // pred_check_branch
      %26 = sbr.rel (0) target = $region13
    $region12: #{tpu_custom_call.1} parent=1 // pred_region
      _
    $region13: #{tpu_custom_call.1} parent=1 // pred_fallthru
      _
    // Predicated region
    $region14: #{tpu_custom_call.1} parent=1 // pred_check
      _
    $region15: #{tpu_custom_call.1} parent=1 // pred_check_branch
      %28 = sbr.rel (0) target = $region17
    $region16: #{tpu_custom_call.1} parent=1 // pred_region
      _
    $region17: #{tpu_custom_call.1} parent=1 // pred_fallthru
      _
    // Predicated region
    $region18: #{tpu_custom_call.1} parent=1 // pred_check
      _
    $region19: #{tpu_custom_call.1} parent=1 // pred_check_branch
      %30 = sbr.rel (0) target = $region21
    $region20: #{tpu_custom_call.1} parent=1 // pred_region
      _
    $region21: #{tpu_custom_call.1} parent=1 // pred_fallthru
      _
    // Predicated region
    $region22: #{tpu_custom_call.1} parent=1 // pred_check
      _
    $region23: #{tpu_custom_call.1} parent=1 // pred_check_branch
      %32 = sbr.rel (0) target = $region25
    $region24: #{tpu_custom_call.1} parent=1 // pred_region
      _
    $region25: #{tpu_custom_call.1} parent=1 // pred_fallthru
      _
    // Predicated region
    $region26: #{tpu_custom_call.1} parent=1 // pred_check
      _
    $region27: #{tpu_custom_call.1} parent=1 // pred_check_branch
      %34 = sbr.rel (0) target = $region29
    $region28: #{tpu_custom_call.1} parent=1 // pred_region
      _
    $region29: #{tpu_custom_call.1} parent=1 // pred_fallthru
      _
    // Predicated region
    $region30: #{tpu_custom_call.1} parent=1 // pred_check
      _
    $region31: #{tpu_custom_call.1} parent=1 // pred_check_branch
      %36 = sbr.rel (0) target = $region33
    $region32: #{tpu_custom_call.1} parent=1 // pred_region
      _
    $region33: #{tpu_custom_call.1} parent=1 // pred_fallthru
      _
    // Predicated region
    $region34: #{tpu_custom_call.1} parent=1 // pred_check
      _
    $region35: #{tpu_custom_call.1} parent=1 // pred_check_branch
      %38 = sbr.rel (0) target = $region37
    $region36: #{tpu_custom_call.1} parent=1 // pred_region
      _
    $region37: #{tpu_custom_call.1} parent=1 // pred_fallthru
      _
    // Predicated region
    $region38: #{tpu_custom_call.1} parent=1 // pred_check
      _
    $region39: #{tpu_custom_call.1} parent=1 // pred_check_branch
      %40 = sbr.rel (0) target = $region41
    $region40: #{tpu_custom_call.1} parent=1 // pred_region
      _
    $region41: #{tpu_custom_call.1} parent=1 // pred_fallthru
      _
    // Predicated region
    $region42: #{tpu_custom_call.1} parent=1 // pred_check
      _
    $region43: #{tpu_custom_call.1} parent=1 // pred_check_branch
      %42 = sbr.rel (0) target = $region45
    $region44: #{tpu_custom_call.1} parent=1 // pred_region
      _
    $region45: #{tpu_custom_call.1} parent=1 // pred_fallthru
      _
    // Predicated region
    $region46: #{tpu_custom_call.1} parent=1 // pred_check
      _
    $region47: #{tpu_custom_call.1} parent=1 // pred_check_branch
      %44 = sbr.rel (0) target = $region49
    $region48: #{tpu_custom_call.1} parent=1 // pred_region
      _
    $region49: #{tpu_custom_call.1} parent=1 // pred_fallthru
      _
    // Predicated region
    $region50: #{tpu_custom_call.1} parent=1 // pred_check
      _
    $region51: #{tpu_custom_call.1} parent=1 // pred_check_branch
      %46 = sbr.rel (0) target = $region53
    $region52: #{tpu_custom_call.1} parent=1 // pred_region
      _
    $region53: #{tpu_custom_call.1} parent=1 // pred_fallthru
      _
    %v47 = vld [vmem:[%s0] sm:$0x1]
    %v48 = vld [vmem:[%s1] sm:$0xff]
    %v49 = vld [vmem:[%s1 + $0x8] sm:$0xff]
    %v50 = vld [vmem:[%s1 + $0x10] sm:$0xff]
    %v51 = vld [vmem:[%s1 + $0x18] sm:$0xff]
    %v52 = vld [vmem:[%s1 + $0x20] sm:$0xff]
    %v53 = vld [vmem:[%s1 + $0x28] sm:$0xff]
    %v54 = vld [vmem:[%s1 + $0x30] sm:$0xff]
    %v55 = vld [vmem:[%s1 + $0x38] sm:$0xff]
    %57 = vset.pattern.permute.xlu0 0
    %58 = vperm.xlu0 %57, %v48
    %v59 = vpop.permute.xlu0 %58
    %62 = vset.pattern.permute.xlu0 0
    %63 = vperm.xlu0 %62, %v49
    %v64 = vpop.permute.xlu0 %63
    %67 = vset.pattern.permute.xlu0 0
    %68 = vperm.xlu0 %67, %v50
    %v69 = vpop.permute.xlu0 %68
    %72 = vset.pattern.permute.xlu0 0
    %73 = vperm.xlu0 %72, %v51
    %v74 = vpop.permute.xlu0 %73
    %77 = vset.pattern.permute.xlu0 0
    %78 = vperm.xlu0 %77, %v52
    %v79 = vpop.permute.xlu0 %78
    %82 = vset.pattern.permute.xlu0 0
    %83 = vperm.xlu0 %82, %v53
    %v84 = vpop.permute.xlu0 %83
    %87 = vset.pattern.permute.xlu0 0
    %88 = vperm.xlu0 %87, %v54
    %v89 = vpop.permute.xlu0 %88
    %92 = vset.pattern.permute.xlu0 0
    %93 = vperm.xlu0 %92, %v55
    %v94 = vpop.permute.xlu0 %93
    %v97 = vlaneseq
    %v98 = vshrl.u32 %v97, 7
    %v99 = vsub.s32 0, %v98
    %v100 = vrot.slane %v47, %v99
    %v102 = vmul.f32 %v59, %v100
    %v103 = vmul.f32 %v64, %v100
    %v104 = vmul.f32 %v69, %v100
    %v105 = vmul.f32 %v74, %v100
    %v106 = vmul.f32 %v79, %v100
    %v107 = vmul.f32 %v84, %v100
    %v108 = vmul.f32 %v89, %v100
    %v109 = vmul.f32 %v94, %v100
    %v110 = vld [vmem:[%s2] sm:$0xff]
    %v111 = vld [vmem:[%s2 + $0x8] sm:$0xff]
    %v112 = vld [vmem:[%s2 + $0x10] sm:$0xff]
    %v113 = vld [vmem:[%s2 + $0x18] sm:$0xff]
    %v114 = vld [vmem:[%s2 + $0x20] sm:$0xff]
    %v115 = vld [vmem:[%s2 + $0x28] sm:$0xff]
    %v116 = vld [vmem:[%s2 + $0x30] sm:$0xff]
    %v117 = vld [vmem:[%s2 + $0x38] sm:$0xff]
    %119 = vset.pattern.permute.xlu0 0
    %120 = vperm.xlu0 %119, %v110
    %v121 = vpop.permute.xlu0 %120
    %124 = vset.pattern.permute.xlu0 0
    %125 = vperm.xlu0 %124, %v111
    %v126 = vpop.permute.xlu0 %125
    %129 = vset.pattern.permute.xlu0 0
    %130 = vperm.xlu0 %129, %v112
    %v131 = vpop.permute.xlu0 %130
    %134 = vset.pattern.permute.xlu0 0
    %135 = vperm.xlu0 %134, %v113
    %v136 = vpop.permute.xlu0 %135
    %139 = vset.pattern.permute.xlu0 0
    %140 = vperm.xlu0 %139, %v114
    %v141 = vpop.permute.xlu0 %140
    %144 = vset.pattern.permute.xlu0 0
    %145 = vperm.xlu0 %144, %v115
    %v146 = vpop.permute.xlu0 %145
    %149 = vset.pattern.permute.xlu0 0
    %150 = vperm.xlu0 %149, %v116
    %v151 = vpop.permute.xlu0 %150
    %154 = vset.pattern.permute.xlu0 0
    %155 = vperm.xlu0 %154, %v117
    %v156 = vpop.permute.xlu0 %155
    %v158 = vadd.f32 %v102, %v121
    %v159 = vadd.f32 %v103, %v126
    %v160 = vadd.f32 %v104, %v131
    %v161 = vadd.f32 %v105, %v136
    %v162 = vadd.f32 %v106, %v141
    %v163 = vadd.f32 %v107, %v146
    %v164 = vadd.f32 %v108, %v151
    %v165 = vadd.f32 %v109, %v156
    %v166 = vand.u32 2147483647, %v158
    %vm167 = vcmp.le.f32.partialorder %v166, 0.7853982
    %vm168 = vcmp.lt.s32.totalorder %v158, 0
    %v169 = vand.u32 %v158, 2139095040
    %v170 = vshrl.u32 %v169, 23
    %v171 = vsub.s32 %v170, 127
    %v172 = vand.u32 2147483647, %v158
    %v173 = vand.u32 %v172, 8388607
    %v174 = vor.u32 %v173, 8388608
    %v175 = vsub.s32 0, %v174
    %v176 = vadd.s32 %v171, 1
    %vm177 = vcmp.gt.s32.totalorder %v176, 0
    %v178 = vsel %vm177, %v176, 0
    %v179 = vshrl.u32 %v178, 5
    %v180 = vand.u32 %v178, 31
    %v181 = vsub.s32 32, %v180
    %v182 = vshrl.u32 683565275, %v181
    %v183 = vshll.u32 683565275, %v180
    %v184 = vshrl.u32 2475754826, %v181
    %v185 = vor.u32 %v183, %v184
    %v186 = vshll.u32 2475754826, %v180
    %v187 = vshrl.u32 2131351028, %v181
    %v188 = vor.u32 %v186, %v187
    %v189 = vshll.u32 2131351028, %v180
    %v190 = vshrl.u32 2102212464, %v181
    %v191 = vor.u32 %v189, %v190
    %v192 = vshll.u32 2102212464, %v180
    %v193 = vshrl.u32 920167782, %v181
    %v194 = vor.u32 %v192, %v193
    %v195 = vshll.u32 920167782, %v180
    %v196 = vshrl.u32 1326507024, %v181
    %v197 = vor.u32 %v195, %v196
    %vm198 = vcmp.lt.s32.totalorder %v179, 1
    %vm199 = vcmp.lt.s32.totalorder %v179, 2
    %vm200 = vcmp.lt.s32.totalorder %v179, 3
    %vm201 = vcmp.lt.s32.totalorder %v179, 4
    %v202 = vsel %vm198, %v182, %v185
    %v203 = vsel %vm201, %v191, 2102212464
    %v204 = vsel %vm200, %v188, %v203
    %v205 = vsel %vm199, %v202, %v204
    %v206 = vsel %vm198, %v185, %v188
    %v207 = vsel %vm201, %v194, 920167782
    %v208 = vsel %vm200, %v191, %v207
    %v209 = vsel %vm199, %v206, %v208
    %v210 = vsel %vm198, %v188, %v191
    %v211 = vsel %vm201, %v197, 1326507024
    %v212 = vsel %vm200, %v194, %v211
    %v213 = vsel %vm199, %v210, %v212
    %v214 = vshll.u32 %v174, 8
    %v215 = vmul.u32.u64.compose %v214, %v213
    %v216 = vextract.low.u32 %v215
    %v217 = vextract.high.u32 %v215
    %v218 = vmul.u32.u64.compose %v214, %v209
    %v219 = vextract.low.u32 %v218
    %v220 = vextract.high.u32 %v218
    %v221 = vmul.u32 %v214, %v205
    %v222 = vadd.s32 %v217, %v219
    %vm223 = vc.u32 %v217, %v219
    %v224 = vadd.s32 %v220, 1
    %v225 = vsel %vm223, %v224, %v220
    %v226 = vadd.s32 %v221, %v225
    %v227 = vadd.s32 %v226, 536870912
    %v228 = vshrl.u32 %v227, 30
    %v229 = vshll.u32 %v228, 30
    %v230 = vsub.s32 %v226, %v229
    %vm231 = vcmp.lt.s32.totalorder %v230, 0
    %v232 = vsub.s32 0, %v230
    %v233 = vsel %vm231, %v232, %v230
    %v234 = vclz %v233
    %v235 = vsub.s32 %v234, 2
    %vm236 = vcmp.gt.s32.totalorder 0, %v235
    %v237 = vsel %vm236, 0, %v235
    %v238 = vsub.s32 32, %v237
    %v239 = vshll.u32 %v230, %v237
    %v240 = vshrl.u32 %v222, %v238
    %v241 = vor.u32 %v239, %v240
    %v242 = vsub.s32 4294967266, %v237
    %v243 = vadd.s32 %v242, 127
    %v244 = vshll.u32 %v243, 23
    %v245 = vor.u32 4788187, %v244
    %v246 = vand.u32 2147483647, %v245
    %v248 = vcvt.s32.f32 %v241
    %v249 = vmul.f32 %v248, %v246
    %v250 = vxor.u32 %v249, 2147483648
    %v251 = vsel %vm168, %v250, %v249
    %v252 = vsub.s32 4, %v228
    %v253 = vsel %vm168, %v252, %v228
    %v254 = vsel %vm167, %v158, %v251
    %v255 = vsel %vm167, 0, %v253
    %v256 = vcosq.f32.pop %v254
    %v257 = vsinq.f32.pop %v254
    %vm258 = vweird.f32 %v158
    %v259 = vadd.s32 %v255, 3
    %v260 = vand.u32 %v259, 3
    %vm261 = vcmp.lt.s32.totalorder %v260, 2
    %vm262 = vcmp.eq.s32.totalorder %v260, 0
    %v263 = vxor.u32 %v257, 2147483648
    %v264 = vsel %vm262, %v256, %v263
    %vm265 = vcmp.eq.s32.totalorder %v260, 2
    %v266 = vxor.u32 %v256, 2147483648
    %v267 = vsel %vm265, %v266, %v257
    %v268 = vsel %vm261, %v264, %v267
    %v269 = vsel %vm258, nan, %v268
    %v270 = vand.u32 2147483647, %v159
    %vm271 = vcmp.le.f32.partialorder %v270, 0.7853982
    %vm272 = vcmp.lt.s32.totalorder %v159, 0
    %v273 = vand.u32 %v159, 2139095040
    %v274 = vshrl.u32 %v273, 23
    %v275 = vsub.s32 %v274, 127
    %v276 = vand.u32 2147483647, %v159
    %v277 = vand.u32 %v276, 8388607
    %v278 = vor.u32 %v277, 8388608
    %v279 = vsub.s32 0, %v278
    %v280 = vadd.s32 %v275, 1
    %vm281 = vcmp.gt.s32.totalorder %v280, 0
    %v282 = vsel %vm281, %v280, 0
    %v283 = vshrl.u32 %v282, 5
    %v284 = vand.u32 %v282, 31
    %v285 = vsub.s32 32, %v284
    %v286 = vshrl.u32 683565275, %v285
    %v287 = vshll.u32 683565275, %v284
    %v288 = vshrl.u32 2475754826, %v285
    %v289 = vor.u32 %v287, %v288
    %v290 = vshll.u32 2475754826, %v284
    %v291 = vshrl.u32 2131351028, %v285
    %v292 = vor.u32 %v290, %v291
    %v293 = vshll.u32 2131351028, %v284
    %v294 = vshrl.u32 2102212464, %v285
    %v295 = vor.u32 %v293, %v294
    %v296 = vshll.u32 2102212464, %v284
    %v297 = vshrl.u32 920167782, %v285
    %v298 = vor.u32 %v296, %v297
    %v299 = vshll.u32 920167782, %v284
    %v300 = vshrl.u32 1326507024, %v285
    %v301 = vor.u32 %v299, %v300
    %vm302 = vcmp.lt.s32.totalorder %v283, 1
    %vm303 = vcmp.lt.s32.totalorder %v283, 2
    %vm304 = vcmp.lt.s32.totalorder %v283, 3
    %vm305 = vcmp.lt.s32.totalorder %v283, 4
    %v306 = vsel %vm302, %v286, %v289
    %v307 = vsel %vm305, %v295, 2102212464
    %v308 = vsel %vm304, %v292, %v307
    %v309 = vsel %vm303, %v306, %v308
    %v310 = vsel %vm302, %v289, %v292
    %v311 = vsel %vm305, %v298, 920167782
    %v312 = vsel %vm304, %v295, %v311
    %v313 = vsel %vm303, %v310, %v312
    %v314 = vsel %vm302, %v292, %v295
    %v315 = vsel %vm305, %v301, 1326507024
    %v316 = vsel %vm304, %v298, %v315
    %v317 = vsel %vm303, %v314, %v316
    %v318 = vshll.u32 %v278, 8
    %v319 = vmul.u32.u64.compose %v318, %v317
    %v320 = vextract.low.u32 %v319
    %v321 = vextract.high.u32 %v319
    %v322 = vmul.u32.u64.compose %v318, %v313
    %v323 = vextract.low.u32 %v322
    %v324 = vextract.high.u32 %v322
    %v325 = vmul.u32 %v318, %v309
    %v326 = vadd.s32 %v321, %v323
    %vm327 = vc.u32 %v321, %v323
    %v328 = vadd.s32 %v324, 1
    %v329 = vsel %vm327, %v328, %v324
    %v330 = vadd.s32 %v325, %v329
    %v331 = vadd.s32 %v330, 536870912
    %v332 = vshrl.u32 %v331, 30
    %v333 = vshll.u32 %v332, 30
    %v334 = vsub.s32 %v330, %v333
    %vm335 = vcmp.lt.s32.totalorder %v334, 0
    %v336 = vsub.s32 0, %v334
    %v337 = vsel %vm335, %v336, %v334
    %v338 = vclz %v337
    %v339 = vsub.s32 %v338, 2
    %vm340 = vcmp.gt.s32.totalorder 0, %v339
    %v341 = vsel %vm340, 0, %v339
    %v342 = vsub.s32 32, %v341
    %v343 = vshll.u32 %v334, %v341
    %v344 = vshrl.u32 %v326, %v342
    %v345 = vor.u32 %v343, %v344
    %v346 = vsub.s32 4294967266, %v341
    %v347 = vadd.s32 %v346, 127
    %v348 = vshll.u32 %v347, 23
    %v349 = vor.u32 4788187, %v348
    %v350 = vand.u32 2147483647, %v349
    %v352 = vcvt.s32.f32 %v345
    %v353 = vmul.f32 %v352, %v350
    %v354 = vxor.u32 %v353, 2147483648
    %v355 = vsel %vm272, %v354, %v353
    %v356 = vsub.s32 4, %v332
    %v357 = vsel %vm272, %v356, %v332
    %v358 = vsel %vm271, %v159, %v355
    %v359 = vsel %vm271, 0, %v357
    %v360 = vcosq.f32.pop %v358
    %v361 = vsinq.f32.pop %v358
    %vm362 = vweird.f32 %v159
    %v363 = vadd.s32 %v359, 3
    %v364 = vand.u32 %v363, 3
    %vm365 = vcmp.lt.s32.totalorder %v364, 2
    %vm366 = vcmp.eq.s32.totalorder %v364, 0
    %v367 = vxor.u32 %v361, 2147483648
    %v368 = vsel %vm366, %v360, %v367
    %vm369 = vcmp.eq.s32.totalorder %v364, 2
    %v370 = vxor.u32 %v360, 2147483648
    %v371 = vsel %vm369, %v370, %v361
    %v372 = vsel %vm365, %v368, %v371
    %v373 = vsel %vm362, nan, %v372
    %v374 = vand.u32 2147483647, %v160
    %vm375 = vcmp.le.f32.partialorder %v374, 0.7853982
    %vm376 = vcmp.lt.s32.totalorder %v160, 0
    %v377 = vand.u32 %v160, 2139095040
    %v378 = vshrl.u32 %v377, 23
    %v379 = vsub.s32 %v378, 127
    %v380 = vand.u32 2147483647, %v160
    %v381 = vand.u32 %v380, 8388607
    %v382 = vor.u32 %v381, 8388608
    %v383 = vsub.s32 0, %v382
    %v384 = vadd.s32 %v379, 1
    %vm385 = vcmp.gt.s32.totalorder %v384, 0
    %v386 = vsel %vm385, %v384, 0
    %v387 = vshrl.u32 %v386, 5
    %v388 = vand.u32 %v386, 31
    %v389 = vsub.s32 32, %v388
    %v390 = vshrl.u32 683565275, %v389
    %v391 = vshll.u32 683565275, %v388
    %v392 = vshrl.u32 2475754826, %v389
    %v393 = vor.u32 %v391, %v392
    %v394 = vshll.u32 2475754826, %v388
    %v395 = vshrl.u32 2131351028, %v389
    %v396 = vor.u32 %v394, %v395
    %v397 = vshll.u32 2131351028, %v388
    %v398 = vshrl.u32 2102212464, %v389
    %v399 = vor.u32 %v397, %v398
    %v400 = vshll.u32 2102212464, %v388
    %v401 = vshrl.u32 920167782, %v389
    %v402 = vor.u32 %v400, %v401
    %v403 = vshll.u32 920167782, %v388
    %v404 = vshrl.u32 1326507024, %v389
    %v405 = vor.u32 %v403, %v404
    %vm406 = vcmp.lt.s32.totalorder %v387, 1
    %vm407 = vcmp.lt.s32.totalorder %v387, 2
    %vm408 = vcmp.lt.s32.totalorder %v387, 3
    %vm409 = vcmp.lt.s32.totalorder %v387, 4
    %v410 = vsel %vm406, %v390, %v393
    %v411 = vsel %vm409, %v399, 2102212464
    %v412 = vsel %vm408, %v396, %v411
    %v413 = vsel %vm407, %v410, %v412
    %v414 = vsel %vm406, %v393, %v396
    %v415 = vsel %vm409, %v402, 920167782
    %v416 = vsel %vm408, %v399, %v415
    %v417 = vsel %vm407, %v414, %v416
    %v418 = vsel %vm406, %v396, %v399
    %v419 = vsel %vm409, %v405, 1326507024
    %v420 = vsel %vm408, %v402, %v419
    %v421 = vsel %vm407, %v418, %v420
    %v422 = vshll.u32 %v382, 8
    %v423 = vmul.u32.u64.compose %v422, %v421
    %v424 = vextract.low.u32 %v423
    %v425 = vextract.high.u32 %v423
    %v426 = vmul.u32.u64.compose %v422, %v417
    %v427 = vextract.low.u32 %v426
    %v428 = vextract.high.u32 %v426
    %v429 = vmul.u32 %v422, %v413
    %v430 = vadd.s32 %v425, %v427
    %vm431 = vc.u32 %v425, %v427
    %v432 = vadd.s32 %v428, 1
    %v433 = vsel %vm431, %v432, %v428
    %v434 = vadd.s32 %v429, %v433
    %v435 = vadd.s32 %v434, 536870912
    %v436 = vshrl.u32 %v435, 30
    %v437 = vshll.u32 %v436, 30
    %v438 = vsub.s32 %v434, %v437
    %vm439 = vcmp.lt.s32.totalorder %v438, 0
    %v440 = vsub.s32 0, %v438
    %v441 = vsel %vm439, %v440, %v438
    %v442 = vclz %v441
    %v443 = vsub.s32 %v442, 2
    %vm444 = vcmp.gt.s32.totalorder 0, %v443
    %v445 = vsel %vm444, 0, %v443
    %v446 = vsub.s32 32, %v445
    %v447 = vshll.u32 %v438, %v445
    %v448 = vshrl.u32 %v430, %v446
    %v449 = vor.u32 %v447, %v448
    %v450 = vsub.s32 4294967266, %v445
    %v451 = vadd.s32 %v450, 127
    %v452 = vshll.u32 %v451, 23
    %v453 = vor.u32 4788187, %v452
    %v454 = vand.u32 2147483647, %v453
    %v456 = vcvt.s32.f32 %v449
    %v457 = vmul.f32 %v456, %v454
    %v458 = vxor.u32 %v457, 2147483648
    %v459 = vsel %vm376, %v458, %v457
    %v460 = vsub.s32 4, %v436
    %v461 = vsel %vm376, %v460, %v436
    %v462 = vsel %vm375, %v160, %v459
    %v463 = vsel %vm375, 0, %v461
    %v464 = vcosq.f32.pop %v462
    %v465 = vsinq.f32.pop %v462
    %vm466 = vweird.f32 %v160
    %v467 = vadd.s32 %v463, 3
    %v468 = vand.u32 %v467, 3
    %vm469 = vcmp.lt.s32.totalorder %v468, 2
    %vm470 = vcmp.eq.s32.totalorder %v468, 0
    %v471 = vxor.u32 %v465, 2147483648
    %v472 = vsel %vm470, %v464, %v471
    %vm473 = vcmp.eq.s32.totalorder %v468, 2
    %v474 = vxor.u32 %v464, 2147483648
    %v475 = vsel %vm473, %v474, %v465
    %v476 = vsel %vm469, %v472, %v475
    %v477 = vsel %vm466, nan, %v476
    %v478 = vand.u32 2147483647, %v161
    %vm479 = vcmp.le.f32.partialorder %v478, 0.7853982
    %vm480 = vcmp.lt.s32.totalorder %v161, 0
    %v481 = vand.u32 %v161, 2139095040
    %v482 = vshrl.u32 %v481, 23
    %v483 = vsub.s32 %v482, 127
    %v484 = vand.u32 2147483647, %v161
    %v485 = vand.u32 %v484, 8388607
    %v486 = vor.u32 %v485, 8388608
    %v487 = vsub.s32 0, %v486
    %v488 = vadd.s32 %v483, 1
    %vm489 = vcmp.gt.s32.totalorder %v488, 0
    %v490 = vsel %vm489, %v488, 0
    %v491 = vshrl.u32 %v490, 5
    %v492 = vand.u32 %v490, 31
    %v493 = vsub.s32 32, %v492
    %v494 = vshrl.u32 683565275, %v493
    %v495 = vshll.u32 683565275, %v492
    %v496 = vshrl.u32 2475754826, %v493
    %v497 = vor.u32 %v495, %v496
    %v498 = vshll.u32 2475754826, %v492
    %v499 = vshrl.u32 2131351028, %v493
    %v500 = vor.u32 %v498, %v499
    %v501 = vshll.u32 2131351028, %v492
    %v502 = vshrl.u32 2102212464, %v493
    %v503 = vor.u32 %v501, %v502
    %v504 = vshll.u32 2102212464, %v492
    %v505 = vshrl.u32 920167782, %v493
    %v506 = vor.u32 %v504, %v505
    %v507 = vshll.u32 920167782, %v492
    %v508 = vshrl.u32 1326507024, %v493
    %v509 = vor.u32 %v507, %v508
    %vm510 = vcmp.lt.s32.totalorder %v491, 1
    %vm511 = vcmp.lt.s32.totalorder %v491, 2
    %vm512 = vcmp.lt.s32.totalorder %v491, 3
    %vm513 = vcmp.lt.s32.totalorder %v491, 4
    %v514 = vsel %vm510, %v494, %v497
    %v515 = vsel %vm513, %v503, 2102212464
    %v516 = vsel %vm512, %v500, %v515
    %v517 = vsel %vm511, %v514, %v516
    %v518 = vsel %vm510, %v497, %v500
    %v519 = vsel %vm513, %v506, 920167782
    %v520 = vsel %vm512, %v503, %v519
    %v521 = vsel %vm511, %v518, %v520
    %v522 = vsel %vm510, %v500, %v503
    %v523 = vsel %vm513, %v509, 1326507024
    %v524 = vsel %vm512, %v506, %v523
    %v525 = vsel %vm511, %v522, %v524
    %v526 = vshll.u32 %v486, 8
    %v527 = vmul.u32.u64.compose %v526, %v525
    %v528 = vextract.low.u32 %v527
    %v529 = vextract.high.u32 %v527
    %v530 = vmul.u32.u64.compose %v526, %v521
    %v531 = vextract.low.u32 %v530
    %v532 = vextract.high.u32 %v530
    %v533 = vmul.u32 %v526, %v517
    %v534 = vadd.s32 %v529, %v531
    %vm535 = vc.u32 %v529, %v531
    %v536 = vadd.s32 %v532, 1
    %v537 = vsel %vm535, %v536, %v532
    %v538 = vadd.s32 %v533, %v537
    %v539 = vadd.s32 %v538, 536870912
    %v540 = vshrl.u32 %v539, 30
    %v541 = vshll.u32 %v540, 30
    %v542 = vsub.s32 %v538, %v541
    %vm543 = vcmp.lt.s32.totalorder %v542, 0
    %v544 = vsub.s32 0, %v542
    %v545 = vsel %vm543, %v544, %v542
    %v546 = vclz %v545
    %v547 = vsub.s32 %v546, 2
    %vm548 = vcmp.gt.s32.totalorder 0, %v547
    %v549 = vsel %vm548, 0, %v547
    %v550 = vsub.s32 32, %v549
    %v551 = vshll.u32 %v542, %v549
    %v552 = vshrl.u32 %v534, %v550
    %v553 = vor.u32 %v551, %v552
    %v554 = vsub.s32 4294967266, %v549
    %v555 = vadd.s32 %v554, 127
    %v556 = vshll.u32 %v555, 23
    %v557 = vor.u32 4788187, %v556
    %v558 = vand.u32 2147483647, %v557
    %v560 = vcvt.s32.f32 %v553
    %v561 = vmul.f32 %v560, %v558
    %v562 = vxor.u32 %v561, 2147483648
    %v563 = vsel %vm480, %v562, %v561
    %v564 = vsub.s32 4, %v540
    %v565 = vsel %vm480, %v564, %v540
    %v566 = vsel %vm479, %v161, %v563
    %v567 = vsel %vm479, 0, %v565
    %v568 = vcosq.f32.pop %v566
    %v569 = vsinq.f32.pop %v566
    %vm570 = vweird.f32 %v161
    %v571 = vadd.s32 %v567, 3
    %v572 = vand.u32 %v571, 3
    %vm573 = vcmp.lt.s32.totalorder %v572, 2
    %vm574 = vcmp.eq.s32.totalorder %v572, 0
    %v575 = vxor.u32 %v569, 2147483648
    %v576 = vsel %vm574, %v568, %v575
    %vm577 = vcmp.eq.s32.totalorder %v572, 2
    %v578 = vxor.u32 %v568, 2147483648
    %v579 = vsel %vm577, %v578, %v569
    %v580 = vsel %vm573, %v576, %v579
    %v581 = vsel %vm570, nan, %v580
    %v582 = vand.u32 2147483647, %v162
    %vm583 = vcmp.le.f32.partialorder %v582, 0.7853982
    %vm584 = vcmp.lt.s32.totalorder %v162, 0
    %v585 = vand.u32 %v162, 2139095040
    %v586 = vshrl.u32 %v585, 23
    %v587 = vsub.s32 %v586, 127
    %v588 = vand.u32 2147483647, %v162
    %v589 = vand.u32 %v588, 8388607
    %v590 = vor.u32 %v589, 8388608
    %v591 = vsub.s32 0, %v590
    %v592 = vadd.s32 %v587, 1
    %vm593 = vcmp.gt.s32.totalorder %v592, 0
    %v594 = vsel %vm593, %v592, 0
    %v595 = vshrl.u32 %v594, 5
    %v596 = vand.u32 %v594, 31
    %v597 = vsub.s32 32, %v596
    %v598 = vshrl.u32 683565275, %v597
    %v599 = vshll.u32 683565275, %v596
    %v600 = vshrl.u32 2475754826, %v597
    %v601 = vor.u32 %v599, %v600
    %v602 = vshll.u32 2475754826, %v596
    %v603 = vshrl.u32 2131351028, %v597
    %v604 = vor.u32 %v602, %v603
    %v605 = vshll.u32 2131351028, %v596
    %v606 = vshrl.u32 2102212464, %v597
    %v607 = vor.u32 %v605, %v606
    %v608 = vshll.u32 2102212464, %v596
    %v609 = vshrl.u32 920167782, %v597
    %v610 = vor.u32 %v608, %v609
    %v611 = vshll.u32 920167782, %v596
    %v612 = vshrl.u32 1326507024, %v597
    %v613 = vor.u32 %v611, %v612
    %vm614 = vcmp.lt.s32.totalorder %v595, 1
    %vm615 = vcmp.lt.s32.totalorder %v595, 2
    %vm616 = vcmp.lt.s32.totalorder %v595, 3
    %vm617 = vcmp.lt.s32.totalorder %v595, 4
    %v618 = vsel %vm614, %v598, %v601
    %v619 = vsel %vm617, %v607, 2102212464
    %v620 = vsel %vm616, %v604, %v619
    %v621 = vsel %vm615, %v618, %v620
    %v622 = vsel %vm614, %v601, %v604
    %v623 = vsel %vm617, %v610, 920167782
    %v624 = vsel %vm616, %v607, %v623
    %v625 = vsel %vm615, %v622, %v624
    %v626 = vsel %vm614, %v604, %v607
    %v627 = vsel %vm617, %v613, 1326507024
    %v628 = vsel %vm616, %v610, %v627
    %v629 = vsel %vm615, %v626, %v628
    %v630 = vshll.u32 %v590, 8
    %v631 = vmul.u32.u64.compose %v630, %v629
    %v632 = vextract.low.u32 %v631
    %v633 = vextract.high.u32 %v631
    %v634 = vmul.u32.u64.compose %v630, %v625
    %v635 = vextract.low.u32 %v634
    %v636 = vextract.high.u32 %v634
    %v637 = vmul.u32 %v630, %v621
    %v638 = vadd.s32 %v633, %v635
    %vm639 = vc.u32 %v633, %v635
    %v640 = vadd.s32 %v636, 1
    %v641 = vsel %vm639, %v640, %v636
    %v642 = vadd.s32 %v637, %v641
    %v643 = vadd.s32 %v642, 536870912
    %v644 = vshrl.u32 %v643, 30
    %v645 = vshll.u32 %v644, 30
    %v646 = vsub.s32 %v642, %v645
    %vm647 = vcmp.lt.s32.totalorder %v646, 0
    %v648 = vsub.s32 0, %v646
    %v649 = vsel %vm647, %v648, %v646
    %v650 = vclz %v649
    %v651 = vsub.s32 %v650, 2
    %vm652 = vcmp.gt.s32.totalorder 0, %v651
    %v653 = vsel %vm652, 0, %v651
    %v654 = vsub.s32 32, %v653
    %v655 = vshll.u32 %v646, %v653
    %v656 = vshrl.u32 %v638, %v654
    %v657 = vor.u32 %v655, %v656
    %v658 = vsub.s32 4294967266, %v653
    %v659 = vadd.s32 %v658, 127
    %v660 = vshll.u32 %v659, 23
    %v661 = vor.u32 4788187, %v660
    %v662 = vand.u32 2147483647, %v661
    %v664 = vcvt.s32.f32 %v657
    %v665 = vmul.f32 %v664, %v662
    %v666 = vxor.u32 %v665, 2147483648
    %v667 = vsel %vm584, %v666, %v665
    %v668 = vsub.s32 4, %v644
    %v669 = vsel %vm584, %v668, %v644
    %v670 = vsel %vm583, %v162, %v667
    %v671 = vsel %vm583, 0, %v669
    %v672 = vcosq.f32.pop %v670
    %v673 = vsinq.f32.pop %v670
    %vm674 = vweird.f32 %v162
    %v675 = vadd.s32 %v671, 3
    %v676 = vand.u32 %v675, 3
    %vm677 = vcmp.lt.s32.totalorder %v676, 2
    %vm678 = vcmp.eq.s32.totalorder %v676, 0
    %v679 = vxor.u32 %v673, 2147483648
    %v680 = vsel %vm678, %v672, %v679
    %vm681 = vcmp.eq.s32.totalorder %v676, 2
    %v682 = vxor.u32 %v672, 2147483648
    %v683 = vsel %vm681, %v682, %v673
    %v684 = vsel %vm677, %v680, %v683
    %v685 = vsel %vm674, nan, %v684
    %v686 = vand.u32 2147483647, %v163
    %vm687 = vcmp.le.f32.partialorder %v686, 0.7853982
    %vm688 = vcmp.lt.s32.totalorder %v163, 0
    %v689 = vand.u32 %v163, 2139095040
    %v690 = vshrl.u32 %v689, 23
    %v691 = vsub.s32 %v690, 127
    %v692 = vand.u32 2147483647, %v163
    %v693 = vand.u32 %v692, 8388607
    %v694 = vor.u32 %v693, 8388608
    %v695 = vsub.s32 0, %v694
    %v696 = vadd.s32 %v691, 1
    %vm697 = vcmp.gt.s32.totalorder %v696, 0
    %v698 = vsel %vm697, %v696, 0
    %v699 = vshrl.u32 %v698, 5
    %v700 = vand.u32 %v698, 31
    %v701 = vsub.s32 32, %v700
    %v702 = vshrl.u32 683565275, %v701
    %v703 = vshll.u32 683565275, %v700
    %v704 = vshrl.u32 2475754826, %v701
    %v705 = vor.u32 %v703, %v704
    %v706 = vshll.u32 2475754826, %v700
    %v707 = vshrl.u32 2131351028, %v701
    %v708 = vor.u32 %v706, %v707
    %v709 = vshll.u32 2131351028, %v700
    %v710 = vshrl.u32 2102212464, %v701
    %v711 = vor.u32 %v709, %v710
    %v712 = vshll.u32 2102212464, %v700
    %v713 = vshrl.u32 920167782, %v701
    %v714 = vor.u32 %v712, %v713
    %v715 = vshll.u32 920167782, %v700
    %v716 = vshrl.u32 1326507024, %v701
    %v717 = vor.u32 %v715, %v716
    %vm718 = vcmp.lt.s32.totalorder %v699, 1
    %vm719 = vcmp.lt.s32.totalorder %v699, 2
    %vm720 = vcmp.lt.s32.totalorder %v699, 3
    %vm721 = vcmp.lt.s32.totalorder %v699, 4
    %v722 = vsel %vm718, %v702, %v705
    %v723 = vsel %vm721, %v711, 2102212464
    %v724 = vsel %vm720, %v708, %v723
    %v725 = vsel %vm719, %v722, %v724
    %v726 = vsel %vm718, %v705, %v708
    %v727 = vsel %vm721, %v714, 920167782
    %v728 = vsel %vm720, %v711, %v727
    %v729 = vsel %vm719, %v726, %v728
    %v730 = vsel %vm718, %v708, %v711
    %v731 = vsel %vm721, %v717, 1326507024
    %v732 = vsel %vm720, %v714, %v731
    %v733 = vsel %vm719, %v730, %v732
    %v734 = vshll.u32 %v694, 8
    %v735 = vmul.u32.u64.compose %v734, %v733
    %v736 = vextract.low.u32 %v735
    %v737 = vextract.high.u32 %v735
    %v738 = vmul.u32.u64.compose %v734, %v729
    %v739 = vextract.low.u32 %v738
    %v740 = vextract.high.u32 %v738
    %v741 = vmul.u32 %v734, %v725
    %v742 = vadd.s32 %v737, %v739
    %vm743 = vc.u32 %v737, %v739
    %v744 = vadd.s32 %v740, 1
    %v745 = vsel %vm743, %v744, %v740
    %v746 = vadd.s32 %v741, %v745
    %v747 = vadd.s32 %v746, 536870912
    %v748 = vshrl.u32 %v747, 30
    %v749 = vshll.u32 %v748, 30
    %v750 = vsub.s32 %v746, %v749
    %vm751 = vcmp.lt.s32.totalorder %v750, 0
    %v752 = vsub.s32 0, %v750
    %v753 = vsel %vm751, %v752, %v750
    %v754 = vclz %v753
    %v755 = vsub.s32 %v754, 2
    %vm756 = vcmp.gt.s32.totalorder 0, %v755
    %v757 = vsel %vm756, 0, %v755
    %v758 = vsub.s32 32, %v757
    %v759 = vshll.u32 %v750, %v757
    %v760 = vshrl.u32 %v742, %v758
    %v761 = vor.u32 %v759, %v760
    %v762 = vsub.s32 4294967266, %v757
    %v763 = vadd.s32 %v762, 127
    %v764 = vshll.u32 %v763, 23
    %v765 = vor.u32 4788187, %v764
    %v766 = vand.u32 2147483647, %v765
    %v768 = vcvt.s32.f32 %v761
    %v769 = vmul.f32 %v768, %v766
    %v770 = vxor.u32 %v769, 2147483648
    %v771 = vsel %vm688, %v770, %v769
    %v772 = vsub.s32 4, %v748
    %v773 = vsel %vm688, %v772, %v748
    %v774 = vsel %vm687, %v163, %v771
    %v775 = vsel %vm687, 0, %v773
    %v776 = vcosq.f32.pop %v774
    %v777 = vsinq.f32.pop %v774
    %vm778 = vweird.f32 %v163
    %v779 = vadd.s32 %v775, 3
    %v780 = vand.u32 %v779, 3
    %vm781 = vcmp.lt.s32.totalorder %v780, 2
    %vm782 = vcmp.eq.s32.totalorder %v780, 0
    %v783 = vxor.u32 %v777, 2147483648
    %v784 = vsel %vm782, %v776, %v783
    %vm785 = vcmp.eq.s32.totalorder %v780, 2
    %v786 = vxor.u32 %v776, 2147483648
    %v787 = vsel %vm785, %v786, %v777
    %v788 = vsel %vm781, %v784, %v787
    %v789 = vsel %vm778, nan, %v788
    %v790 = vand.u32 2147483647, %v164
    %vm791 = vcmp.le.f32.partialorder %v790, 0.7853982
    %vm792 = vcmp.lt.s32.totalorder %v164, 0
    %v793 = vand.u32 %v164, 2139095040
    %v794 = vshrl.u32 %v793, 23
    %v795 = vsub.s32 %v794, 127
    %v796 = vand.u32 2147483647, %v164
    %v797 = vand.u32 %v796, 8388607
    %v798 = vor.u32 %v797, 8388608
    %v799 = vsub.s32 0, %v798
    %v800 = vadd.s32 %v795, 1
    %vm801 = vcmp.gt.s32.totalorder %v800, 0
    %v802 = vsel %vm801, %v800, 0
    %v803 = vshrl.u32 %v802, 5
    %v804 = vand.u32 %v802, 31
    %v805 = vsub.s32 32, %v804
    %v806 = vshrl.u32 683565275, %v805
    %v807 = vshll.u32 683565275, %v804
    %v808 = vshrl.u32 2475754826, %v805
    %v809 = vor.u32 %v807, %v808
    %v810 = vshll.u32 2475754826, %v804
    %v811 = vshrl.u32 2131351028, %v805
    %v812 = vor.u32 %v810, %v811
    %v813 = vshll.u32 2131351028, %v804
    %v814 = vshrl.u32 2102212464, %v805
    %v815 = vor.u32 %v813, %v814
    %v816 = vshll.u32 2102212464, %v804
    %v817 = vshrl.u32 920167782, %v805
    %v818 = vor.u32 %v816, %v817
    %v819 = vshll.u32 920167782, %v804
    %v820 = vshrl.u32 1326507024, %v805
    %v821 = vor.u32 %v819, %v820
    %vm822 = vcmp.lt.s32.totalorder %v803, 1
    %vm823 = vcmp.lt.s32.totalorder %v803, 2
    %vm824 = vcmp.lt.s32.totalorder %v803, 3
    %vm825 = vcmp.lt.s32.totalorder %v803, 4
    %v826 = vsel %vm822, %v806, %v809
    %v827 = vsel %vm825, %v815, 2102212464
    %v828 = vsel %vm824, %v812, %v827
    %v829 = vsel %vm823, %v826, %v828
    %v830 = vsel %vm822, %v809, %v812
    %v831 = vsel %vm825, %v818, 920167782
    %v832 = vsel %vm824, %v815, %v831
    %v833 = vsel %vm823, %v830, %v832
    %v834 = vsel %vm822, %v812, %v815
    %v835 = vsel %vm825, %v821, 1326507024
    %v836 = vsel %vm824, %v818, %v835
    %v837 = vsel %vm823, %v834, %v836
    %v838 = vshll.u32 %v798, 8
    %v839 = vmul.u32.u64.compose %v838, %v837
    %v840 = vextract.low.u32 %v839
    %v841 = vextract.high.u32 %v839
    %v842 = vmul.u32.u64.compose %v838, %v833
    %v843 = vextract.low.u32 %v842
    %v844 = vextract.high.u32 %v842
    %v845 = vmul.u32 %v838, %v829
    %v846 = vadd.s32 %v841, %v843
    %vm847 = vc.u32 %v841, %v843
    %v848 = vadd.s32 %v844, 1
    %v849 = vsel %vm847, %v848, %v844
    %v850 = vadd.s32 %v845, %v849
    %v851 = vadd.s32 %v850, 536870912
    %v852 = vshrl.u32 %v851, 30
    %v853 = vshll.u32 %v852, 30
    %v854 = vsub.s32 %v850, %v853
    %vm855 = vcmp.lt.s32.totalorder %v854, 0
    %v856 = vsub.s32 0, %v854
    %v857 = vsel %vm855, %v856, %v854
    %v858 = vclz %v857
    %v859 = vsub.s32 %v858, 2
    %vm860 = vcmp.gt.s32.totalorder 0, %v859
    %v861 = vsel %vm860, 0, %v859
    %v862 = vsub.s32 32, %v861
    %v863 = vshll.u32 %v854, %v861
    %v864 = vshrl.u32 %v846, %v862
    %v865 = vor.u32 %v863, %v864
    %v866 = vsub.s32 4294967266, %v861
    %v867 = vadd.s32 %v866, 127
    %v868 = vshll.u32 %v867, 23
    %v869 = vor.u32 4788187, %v868
    %v870 = vand.u32 2147483647, %v869
    %v872 = vcvt.s32.f32 %v865
    %v873 = vmul.f32 %v872, %v870
    %v874 = vxor.u32 %v873, 2147483648
    %v875 = vsel %vm792, %v874, %v873
    %v876 = vsub.s32 4, %v852
    %v877 = vsel %vm792, %v876, %v852
    %v878 = vsel %vm791, %v164, %v875
    %v879 = vsel %vm791, 0, %v877
    %v880 = vcosq.f32.pop %v878
    %v881 = vsinq.f32.pop %v878
    %vm882 = vweird.f32 %v164
    %v883 = vadd.s32 %v879, 3
    %v884 = vand.u32 %v883, 3
    %vm885 = vcmp.lt.s32.totalorder %v884, 2
    %vm886 = vcmp.eq.s32.totalorder %v884, 0
    %v887 = vxor.u32 %v881, 2147483648
    %v888 = vsel %vm886, %v880, %v887
    %vm889 = vcmp.eq.s32.totalorder %v884, 2
    %v890 = vxor.u32 %v880, 2147483648
    %v891 = vsel %vm889, %v890, %v881
    %v892 = vsel %vm885, %v888, %v891
    %v893 = vsel %vm882, nan, %v892
    %v894 = vand.u32 2147483647, %v165
    %vm895 = vcmp.le.f32.partialorder %v894, 0.7853982
    %vm896 = vcmp.lt.s32.totalorder %v165, 0
    %v897 = vand.u32 %v165, 2139095040
    %v898 = vshrl.u32 %v897, 23
    %v899 = vsub.s32 %v898, 127
    %v900 = vand.u32 2147483647, %v165
    %v901 = vand.u32 %v900, 8388607
    %v902 = vor.u32 %v901, 8388608
    %v903 = vsub.s32 0, %v902
    %v904 = vadd.s32 %v899, 1
    %vm905 = vcmp.gt.s32.totalorder %v904, 0
    %v906 = vsel %vm905, %v904, 0
    %v907 = vshrl.u32 %v906, 5
    %v908 = vand.u32 %v906, 31
    %v909 = vsub.s32 32, %v908
    %v910 = vshrl.u32 683565275, %v909
    %v911 = vshll.u32 683565275, %v908
    %v912 = vshrl.u32 2475754826, %v909
    %v913 = vor.u32 %v911, %v912
    %v914 = vshll.u32 2475754826, %v908
    %v915 = vshrl.u32 2131351028, %v909
    %v916 = vor.u32 %v914, %v915
    %v917 = vshll.u32 2131351028, %v908
    %v918 = vshrl.u32 2102212464, %v909
    %v919 = vor.u32 %v917, %v918
    %v920 = vshll.u32 2102212464, %v908
    %v921 = vshrl.u32 920167782, %v909
    %v922 = vor.u32 %v920, %v921
    %v923 = vshll.u32 920167782, %v908
    %v924 = vshrl.u32 1326507024, %v909
    %v925 = vor.u32 %v923, %v924
    %vm926 = vcmp.lt.s32.totalorder %v907, 1
    %vm927 = vcmp.lt.s32.totalorder %v907, 2
    %vm928 = vcmp.lt.s32.totalorder %v907, 3
    %vm929 = vcmp.lt.s32.totalorder %v907, 4
    %v930 = vsel %vm926, %v910, %v913
    %v931 = vsel %vm929, %v919, 2102212464
    %v932 = vsel %vm928, %v916, %v931
    %v933 = vsel %vm927, %v930, %v932
    %v934 = vsel %vm926, %v913, %v916
    %v935 = vsel %vm929, %v922, 920167782
    %v936 = vsel %vm928, %v919, %v935
    %v937 = vsel %vm927, %v934, %v936
    %v938 = vsel %vm926, %v916, %v919
    %v939 = vsel %vm929, %v925, 1326507024
    %v940 = vsel %vm928, %v922, %v939
    %v941 = vsel %vm927, %v938, %v940
    %v942 = vshll.u32 %v902, 8
    %v943 = vmul.u32.u64.compose %v942, %v941
    %v944 = vextract.low.u32 %v943
    %v945 = vextract.high.u32 %v943
    %v946 = vmul.u32.u64.compose %v942, %v937
    %v947 = vextract.low.u32 %v946
    %v948 = vextract.high.u32 %v946
    %v949 = vmul.u32 %v942, %v933
    %v950 = vadd.s32 %v945, %v947
    %vm951 = vc.u32 %v945, %v947
    %v952 = vadd.s32 %v948, 1
    %v953 = vsel %vm951, %v952, %v948
    %v954 = vadd.s32 %v949, %v953
    %v955 = vadd.s32 %v954, 536870912
    %v956 = vshrl.u32 %v955, 30
    %v957 = vshll.u32 %v956, 30
    %v958 = vsub.s32 %v954, %v957
    %vm959 = vcmp.lt.s32.totalorder %v958, 0
    %v960 = vsub.s32 0, %v958
    %v961 = vsel %vm959, %v960, %v958
    %v962 = vclz %v961
    %v963 = vsub.s32 %v962, 2
    %vm964 = vcmp.gt.s32.totalorder 0, %v963
    %v965 = vsel %vm964, 0, %v963
    %v966 = vsub.s32 32, %v965
    %v967 = vshll.u32 %v958, %v965
    %v968 = vshrl.u32 %v950, %v966
    %v969 = vor.u32 %v967, %v968
    %v970 = vsub.s32 4294967266, %v965
    %v971 = vadd.s32 %v970, 127
    %v972 = vshll.u32 %v971, 23
    %v973 = vor.u32 4788187, %v972
    %v974 = vand.u32 2147483647, %v973
    %v976 = vcvt.s32.f32 %v969
    %v977 = vmul.f32 %v976, %v974
    %v978 = vxor.u32 %v977, 2147483648
    %v979 = vsel %vm896, %v978, %v977
    %v980 = vsub.s32 4, %v956
    %v981 = vsel %vm896, %v980, %v956
    %v982 = vsel %vm895, %v165, %v979
    %v983 = vsel %vm895, 0, %v981
    %v984 = vcosq.f32.pop %v982
    %v985 = vsinq.f32.pop %v982
    %vm986 = vweird.f32 %v165
    %v987 = vadd.s32 %v983, 3
    %v988 = vand.u32 %v987, 3
    %vm989 = vcmp.lt.s32.totalorder %v988, 2
    %vm990 = vcmp.eq.s32.totalorder %v988, 0
    %v991 = vxor.u32 %v985, 2147483648
    %v992 = vsel %vm990, %v984, %v991
    %vm993 = vcmp.eq.s32.totalorder %v988, 2
    %v994 = vxor.u32 %v984, 2147483648
    %v995 = vsel %vm993, %v994, %v985
    %v996 = vsel %vm989, %v992, %v995
    %v997 = vsel %vm986, nan, %v996
    %v998 = vld [vmem:[%s3] sm:$0xff]
    %v999 = vld [vmem:[%s3 + $0x8] sm:$0xff]
    %v1000 = vld [vmem:[%s3 + $0x10] sm:$0xff]
    %v1001 = vld [vmem:[%s3 + $0x18] sm:$0xff]
    %v1002 = vld [vmem:[%s4] sm:$0xff]
    %v1003 = vld [vmem:[%s4 + $0x8] sm:$0xff]
    %v1004 = vld [vmem:[%s4 + $0x10] sm:$0xff]
    %v1005 = vld [vmem:[%s4 + $0x18] sm:$0xff]
    %1007 = vset.pattern.permute.xlu0 0
    %1008 = vperm.xlu0 %1007, %v1002
    %v1009 = vpop.permute.xlu0 %1008
    %1012 = vset.pattern.permute.xlu0 0
    %1013 = vperm.xlu0 %1012, %v1003
    %v1014 = vpop.permute.xlu0 %1013
    %1017 = vset.pattern.permute.xlu0 0
    %1018 = vperm.xlu0 %1017, %v1004
    %v1019 = vpop.permute.xlu0 %1018
    %1022 = vset.pattern.permute.xlu0 0
    %1023 = vperm.xlu0 %1022, %v1005
    %v1024 = vpop.permute.xlu0 %1023
    %vm1026 = vcmask 523264
    %v1028 = vsel %vm1026, %v998, 0
    %v1031 = vsel %vm1026, %v999, 0
    %v1034 = vsel %vm1026, %v1000, 0
    %v1037 = vsel %vm1026, %v1001, 0
    %1039 = vmatprep.subr.mxu0 0.0
    %1040 = vmatpush1.msra.mxu0 %v269
    %1041 = vmatprep.subr.mxu0 0.0
    %1042 = vmatpush1.msra.mxu0 %v373
    %1043 = vmatprep.subr.mxu0 0.0
    %1044 = vmatpush1.msra.mxu0 %v477
    %1045 = vmatprep.subr.mxu0 0.0
    %1046 = vmatpush1.msra.mxu0 %v581
    %1047 = vmatprep.subr.mxu0 0.0
    %1048 = vmatpush1.msra.mxu0 %v685
    %1049 = vmatprep.subr.mxu0 0.0
    %1050 = vmatpush1.msra.mxu0 %v789
    %1051 = vmatprep.subr.mxu0 0.0
    %1052 = vmatpush1.msra.mxu0 %v893
    %1053 = vmatprep.subr.mxu0 0.0
    %1054 = vmatpush1.msra.mxu0 %v997
    %1055 = vmatprep.subr.mxu0 0.0
    %1056 = vmatpush1.msra.mxu0 0.0
    %1057 = vmatprep.subr.mxu0 0.0
    %1058 = vmatpush1.msra.mxu0 0.0
    %1059 = vmatprep.subr.mxu0 0.0
    %1060 = vmatpush1.msra.mxu0 0.0
    %1061 = vmatprep.subr.mxu0 0.0
    %1062 = vmatpush1.msra.mxu0 0.0
    %1063 = vmatprep.subr.mxu0 0.0
    %1064 = vmatpush1.msra.mxu0 0.0
    %1065 = vmatprep.subr.mxu0 0.0
    %1066 = vmatpush1.msra.mxu0 0.0
    %1067 = vmatprep.subr.mxu0 0.0
    %1068 = vmatpush1.msra.mxu0 0.0
    %1069 = vmatprep.subr.mxu0 0.0
    %1070 = vmatpush1.msra.mxu0 0.0
    %1071 = vmatprep.subr.mxu0 0.0
    %1072 = vmatpush1.msra.mxu0 0.0
    %1073 = vmatprep.subr.mxu0 0.0
    %1074 = vmatpush1.msra.mxu0 0.0
    %1075 = vmatprep.subr.mxu0 0.0
    %1076 = vmatpush1.msra.mxu0 0.0
    %1077 = vmatprep.subr.mxu0 0.0
    %1078 = vmatpush1.msra.mxu0 0.0
    %1079 = vmatprep.subr.mxu0 0.0
    %1080 = vmatpush1.msra.mxu0 0.0
    %1081 = vmatprep.subr.mxu0 0.0
    %1082 = vmatpush1.msra.mxu0 0.0
    %1083 = vmatprep.subr.mxu0 0.0
    %1084 = vmatpush1.msra.mxu0 0.0
    %1085 = vmatprep.subr.mxu0 0.0
    %1086 = vmatpush1.msra.mxu0 0.0
    %1087 = vmatprep.subr.mxu0 0.0
    %1088 = vmatpush1.msra.mxu0 0.0
    %1089 = vmatprep.subr.mxu0 0.0
    %1090 = vmatpush1.msra.mxu0 0.0
    %1091 = vmatprep.subr.mxu0 0.0
    %1092 = vmatpush1.msra.mxu0 0.0
    %1093 = vmatprep.subr.mxu0 0.0
    %1094 = vmatpush1.msra.mxu0 0.0
    %1095 = vmatprep.subr.mxu0 0.0
    %1096 = vmatpush1.msra.mxu0 0.0
    %1097 = vmatprep.subr.mxu0 0.0
    %1098 = vmatpush1.msra.mxu0 0.0
    %1099 = vmatprep.subr.mxu0 0.0
    %1100 = vmatpush1.msra.mxu0 0.0
    %1101 = vmatprep.subr.mxu0 0.0
    %1102 = vmatpush1.msra.mxu0 0.0
    %1103 = vmatprep.mubr.f32.mxu0 0.0
    %1104 = vmatmul.mubr.f32.gmra.mrb[0].mxu0 %v1028
    %v1105 = vpop.f32.mrb[0].mxu0
    %v1106 = vadd.f32 %v1009, %v1105
    %v1107 = vpop.f32.mrb[0].mxu0
    %1108 = vmatprep.mubr.f32.mxu0 0.0
    %1109 = vmatmul.mubr.f32.gmra.mrb[0].mxu0 %v1031
    %v1110 = vpop.f32.mrb[0].mxu0
    %v1111 = vadd.f32 %v1014, %v1110
    %v1112 = vpop.f32.mrb[0].mxu0
    %1113 = vmatprep.mubr.f32.mxu0 0.0
    %1114 = vmatmul.mubr.f32.gmra.mrb[0].mxu0 %v1034
    %v1115 = vpop.f32.mrb[0].mxu0
    %v1116 = vadd.f32 %v1019, %v1115
    %v1117 = vpop.f32.mrb[0].mxu0
    %1118 = vmatprep.mubr.f32.mxu0 0.0
    %1119 = vmatmul.mubr.f32.gmra.mrb[0].mxu0 %v1037
    %v1120 = vpop.f32.mrb[0].mxu0
    %v1121 = vadd.f32 %v1024, %v1120
    %v1122 = vpop.f32.mrb[0].mxu0
    %1123 = vdwg.mxu0
    %v1124 = vtanh.pop %v1106
    %v1125 = vtanh.pop %v1111
    %v1126 = vtanh.pop %v1116
    %v1127 = vtanh.pop %v1121
    %v1128 = vld [vmem:[%s5] sm:$0xff]
    %v1129 = vld [vmem:[%s5 + $0x8] sm:$0xff]
    %v1130 = vld [vmem:[%s5 + $0x10] sm:$0xff]
    %v1131 = vld [vmem:[%s5 + $0x18] sm:$0xff]
    %v1132 = vld [vmem:[%s6] sm:$0xff]
    %v1133 = vld [vmem:[%s6 + $0x8] sm:$0xff]
    %v1134 = vld [vmem:[%s6 + $0x10] sm:$0xff]
    %v1135 = vld [vmem:[%s6 + $0x18] sm:$0xff]
    %1137 = vset.pattern.permute.xlu0 0
    %1138 = vperm.xlu0 %1137, %v1132
    %v1139 = vpop.permute.xlu0 %1138
    %1142 = vset.pattern.permute.xlu0 0
    %1143 = vperm.xlu0 %1142, %v1133
    %v1144 = vpop.permute.xlu0 %1143
    %1147 = vset.pattern.permute.xlu0 0
    %1148 = vperm.xlu0 %1147, %v1134
    %v1149 = vpop.permute.xlu0 %1148
    %1152 = vset.pattern.permute.xlu0 0
    %1153 = vperm.xlu0 %1152, %v1135
    %v1154 = vpop.permute.xlu0 %1153
    %vm1156 = vcmask 261120
    %v1158 = vsel %vm1156, %v1128, 0
    %v1161 = vsel %vm1156, %v1129, 0
    %v1164 = vsel %vm1156, %v1130, 0
    %v1167 = vsel %vm1156, %v1131, 0
    %1169 = vmatprep.subr.mxu0 0.0
    %1170 = vmatpush1.msra.mxu0 %v1124
    %1171 = vmatprep.subr.mxu0 0.0
    %1172 = vmatpush1.msra.mxu0 %v1125
    %1173 = vmatprep.subr.mxu0 0.0
    %1174 = vmatpush1.msra.mxu0 %v1126
    %1175 = vmatprep.subr.mxu0 0.0
    %1176 = vmatpush1.msra.mxu0 %v1127
    %1177 = vmatprep.subr.mxu0 0.0
    %1178 = vmatpush1.msra.mxu0 0.0
    %1179 = vmatprep.subr.mxu0 0.0
    %1180 = vmatpush1.msra.mxu0 0.0
    %1181 = vmatprep.subr.mxu0 0.0
    %1182 = vmatpush1.msra.mxu0 0.0
    %1183 = vmatprep.subr.mxu0 0.0
    %1184 = vmatpush1.msra.mxu0 0.0
    %1185 = vmatprep.subr.mxu0 0.0
    %1186 = vmatpush1.msra.mxu0 0.0
    %1187 = vmatprep.subr.mxu0 0.0
    %1188 = vmatpush1.msra.mxu0 0.0
    %1189 = vmatprep.subr.mxu0 0.0
    %1190 = vmatpush1.msra.mxu0 0.0
    %1191 = vmatprep.subr.mxu0 0.0
    %1192 = vmatpush1.msra.mxu0 0.0
    %1193 = vmatprep.subr.mxu0 0.0
    %1194 = vmatpush1.msra.mxu0 0.0
    %1195 = vmatprep.subr.mxu0 0.0
    %1196 = vmatpush1.msra.mxu0 0.0
    %1197 = vmatprep.subr.mxu0 0.0
    %1198 = vmatpush1.msra.mxu0 0.0
    %1199 = vmatprep.subr.mxu0 0.0
    %1200 = vmatpush1.msra.mxu0 0.0
    %1201 = vmatprep.subr.mxu0 0.0
    %1202 = vmatpush1.msra.mxu0 0.0
    %1203 = vmatprep.subr.mxu0 0.0
    %1204 = vmatpush1.msra.mxu0 0.0
    %1205 = vmatprep.subr.mxu0 0.0
    %1206 = vmatpush1.msra.mxu0 0.0
    %1207 = vmatprep.subr.mxu0 0.0
    %1208 = vmatpush1.msra.mxu0 0.0
    %1209 = vmatprep.subr.mxu0 0.0
    %1210 = vmatpush1.msra.mxu0 0.0
    %1211 = vmatprep.subr.mxu0 0.0
    %1212 = vmatpush1.msra.mxu0 0.0
    %1213 = vmatprep.subr.mxu0 0.0
    %1214 = vmatpush1.msra.mxu0 0.0
    %1215 = vmatprep.subr.mxu0 0.0
    %1216 = vmatpush1.msra.mxu0 0.0
    %1217 = vmatprep.subr.mxu0 0.0
    %1218 = vmatpush1.msra.mxu0 0.0
    %1219 = vmatprep.subr.mxu0 0.0
    %1220 = vmatpush1.msra.mxu0 0.0
    %1221 = vmatprep.subr.mxu0 0.0
    %1222 = vmatpush1.msra.mxu0 0.0
    %1223 = vmatprep.subr.mxu0 0.0
    %1224 = vmatpush1.msra.mxu0 0.0
    %1225 = vmatprep.subr.mxu0 0.0
    %1226 = vmatpush1.msra.mxu0 0.0
    %1227 = vmatprep.subr.mxu0 0.0
    %1228 = vmatpush1.msra.mxu0 0.0
    %1229 = vmatprep.subr.mxu0 0.0
    %1230 = vmatpush1.msra.mxu0 0.0
    %1231 = vmatprep.subr.mxu0 0.0
    %1232 = vmatpush1.msra.mxu0 0.0
    %1233 = vmatprep.mubr.f32.mxu0 0.0
    %1234 = vmatmul.mubr.f32.gmra.mrb[0].mxu0 %v1158
    %v1235 = vpop.f32.mrb[0].mxu0
    %v1236 = vadd.f32 %v1139, %v1235
    %v1237 = vpop.f32.mrb[0].mxu0
    %1238 = vmatprep.mubr.f32.mxu0 0.0
    %1239 = vmatmul.mubr.f32.gmra.mrb[0].mxu0 %v1161
    %v1240 = vpop.f32.mrb[0].mxu0
    %v1241 = vadd.f32 %v1144, %v1240
    %v1242 = vpop.f32.mrb[0].mxu0
    %1243 = vmatprep.mubr.f32.mxu0 0.0
    %1244 = vmatmul.mubr.f32.gmra.mrb[0].mxu0 %v1164
    %v1245 = vpop.f32.mrb[0].mxu0
    %v1246 = vadd.f32 %v1149, %v1245
    %v1247 = vpop.f32.mrb[0].mxu0
    %1248 = vmatprep.mubr.f32.mxu0 0.0
    %1249 = vmatmul.mubr.f32.gmra.mrb[0].mxu0 %v1167
    %v1250 = vpop.f32.mrb[0].mxu0
    %v1251 = vadd.f32 %v1154, %v1250
    %v1252 = vpop.f32.mrb[0].mxu0
    %1253 = vdwg.mxu0
    %v1254 = vtanh.pop %v1236
    %v1255 = vtanh.pop %v1241
    %v1256 = vtanh.pop %v1246
    %v1257 = vtanh.pop %v1251
    %v1258 = vld [vmem:[%s7] sm:$0xff]
    %v1259 = vld [vmem:[%s7 + $0x8] sm:$0xff]
    %v1260 = vld [vmem:[%s7 + $0x10] sm:$0xff]
    %v1261 = vld [vmem:[%s7 + $0x18] sm:$0xff]
    %v1262 = vld [vmem:[%s8] sm:$0xff]
    %v1263 = vld [vmem:[%s8 + $0x8] sm:$0xff]
    %v1264 = vld [vmem:[%s8 + $0x10] sm:$0xff]
    %v1265 = vld [vmem:[%s8 + $0x18] sm:$0xff]
    %1267 = vset.pattern.permute.xlu0 0
    %1268 = vperm.xlu0 %1267, %v1262
    %v1269 = vpop.permute.xlu0 %1268
    %1272 = vset.pattern.permute.xlu0 0
    %1273 = vperm.xlu0 %1272, %v1263
    %v1274 = vpop.permute.xlu0 %1273
    %1277 = vset.pattern.permute.xlu0 0
    %1278 = vperm.xlu0 %1277, %v1264
    %v1279 = vpop.permute.xlu0 %1278
    %1282 = vset.pattern.permute.xlu0 0
    %1283 = vperm.xlu0 %1282, %v1265
    %v1284 = vpop.permute.xlu0 %1283
    %v1287 = vsel %vm1156, %v1258, 0
    %v1290 = vsel %vm1156, %v1259, 0
    %v1293 = vsel %vm1156, %v1260, 0
    %v1296 = vsel %vm1156, %v1261, 0
    %1298 = vmatprep.subr.mxu0 0.0
    %1299 = vmatpush1.msra.mxu0 %v1254
    %1300 = vmatprep.subr.mxu0 0.0
    %1301 = vmatpush1.msra.mxu0 %v1255
    %1302 = vmatprep.subr.mxu0 0.0
    %1303 = vmatpush1.msra.mxu0 %v1256
    %1304 = vmatprep.subr.mxu0 0.0
    %1305 = vmatpush1.msra.mxu0 %v1257
    %1306 = vmatprep.subr.mxu0 0.0
    %1307 = vmatpush1.msra.mxu0 0.0
    %1308 = vmatprep.subr.mxu0 0.0
    %1309 = vmatpush1.msra.mxu0 0.0
    %1310 = vmatprep.subr.mxu0 0.0
    %1311 = vmatpush1.msra.mxu0 0.0
    %1312 = vmatprep.subr.mxu0 0.0
    %1313 = vmatpush1.msra.mxu0 0.0
    %1314 = vmatprep.subr.mxu0 0.0
    %1315 = vmatpush1.msra.mxu0 0.0
    %1316 = vmatprep.subr.mxu0 0.0
    %1317 = vmatpush1.msra.mxu0 0.0
    %1318 = vmatprep.subr.mxu0 0.0
    %1319 = vmatpush1.msra.mxu0 0.0
    %1320 = vmatprep.subr.mxu0 0.0
    %1321 = vmatpush1.msra.mxu0 0.0
    %1322 = vmatprep.subr.mxu0 0.0
    %1323 = vmatpush1.msra.mxu0 0.0
    %1324 = vmatprep.subr.mxu0 0.0
    %1325 = vmatpush1.msra.mxu0 0.0
    %1326 = vmatprep.subr.mxu0 0.0
    %1327 = vmatpush1.msra.mxu0 0.0
    %1328 = vmatprep.subr.mxu0 0.0
    %1329 = vmatpush1.msra.mxu0 0.0
    %1330 = vmatprep.subr.mxu0 0.0
    %1331 = vmatpush1.msra.mxu0 0.0
    %1332 = vmatprep.subr.mxu0 0.0
    %1333 = vmatpush1.msra.mxu0 0.0
    %1334 = vmatprep.subr.mxu0 0.0
    %1335 = vmatpush1.msra.mxu0 0.0
    %1336 = vmatprep.subr.mxu0 0.0
    %1337 = vmatpush1.msra.mxu0 0.0
    %1338 = vmatprep.subr.mxu0 0.0
    %1339 = vmatpush1.msra.mxu0 0.0
    %1340 = vmatprep.subr.mxu0 0.0
    %1341 = vmatpush1.msra.mxu0 0.0
    %1342 = vmatprep.subr.mxu0 0.0
    %1343 = vmatpush1.msra.mxu0 0.0
    %1344 = vmatprep.subr.mxu0 0.0
    %1345 = vmatpush1.msra.mxu0 0.0
    %1346 = vmatprep.subr.mxu0 0.0
    %1347 = vmatpush1.msra.mxu0 0.0
    %1348 = vmatprep.subr.mxu0 0.0
    %1349 = vmatpush1.msra.mxu0 0.0
    %1350 = vmatprep.subr.mxu0 0.0
    %1351 = vmatpush1.msra.mxu0 0.0
    %1352 = vmatprep.subr.mxu0 0.0
    %1353 = vmatpush1.msra.mxu0 0.0
    %1354 = vmatprep.subr.mxu0 0.0
    %1355 = vmatpush1.msra.mxu0 0.0
    %1356 = vmatprep.subr.mxu0 0.0
    %1357 = vmatpush1.msra.mxu0 0.0
    %1358 = vmatprep.subr.mxu0 0.0
    %1359 = vmatpush1.msra.mxu0 0.0
    %1360 = vmatprep.subr.mxu0 0.0
    %1361 = vmatpush1.msra.mxu0 0.0
    %1362 = vmatprep.mubr.f32.mxu0 0.0
    %1363 = vmatmul.mubr.f32.gmra.mrb[0].mxu0 %v1287
    %v1364 = vpop.f32.mrb[0].mxu0
    %v1365 = vadd.f32 %v1269, %v1364
    %v1366 = vpop.f32.mrb[0].mxu0
    %1367 = vmatprep.mubr.f32.mxu0 0.0
    %1368 = vmatmul.mubr.f32.gmra.mrb[0].mxu0 %v1290
    %v1369 = vpop.f32.mrb[0].mxu0
    %v1370 = vadd.f32 %v1274, %v1369
    %v1371 = vpop.f32.mrb[0].mxu0
    %1372 = vmatprep.mubr.f32.mxu0 0.0
    %1373 = vmatmul.mubr.f32.gmra.mrb[0].mxu0 %v1293
    %v1374 = vpop.f32.mrb[0].mxu0
    %v1375 = vadd.f32 %v1279, %v1374
    %v1376 = vpop.f32.mrb[0].mxu0
    %1377 = vmatprep.mubr.f32.mxu0 0.0
    %1378 = vmatmul.mubr.f32.gmra.mrb[0].mxu0 %v1296
    %v1379 = vpop.f32.mrb[0].mxu0
    %v1380 = vadd.f32 %v1284, %v1379
    %v1381 = vpop.f32.mrb[0].mxu0
    %1382 = vdwg.mxu0
    %v1383 = vtanh.pop %v1365
    %v1384 = vtanh.pop %v1370
    %v1385 = vtanh.pop %v1375
    %v1386 = vtanh.pop %v1380
    %v1387 = vld [vmem:[%s9] sm:$0xff]
    %v1388 = vld [vmem:[%s9 + $0x8] sm:$0xff]
    %v1389 = vld [vmem:[%s9 + $0x10] sm:$0xff]
    %v1390 = vld [vmem:[%s9 + $0x18] sm:$0xff]
    %v1391 = vld [vmem:[%s10] sm:$0xff]
    %v1392 = vld [vmem:[%s10 + $0x8] sm:$0xff]
    %v1393 = vld [vmem:[%s10 + $0x10] sm:$0xff]
    %v1394 = vld [vmem:[%s10 + $0x18] sm:$0xff]
    %1396 = vset.pattern.permute.xlu0 0
    %1397 = vperm.xlu0 %1396, %v1391
    %v1398 = vpop.permute.xlu0 %1397
    %1401 = vset.pattern.permute.xlu0 0
    %1402 = vperm.xlu0 %1401, %v1392
    %v1403 = vpop.permute.xlu0 %1402
    %1406 = vset.pattern.permute.xlu0 0
    %1407 = vperm.xlu0 %1406, %v1393
    %v1408 = vpop.permute.xlu0 %1407
    %1411 = vset.pattern.permute.xlu0 0
    %1412 = vperm.xlu0 %1411, %v1394
    %v1413 = vpop.permute.xlu0 %1412
    %v1416 = vsel %vm1156, %v1387, 0
    %v1419 = vsel %vm1156, %v1388, 0
    %v1422 = vsel %vm1156, %v1389, 0
    %v1425 = vsel %vm1156, %v1390, 0
    %1427 = vmatprep.subr.mxu0 0.0
    %1428 = vmatpush1.msra.mxu0 %v1383
    %1429 = vmatprep.subr.mxu0 0.0
    %1430 = vmatpush1.msra.mxu0 %v1384
    %1431 = vmatprep.subr.mxu0 0.0
    %1432 = vmatpush1.msra.mxu0 %v1385
    %1433 = vmatprep.subr.mxu0 0.0
    %1434 = vmatpush1.msra.mxu0 %v1386
    %1435 = vmatprep.subr.mxu0 0.0
    %1436 = vmatpush1.msra.mxu0 0.0
    %1437 = vmatprep.subr.mxu0 0.0
    %1438 = vmatpush1.msra.mxu0 0.0
    %1439 = vmatprep.subr.mxu0 0.0
    %1440 = vmatpush1.msra.mxu0 0.0
    %1441 = vmatprep.subr.mxu0 0.0
    %1442 = vmatpush1.msra.mxu0 0.0
    %1443 = vmatprep.subr.mxu0 0.0
    %1444 = vmatpush1.msra.mxu0 0.0
    %1445 = vmatprep.subr.mxu0 0.0
    %1446 = vmatpush1.msra.mxu0 0.0
    %1447 = vmatprep.subr.mxu0 0.0
    %1448 = vmatpush1.msra.mxu0 0.0
    %1449 = vmatprep.subr.mxu0 0.0
    %1450 = vmatpush1.msra.mxu0 0.0
    %1451 = vmatprep.subr.mxu0 0.0
    %1452 = vmatpush1.msra.mxu0 0.0
    %1453 = vmatprep.subr.mxu0 0.0
    %1454 = vmatpush1.msra.mxu0 0.0
    %1455 = vmatprep.subr.mxu0 0.0
    %1456 = vmatpush1.msra.mxu0 0.0
    %1457 = vmatprep.subr.mxu0 0.0
    %1458 = vmatpush1.msra.mxu0 0.0
    %1459 = vmatprep.subr.mxu0 0.0
    %1460 = vmatpush1.msra.mxu0 0.0
    %1461 = vmatprep.subr.mxu0 0.0
    %1462 = vmatpush1.msra.mxu0 0.0
    %1463 = vmatprep.subr.mxu0 0.0
    %1464 = vmatpush1.msra.mxu0 0.0
    %1465 = vmatprep.subr.mxu0 0.0
    %1466 = vmatpush1.msra.mxu0 0.0
    %1467 = vmatprep.subr.mxu0 0.0
    %1468 = vmatpush1.msra.mxu0 0.0
    %1469 = vmatprep.subr.mxu0 0.0
    %1470 = vmatpush1.msra.mxu0 0.0
    %1471 = vmatprep.subr.mxu0 0.0
    %1472 = vmatpush1.msra.mxu0 0.0
    %1473 = vmatprep.subr.mxu0 0.0
    %1474 = vmatpush1.msra.mxu0 0.0
    %1475 = vmatprep.subr.mxu0 0.0
    %1476 = vmatpush1.msra.mxu0 0.0
    %1477 = vmatprep.subr.mxu0 0.0
    %1478 = vmatpush1.msra.mxu0 0.0
    %1479 = vmatprep.subr.mxu0 0.0
    %1480 = vmatpush1.msra.mxu0 0.0
    %1481 = vmatprep.subr.mxu0 0.0
    %1482 = vmatpush1.msra.mxu0 0.0
    %1483 = vmatprep.subr.mxu0 0.0
    %1484 = vmatpush1.msra.mxu0 0.0
    %1485 = vmatprep.subr.mxu0 0.0
    %1486 = vmatpush1.msra.mxu0 0.0
    %1487 = vmatprep.subr.mxu0 0.0
    %1488 = vmatpush1.msra.mxu0 0.0
    %1489 = vmatprep.subr.mxu0 0.0
    %1490 = vmatpush1.msra.mxu0 0.0
    %1491 = vmatprep.mubr.f32.mxu0 0.0
    %1492 = vmatmul.mubr.f32.gmra.mrb[0].mxu0 %v1416
    %v1493 = vpop.f32.mrb[0].mxu0
    %v1494 = vadd.f32 %v1398, %v1493
    %v1495 = vpop.f32.mrb[0].mxu0
    %1496 = vmatprep.mubr.f32.mxu0 0.0
    %1497 = vmatmul.mubr.f32.gmra.mrb[0].mxu0 %v1419
    %v1498 = vpop.f32.mrb[0].mxu0
    %v1499 = vadd.f32 %v1403, %v1498
    %v1500 = vpop.f32.mrb[0].mxu0
    %1501 = vmatprep.mubr.f32.mxu0 0.0
    %1502 = vmatmul.mubr.f32.gmra.mrb[0].mxu0 %v1422
    %v1503 = vpop.f32.mrb[0].mxu0
    %v1504 = vadd.f32 %v1408, %v1503
    %v1505 = vpop.f32.mrb[0].mxu0
    %1506 = vmatprep.mubr.f32.mxu0 0.0
    %1507 = vmatmul.mubr.f32.gmra.mrb[0].mxu0 %v1425
    %v1508 = vpop.f32.mrb[0].mxu0
    %v1509 = vadd.f32 %v1413, %v1508
    %v1510 = vpop.f32.mrb[0].mxu0
    %1511 = vdwg.mxu0
    %v1512 = vtanh.pop %v1494
    %v1513 = vtanh.pop %v1499
    %v1514 = vtanh.pop %v1504
    %v1515 = vtanh.pop %v1509
    %v1516 = vld [vmem:[%s11] sm:$0x1]
    %v1517 = vld [vmem:[#allocation2] sm:$0x1]
    %1519 = vset.pattern.permute.xlu0 0
    %1520 = vperm.xlu0 %1519, %v1517
    %v1521 = vpop.permute.xlu0 %1520
    %v1523 = vlaneseq
    %v1524 = vshrl.u32 %v1523, 7
    %v1525 = vsub.s32 0, %v1524
    %v1526 = vrot.slane %v1521, %v1525
    %v1528 = vsel %vm1156, %v1516, 0
    %1530 = vmatprep.subr.mxu0 0.0
    %1531 = vmatpush1.msra.mxu0 %v1512
    %1532 = vmatprep.subr.mxu0 0.0
    %1533 = vmatpush1.msra.mxu0 %v1513
    %1534 = vmatprep.subr.mxu0 0.0
    %1535 = vmatpush1.msra.mxu0 %v1514
    %1536 = vmatprep.subr.mxu0 0.0
    %1537 = vmatpush1.msra.mxu0 %v1515
    %1538 = vmatprep.subr.mxu0 0.0
    %1539 = vmatpush1.msra.mxu0 0.0
    %1540 = vmatprep.subr.mxu0 0.0
    %1541 = vmatpush1.msra.mxu0 0.0
    %1542 = vmatprep.subr.mxu0 0.0
    %1543 = vmatpush1.msra.mxu0 0.0
    %1544 = vmatprep.subr.mxu0 0.0
    %1545 = vmatpush1.msra.mxu0 0.0
    %1546 = vmatprep.subr.mxu0 0.0
    %1547 = vmatpush1.msra.mxu0 0.0
    %1548 = vmatprep.subr.mxu0 0.0
    %1549 = vmatpush1.msra.mxu0 0.0
    %1550 = vmatprep.subr.mxu0 0.0
    %1551 = vmatpush1.msra.mxu0 0.0
    %1552 = vmatprep.subr.mxu0 0.0
    %1553 = vmatpush1.msra.mxu0 0.0
    %1554 = vmatprep.subr.mxu0 0.0
    %1555 = vmatpush1.msra.mxu0 0.0
    %1556 = vmatprep.subr.mxu0 0.0
    %1557 = vmatpush1.msra.mxu0 0.0
    %1558 = vmatprep.subr.mxu0 0.0
    %1559 = vmatpush1.msra.mxu0 0.0
    %1560 = vmatprep.subr.mxu0 0.0
    %1561 = vmatpush1.msra.mxu0 0.0
    %1562 = vmatprep.subr.mxu0 0.0
    %1563 = vmatpush1.msra.mxu0 0.0
    %1564 = vmatprep.subr.mxu0 0.0
    %1565 = vmatpush1.msra.mxu0 0.0
    %1566 = vmatprep.subr.mxu0 0.0
    %1567 = vmatpush1.msra.mxu0 0.0
    %1568 = vmatprep.subr.mxu0 0.0
    %1569 = vmatpush1.msra.mxu0 0.0
    %1570 = vmatprep.subr.mxu0 0.0
    %1571 = vmatpush1.msra.mxu0 0.0
    %1572 = vmatprep.subr.mxu0 0.0
    %1573 = vmatpush1.msra.mxu0 0.0
    %1574 = vmatprep.subr.mxu0 0.0
    %1575 = vmatpush1.msra.mxu0 0.0
    %1576 = vmatprep.subr.mxu0 0.0
    %1577 = vmatpush1.msra.mxu0 0.0
    %1578 = vmatprep.subr.mxu0 0.0
    %1579 = vmatpush1.msra.mxu0 0.0
    %1580 = vmatprep.subr.mxu0 0.0
    %1581 = vmatpush1.msra.mxu0 0.0
    %1582 = vmatprep.subr.mxu0 0.0
    %1583 = vmatpush1.msra.mxu0 0.0
    %1584 = vmatprep.subr.mxu0 0.0
    %1585 = vmatpush1.msra.mxu0 0.0
    %1586 = vmatprep.subr.mxu0 0.0
    %1587 = vmatpush1.msra.mxu0 0.0
    %1588 = vmatprep.subr.mxu0 0.0
    %1589 = vmatpush1.msra.mxu0 0.0
    %1590 = vmatprep.subr.mxu0 0.0
    %1591 = vmatpush1.msra.mxu0 0.0
    %1592 = vmatprep.subr.mxu0 0.0
    %1593 = vmatpush1.msra.mxu0 0.0
    %1594 = vmatprep.mubr.f32.mxu0 0.0
    %1595 = vmatmul.mubr.f32.gmra.mrb[0].mxu0 %v1528
    %v1596 = vpop.f32.mrb[0].mxu0
    %v1597 = vadd.f32 %v1526, %v1596
    %v1598 = vpop.f32.mrb[0].mxu0
    %1599 = vdwg.mxu0
    %1600 = vst [vmem:[#allocation3] sm:$0x1] %v1597
    // Predicated region
    $region54: #{tpu_custom_call.1} parent=1 // pred_check
      _
    $region55: #{tpu_custom_call.1} parent=1 // pred_check_branch
      %1602 = sbr.rel (0) target = $region57
    $region56: #{tpu_custom_call.1} parent=1 // pred_region
      %s1604 = ssub.s32 16, 16
      %1605 = vsyncadd [#allocation4], %s1604
      %s1607 = sshll.u32 [#allocation3], 4
      %s1608 = int_to_ptr.vmem [resolvable:$true] %s1607
      %1610 = dma.vmem_to_hbm [thread:$0]  %s1608, 16, %s13, [#allocation4]
    $region57: #{tpu_custom_call.1} parent=1 // pred_fallthru
      _
    // Predicated region
    $region58: #{tpu_custom_call.1} parent=1 // pred_check
      _
    $region59: #{tpu_custom_call.1} parent=1 // pred_check_branch
      %1612 = sbr.rel (0) target = $region61
    $region60: #{tpu_custom_call.1} parent=1 // pred_region
      %1613 = dma.done [#allocation4], 16
    $region61: #{tpu_custom_call.1} parent=1 // pred_fallthru
      _
    %1614 = vsyncpa [#allocation4], 1

// kernel: tpu_custom_call.1
$region0: #{tpu_custom_call.1}
  #allocation0 [shape = 'u32[]', space=smem, size = 0x4, offset = 0x4, fixed_abs, tag = 'smem constant byte address 0x4 - core index']
  #allocation1 [shape = 'u32[144,128]{1,0:T(1,128)}', space=vmem, size = 0x12000, scoped, tag = 'internal scratch']
  #allocation2 [shape = 'f32[1,1]{1,0:T(1,128)S(1)}', space=vmem, size = 0x200, scoped, tag = 'scoped memory for tpu_custom_call.1']
  %s0 = inlined_call_operand.vmem [shape: f32[1,1,128], index: 0, kind: input, shape index: {}]
  %s1 = inlined_call_operand.vmem [shape: f32[64,1], index: 1, kind: input, shape index: {}]
  %s2 = inlined_call_operand.vmem [shape: f32[64,1], index: 2, kind: input, shape index: {}]
  %s3 = inlined_call_operand.vmem [shape: f32[32,64], index: 3, kind: input, shape index: {}]
  %s4 = inlined_call_operand.vmem [shape: f32[32,1], index: 4, kind: input, shape index: {}]
  %s5 = inlined_call_operand.vmem [shape: f32[32,32], index: 5, kind: input, shape index: {}]
  %s6 = inlined_call_operand.vmem [shape: f32[32,1], index: 6, kind: input, shape index: {}]
  %s7 = inlined_call_operand.vmem [shape: f32[32,32], index: 7, kind: input, shape index: {}]
  %s8 = inlined_call_operand.vmem [shape: f32[32,1], index: 8, kind: input, shape index: {}]
  %s9 = inlined_call_operand.vmem [shape: f32[32,32], index: 9, kind: input, shape index: {}]
  %s10 = inlined_call_operand.vmem [shape: f32[32,1], index: 10, kind: input, shape index: {}]
  %s11 = inlined_call_operand.vmem [shape: f32[1,32], index: 11, kind: input, shape index: {}]
  %s12 = inlined_call_operand.<no memory space> [shape: f32[1,1], index: 12, kind: input, shape index: {}]
  %s13 = inlined_call_operand.hbm [shape: f32[1,1,128], index: 13, kind: output, shape index: {}]
  %s14 = sld [smem:[#allocation0]]
  $region62: #{tpu_custom_call.1} parent=0
    _
  %s16 = ssub.s32 1, %s14
  %s17 = scalar_select 0, %s16, %s14
  %v18 = vstv %s12
  %19 = vst [vmem:[#allocation2] sm:$0x1] %v18
  $region1: #{tpu_custom_call.1} parent=0
    #allocation3 [shape = 'u8[512]{0}', space=vmem, size = 0x400, scoped, tag = 'output window, operand 0, single buffered']
    #allocation4 [shape = 's32[1]{0}', space=sflag, size = 0x4, scoped, tag = 'scoped memory for tpu_custom_call.1']
    %20 = vsyncpa [#allocation4], 0
    // Predicated region
    $region2: #{tpu_custom_call.1} parent=1 // pred_check
      _
    $region3: #{tpu_custom_call.1} parent=1 // pred_check_branch
      %22 = sbr.rel (0) target = $region5
    $region4: #{tpu_custom_call.1} parent=1 // pred_region
      _
    $region5: #{tpu_custom_call.1} parent=1 // pred_fallthru
      _
    // Predicated region
    $region6: #{tpu_custom_call.1} parent=1 // pred_check
      _
    $region7: #{tpu_custom_call.1} parent=1 // pred_check_branch
      %24 = sbr.rel (0) target = $region9
    $region8: #{tpu_custom_call.1} parent=1 // pred_region
      _
    $region9: #{tpu_custom_call.1} parent=1 // pred_fallthru
      _
    // Predicated region
    $region10: #{tpu_custom_call.1} parent=1 // pred_check
      _
    $region11: #{tpu_custom_call.1} parent=1 // pred_check_branch
      %26 = sbr.rel (0) target = $region13
    $region12: #{tpu_custom_call.1} parent=1 // pred_region
      _
    $region13: #{tpu_custom_call.1} parent=1 // pred_fallthru
      _
    // Predicated region
    $region14: #{tpu_custom_call.1} parent=1 // pred_check
      _
    $region15: #{tpu_custom_call.1} parent=1 // pred_check_branch
      %28 = sbr.rel (0) target = $region17
    $region16: #{tpu_custom_call.1} parent=1 // pred_region
      _
    $region17: #{tpu_custom_call.1} parent=1 // pred_fallthru
      _
    // Predicated region
    $region18: #{tpu_custom_call.1} parent=1 // pred_check
      _
    $region19: #{tpu_custom_call.1} parent=1 // pred_check_branch
      %30 = sbr.rel (0) target = $region21
    $region20: #{tpu_custom_call.1} parent=1 // pred_region
      _
    $region21: #{tpu_custom_call.1} parent=1 // pred_fallthru
      _
    // Predicated region
    $region22: #{tpu_custom_call.1} parent=1 // pred_check
      _
    $region23: #{tpu_custom_call.1} parent=1 // pred_check_branch
      %32 = sbr.rel (0) target = $region25
    $region24: #{tpu_custom_call.1} parent=1 // pred_region
      _
    $region25: #{tpu_custom_call.1} parent=1 // pred_fallthru
      _
    // Predicated region
    $region26: #{tpu_custom_call.1} parent=1 // pred_check
      _
    $region27: #{tpu_custom_call.1} parent=1 // pred_check_branch
      %34 = sbr.rel (0) target = $region29
    $region28: #{tpu_custom_call.1} parent=1 // pred_region
      _
    $region29: #{tpu_custom_call.1} parent=1 // pred_fallthru
      _
    // Predicated region
    $region30: #{tpu_custom_call.1} parent=1 // pred_check
      _
    $region31: #{tpu_custom_call.1} parent=1 // pred_check_branch
      %36 = sbr.rel (0) target = $region33
    $region32: #{tpu_custom_call.1} parent=1 // pred_region
      _
    $region33: #{tpu_custom_call.1} parent=1 // pred_fallthru
      _
    // Predicated region
    $region34: #{tpu_custom_call.1} parent=1 // pred_check
      _
    $region35: #{tpu_custom_call.1} parent=1 // pred_check_branch
      %38 = sbr.rel (0) target = $region37
    $region36: #{tpu_custom_call.1} parent=1 // pred_region
      _
    $region37: #{tpu_custom_call.1} parent=1 // pred_fallthru
      _
    // Predicated region
    $region38: #{tpu_custom_call.1} parent=1 // pred_check
      _
    $region39: #{tpu_custom_call.1} parent=1 // pred_check_branch
      %40 = sbr.rel (0) target = $region41
    $region40: #{tpu_custom_call.1} parent=1 // pred_region
      _
    $region41: #{tpu_custom_call.1} parent=1 // pred_fallthru
      _
    // Predicated region
    $region42: #{tpu_custom_call.1} parent=1 // pred_check
      _
    $region43: #{tpu_custom_call.1} parent=1 // pred_check_branch
      %42 = sbr.rel (0) target = $region45
    $region44: #{tpu_custom_call.1} parent=1 // pred_region
      _
    $region45: #{tpu_custom_call.1} parent=1 // pred_fallthru
      _
    // Predicated region
    $region46: #{tpu_custom_call.1} parent=1 // pred_check
      _
    $region47: #{tpu_custom_call.1} parent=1 // pred_check_branch
      %44 = sbr.rel (0) target = $region49
    $region48: #{tpu_custom_call.1} parent=1 // pred_region
      _
    $region49: #{tpu_custom_call.1} parent=1 // pred_fallthru
      _
    // Predicated region
    $region50: #{tpu_custom_call.1} parent=1 // pred_check
      _
    $region51: #{tpu_custom_call.1} parent=1 // pred_check_branch
      %46 = sbr.rel (0) target = $region53
    $region52: #{tpu_custom_call.1} parent=1 // pred_region
      _
    $region53: #{tpu_custom_call.1} parent=1 // pred_fallthru
      _
    %v47 = vld [vmem:[%s0] sm:$0x1]
    %v48 = vld [vmem:[%s1] sm:$0xff]
    %v49 = vld [vmem:[%s1 + $0x8] sm:$0xff]
    %v50 = vld [vmem:[%s1 + $0x10] sm:$0xff]
    %v51 = vld [vmem:[%s1 + $0x18] sm:$0xff]
    %v52 = vld [vmem:[%s1 + $0x20] sm:$0xff]
    %v53 = vld [vmem:[%s1 + $0x28] sm:$0xff]
    %v54 = vld [vmem:[%s1 + $0x30] sm:$0xff]
    %v55 = vld [vmem:[%s1 + $0x38] sm:$0xff]
    %57 = vset.pattern.permute.xlu0 0
    %58 = vperm.xlu0 %57, %v48
    %v59 = vpop.permute.xlu0 %58
    %62 = vset.pattern.permute.xlu0 0
    %63 = vperm.xlu0 %62, %v49
    %v64 = vpop.permute.xlu0 %63
    %67 = vset.pattern.permute.xlu0 0
    %68 = vperm.xlu0 %67, %v50
    %v69 = vpop.permute.xlu0 %68
    %72 = vset.pattern.permute.xlu0 0
    %73 = vperm.xlu0 %72, %v51
    %v74 = vpop.permute.xlu0 %73
    %77 = vset.pattern.permute.xlu0 0
    %78 = vperm.xlu0 %77, %v52
    %v79 = vpop.permute.xlu0 %78
    %82 = vset.pattern.permute.xlu0 0
    %83 = vperm.xlu0 %82, %v53
    %v84 = vpop.permute.xlu0 %83
    %87 = vset.pattern.permute.xlu0 0
    %88 = vperm.xlu0 %87, %v54
    %v89 = vpop.permute.xlu0 %88
    %92 = vset.pattern.permute.xlu0 0
    %93 = vperm.xlu0 %92, %v55
    %v94 = vpop.permute.xlu0 %93
    %v97 = vlaneseq
    %v98 = vshrl.u32 %v97, 7
    %v99 = vsub.s32 0, %v98
    %v100 = vrot.slane %v47, %v99
    %v102 = vmul.f32 %v59, %v100
    %v103 = vmul.f32 %v64, %v100
    %v104 = vmul.f32 %v69, %v100
    %v105 = vmul.f32 %v74, %v100
    %v106 = vmul.f32 %v79, %v100
    %v107 = vmul.f32 %v84, %v100
    %v108 = vmul.f32 %v89, %v100
    %v109 = vmul.f32 %v94, %v100
    %v110 = vld [vmem:[%s2] sm:$0xff]
    %v111 = vld [vmem:[%s2 + $0x8] sm:$0xff]
    %v112 = vld [vmem:[%s2 + $0x10] sm:$0xff]
    %v113 = vld [vmem:[%s2 + $0x18] sm:$0xff]
    %v114 = vld [vmem:[%s2 + $0x20] sm:$0xff]
    %v115 = vld [vmem:[%s2 + $0x28] sm:$0xff]
    %v116 = vld [vmem:[%s2 + $0x30] sm:$0xff]
    %v117 = vld [vmem:[%s2 + $0x38] sm:$0xff]
    %119 = vset.pattern.permute.xlu0 0
    %120 = vperm.xlu0 %119, %v110
    %v121 = vpop.permute.xlu0 %120
    %124 = vset.pattern.permute.xlu0 0
    %125 = vperm.xlu0 %124, %v111
    %v126 = vpop.permute.xlu0 %125
    %129 = vset.pattern.permute.xlu0 0
    %130 = vperm.xlu0 %129, %v112
    %v131 = vpop.permute.xlu0 %130
    %134 = vset.pattern.permute.xlu0 0
    %135 = vperm.xlu0 %134, %v113
    %v136 = vpop.permute.xlu0 %135
    %139 = vset.pattern.permute.xlu0 0
    %140 = vperm.xlu0 %139, %v114
    %v141 = vpop.permute.xlu0 %140
    %144 = vset.pattern.permute.xlu0 0
    %145 = vperm.xlu0 %144, %v115
    %v146 = vpop.permute.xlu0 %145
    %149 = vset.pattern.permute.xlu0 0
    %150 = vperm.xlu0 %149, %v116
    %v151 = vpop.permute.xlu0 %150
    %154 = vset.pattern.permute.xlu0 0
    %155 = vperm.xlu0 %154, %v117
    %v156 = vpop.permute.xlu0 %155
    %v158 = vadd.f32 %v102, %v121
    %v159 = vadd.f32 %v103, %v126
    %v160 = vadd.f32 %v104, %v131
    %v161 = vadd.f32 %v105, %v136
    %v162 = vadd.f32 %v106, %v141
    %v163 = vadd.f32 %v107, %v146
    %v164 = vadd.f32 %v108, %v151
    %v165 = vadd.f32 %v109, %v156
    %v166 = vand.u32 2147483647, %v158
    %vm167 = vcmp.le.f32.partialorder %v166, 0.7853982
    %vm168 = vcmp.lt.s32.totalorder %v158, 0
    %v169 = vand.u32 %v158, 2139095040
    %v170 = vshrl.u32 %v169, 23
    %v171 = vsub.s32 %v170, 127
    %v172 = vand.u32 2147483647, %v158
    %v173 = vand.u32 %v172, 8388607
    %v174 = vor.u32 %v173, 8388608
    %v175 = vsub.s32 0, %v174
    %v176 = vadd.s32 %v171, 1
    %vm177 = vcmp.gt.s32.totalorder %v176, 0
    %v178 = vsel %vm177, %v176, 0
    %v179 = vshrl.u32 %v178, 5
    %v180 = vand.u32 %v178, 31
    %v181 = vsub.s32 32, %v180
    %v182 = vshrl.u32 683565275, %v181
    %v183 = vshll.u32 683565275, %v180
    %v184 = vshrl.u32 2475754826, %v181
    %v185 = vor.u32 %v183, %v184
    %v186 = vshll.u32 2475754826, %v180
    %v187 = vshrl.u32 2131351028, %v181
    %v188 = vor.u32 %v186, %v187
    %v189 = vshll.u32 2131351028, %v180
    %v190 = vshrl.u32 2102212464, %v181
    %v191 = vor.u32 %v189, %v190
    %v192 = vshll.u32 2102212464, %v180
    %v193 = vshrl.u32 920167782, %v181
    %v194 = vor.u32 %v192, %v193
    %v195 = vshll.u32 920167782, %v180
    %v196 = vshrl.u32 1326507024, %v181
    %v197 = vor.u32 %v195, %v196
    %vm198 = vcmp.lt.s32.totalorder %v179, 1
    %vm199 = vcmp.lt.s32.totalorder %v179, 2
    %vm200 = vcmp.lt.s32.totalorder %v179, 3
    %vm201 = vcmp.lt.s32.totalorder %v179, 4
    %v202 = vsel %vm198, %v182, %v185
    %v203 = vsel %vm201, %v191, 2102212464
    %v204 = vsel %vm200, %v188, %v203
    %v205 = vsel %vm199, %v202, %v204
    %v206 = vsel %vm198, %v185, %v188
    %v207 = vsel %vm201, %v194, 920167782
    %v208 = vsel %vm200, %v191, %v207
    %v209 = vsel %vm199, %v206, %v208
    %v210 = vsel %vm198, %v188, %v191
    %v211 = vsel %vm201, %v197, 1326507024
    %v212 = vsel %vm200, %v194, %v211
    %v213 = vsel %vm199, %v210, %v212
    %v214 = vshll.u32 %v174, 8
    %v215 = vmul.u32.u64.compose %v214, %v213
    %v216 = vextract.low.u32 %v215
    %v217 = vextract.high.u32 %v215
    %v218 = vmul.u32.u64.compose %v214, %v209
    %v219 = vextract.low.u32 %v218
    %v220 = vextract.high.u32 %v218
    %v221 = vmul.u32 %v214, %v205
    %v222 = vadd.s32 %v217, %v219
    %vm223 = vc.u32 %v217, %v219
    %v224 = vadd.s32 %v220, 1
    %v225 = vsel %vm223, %v224, %v220
    %v226 = vadd.s32 %v221, %v225
    %v227 = vadd.s32 %v226, 536870912
    %v228 = vshrl.u32 %v227, 30
    %v229 = vshll.u32 %v228, 30
    %v230 = vsub.s32 %v226, %v229
    %vm231 = vcmp.lt.s32.totalorder %v230, 0
    %v232 = vsub.s32 0, %v230
    %v233 = vsel %vm231, %v232, %v230
    %v234 = vclz %v233
    %v235 = vsub.s32 %v234, 2
    %vm236 = vcmp.gt.s32.totalorder 0, %v235
    %v237 = vsel %vm236, 0, %v235
    %v238 = vsub.s32 32, %v237
    %v239 = vshll.u32 %v230, %v237
    %v240 = vshrl.u32 %v222, %v238
    %v241 = vor.u32 %v239, %v240
    %v242 = vsub.s32 4294967266, %v237
    %v243 = vadd.s32 %v242, 127
    %v244 = vshll.u32 %v243, 23
    %v245 = vor.u32 4788187, %v244
    %v246 = vand.u32 2147483647, %v245
    %v248 = vcvt.s32.f32 %v241
    %v249 = vmul.f32 %v248, %v246
    %v250 = vxor.u32 %v249, 2147483648
    %v251 = vsel %vm168, %v250, %v249
    %v252 = vsub.s32 4, %v228
    %v253 = vsel %vm168, %v252, %v228
    %v254 = vsel %vm167, %v158, %v251
    %v255 = vsel %vm167, 0, %v253
    %v256 = vcosq.f32.pop %v254
    %v257 = vsinq.f32.pop %v254
    %vm258 = vweird.f32 %v158
    %v259 = vadd.s32 %v255, 3
    %v260 = vand.u32 %v259, 3
    %vm261 = vcmp.lt.s32.totalorder %v260, 2
    %vm262 = vcmp.eq.s32.totalorder %v260, 0
    %v263 = vxor.u32 %v257, 2147483648
    %v264 = vsel %vm262, %v256, %v263
    %vm265 = vcmp.eq.s32.totalorder %v260, 2
    %v266 = vxor.u32 %v256, 2147483648
    %v267 = vsel %vm265, %v266, %v257
    %v268 = vsel %vm261, %v264, %v267
    %v269 = vsel %vm258, nan, %v268
    %v270 = vand.u32 2147483647, %v159
    %vm271 = vcmp.le.f32.partialorder %v270, 0.7853982
    %vm272 = vcmp.lt.s32.totalorder %v159, 0
    %v273 = vand.u32 %v159, 2139095040
    %v274 = vshrl.u32 %v273, 23
    %v275 = vsub.s32 %v274, 127
    %v276 = vand.u32 2147483647, %v159
    %v277 = vand.u32 %v276, 8388607
    %v278 = vor.u32 %v277, 8388608
    %v279 = vsub.s32 0, %v278
    %v280 = vadd.s32 %v275, 1
    %vm281 = vcmp.gt.s32.totalorder %v280, 0
    %v282 = vsel %vm281, %v280, 0
    %v283 = vshrl.u32 %v282, 5
    %v284 = vand.u32 %v282, 31
    %v285 = vsub.s32 32, %v284
    %v286 = vshrl.u32 683565275, %v285
    %v287 = vshll.u32 683565275, %v284
    %v288 = vshrl.u32 2475754826, %v285
    %v289 = vor.u32 %v287, %v288
    %v290 = vshll.u32 2475754826, %v284
    %v291 = vshrl.u32 2131351028, %v285
    %v292 = vor.u32 %v290, %v291
    %v293 = vshll.u32 2131351028, %v284
    %v294 = vshrl.u32 2102212464, %v285
    %v295 = vor.u32 %v293, %v294
    %v296 = vshll.u32 2102212464, %v284
    %v297 = vshrl.u32 920167782, %v285
    %v298 = vor.u32 %v296, %v297
    %v299 = vshll.u32 920167782, %v284
    %v300 = vshrl.u32 1326507024, %v285
    %v301 = vor.u32 %v299, %v300
    %vm302 = vcmp.lt.s32.totalorder %v283, 1
    %vm303 = vcmp.lt.s32.totalorder %v283, 2
    %vm304 = vcmp.lt.s32.totalorder %v283, 3
    %vm305 = vcmp.lt.s32.totalorder %v283, 4
    %v306 = vsel %vm302, %v286, %v289
    %v307 = vsel %vm305, %v295, 2102212464
    %v308 = vsel %vm304, %v292, %v307
    %v309 = vsel %vm303, %v306, %v308
    %v310 = vsel %vm302, %v289, %v292
    %v311 = vsel %vm305, %v298, 920167782
    %v312 = vsel %vm304, %v295, %v311
    %v313 = vsel %vm303, %v310, %v312
    %v314 = vsel %vm302, %v292, %v295
    %v315 = vsel %vm305, %v301, 1326507024
    %v316 = vsel %vm304, %v298, %v315
    %v317 = vsel %vm303, %v314, %v316
    %v318 = vshll.u32 %v278, 8
    %v319 = vmul.u32.u64.compose %v318, %v317
    %v320 = vextract.low.u32 %v319
    %v321 = vextract.high.u32 %v319
    %v322 = vmul.u32.u64.compose %v318, %v313
    %v323 = vextract.low.u32 %v322
    %v324 = vextract.high.u32 %v322
    %v325 = vmul.u32 %v318, %v309
    %v326 = vadd.s32 %v321, %v323
    %vm327 = vc.u32 %v321, %v323
    %v328 = vadd.s32 %v324, 1
    %v329 = vsel %vm327, %v328, %v324
    %v330 = vadd.s32 %v325, %v329
    %v331 = vadd.s32 %v330, 536870912
    %v332 = vshrl.u32 %v331, 30
    %v333 = vshll.u32 %v332, 30
    %v334 = vsub.s32 %v330, %v333
    %vm335 = vcmp.lt.s32.totalorder %v334, 0
    %v336 = vsub.s32 0, %v334
    %v337 = vsel %vm335, %v336, %v334
    %v338 = vclz %v337
    %v339 = vsub.s32 %v338, 2
    %vm340 = vcmp.gt.s32.totalorder 0, %v339
    %v341 = vsel %vm340, 0, %v339
    %v342 = vsub.s32 32, %v341
    %v343 = vshll.u32 %v334, %v341
    %v344 = vshrl.u32 %v326, %v342
    %v345 = vor.u32 %v343, %v344
    %v346 = vsub.s32 4294967266, %v341
    %v347 = vadd.s32 %v346, 127
    %v348 = vshll.u32 %v347, 23
    %v349 = vor.u32 4788187, %v348
    %v350 = vand.u32 2147483647, %v349
    %v352 = vcvt.s32.f32 %v345
    %v353 = vmul.f32 %v352, %v350
    %v354 = vxor.u32 %v353, 2147483648
    %v355 = vsel %vm272, %v354, %v353
    %v356 = vsub.s32 4, %v332
    %v357 = vsel %vm272, %v356, %v332
    %v358 = vsel %vm271, %v159, %v355
    %v359 = vsel %vm271, 0, %v357
    %v360 = vcosq.f32.pop %v358
    %v361 = vsinq.f32.pop %v358
    %vm362 = vweird.f32 %v159
    %v363 = vadd.s32 %v359, 3
    %v364 = vand.u32 %v363, 3
    %vm365 = vcmp.lt.s32.totalorder %v364, 2
    %vm366 = vcmp.eq.s32.totalorder %v364, 0
    %v367 = vxor.u32 %v361, 2147483648
    %v368 = vsel %vm366, %v360, %v367
    %vm369 = vcmp.eq.s32.totalorder %v364, 2
    %v370 = vxor.u32 %v360, 2147483648
    %v371 = vsel %vm369, %v370, %v361
    %v372 = vsel %vm365, %v368, %v371
    %v373 = vsel %vm362, nan, %v372
    %v374 = vand.u32 2147483647, %v160
    %vm375 = vcmp.le.f32.partialorder %v374, 0.7853982
    %vm376 = vcmp.lt.s32.totalorder %v160, 0
    %v377 = vand.u32 %v160, 2139095040
    %v378 = vshrl.u32 %v377, 23
    %v379 = vsub.s32 %v378, 127
    %v380 = vand.u32 2147483647, %v160
    %v381 = vand.u32 %v380, 8388607
    %v382 = vor.u32 %v381, 8388608
    %v383 = vsub.s32 0, %v382
    %v384 = vadd.s32 %v379, 1
    %vm385 = vcmp.gt.s32.totalorder %v384, 0
    %v386 = vsel %vm385, %v384, 0
    %v387 = vshrl.u32 %v386, 5
    %v388 = vand.u32 %v386, 31
    %v389 = vsub.s32 32, %v388
    %v390 = vshrl.u32 683565275, %v389
    %v391 = vshll.u32 683565275, %v388
    %v392 = vshrl.u32 2475754826, %v389
    %v393 = vor.u32 %v391, %v392
    %v394 = vshll.u32 2475754826, %v388
    %v395 = vshrl.u32 2131351028, %v389
    %v396 = vor.u32 %v394, %v395
    %v397 = vshll.u32 2131351028, %v388
    %v398 = vshrl.u32 2102212464, %v389
    %v399 = vor.u32 %v397, %v398
    %v400 = vshll.u32 2102212464, %v388
    %v401 = vshrl.u32 920167782, %v389
    %v402 = vor.u32 %v400, %v401
    %v403 = vshll.u32 920167782, %v388
    %v404 = vshrl.u32 1326507024, %v389
    %v405 = vor.u32 %v403, %v404
    %vm406 = vcmp.lt.s32.totalorder %v387, 1
    %vm407 = vcmp.lt.s32.totalorder %v387, 2
    %vm408 = vcmp.lt.s32.totalorder %v387, 3
    %vm409 = vcmp.lt.s32.totalorder %v387, 4
    %v410 = vsel %vm406, %v390, %v393
    %v411 = vsel %vm409, %v399, 2102212464
    %v412 = vsel %vm408, %v396, %v411
    %v413 = vsel %vm407, %v410, %v412
    %v414 = vsel %vm406, %v393, %v396
    %v415 = vsel %vm409, %v402, 920167782
    %v416 = vsel %vm408, %v399, %v415
    %v417 = vsel %vm407, %v414, %v416
    %v418 = vsel %vm406, %v396, %v399
    %v419 = vsel %vm409, %v405, 1326507024
    %v420 = vsel %vm408, %v402, %v419
    %v421 = vsel %vm407, %v418, %v420
    %v422 = vshll.u32 %v382, 8
    %v423 = vmul.u32.u64.compose %v422, %v421
    %v424 = vextract.low.u32 %v423
    %v425 = vextract.high.u32 %v423
    %v426 = vmul.u32.u64.compose %v422, %v417
    %v427 = vextract.low.u32 %v426
    %v428 = vextract.high.u32 %v426
    %v429 = vmul.u32 %v422, %v413
    %v430 = vadd.s32 %v425, %v427
    %vm431 = vc.u32 %v425, %v427
    %v432 = vadd.s32 %v428, 1
    %v433 = vsel %vm431, %v432, %v428
    %v434 = vadd.s32 %v429, %v433
    %v435 = vadd.s32 %v434, 536870912
    %v436 = vshrl.u32 %v435, 30
    %v437 = vshll.u32 %v436, 30
    %v438 = vsub.s32 %v434, %v437
    %vm439 = vcmp.lt.s32.totalorder %v438, 0
    %v440 = vsub.s32 0, %v438
    %v441 = vsel %vm439, %v440, %v438
    %v442 = vclz %v441
    %v443 = vsub.s32 %v442, 2
    %vm444 = vcmp.gt.s32.totalorder 0, %v443
    %v445 = vsel %vm444, 0, %v443
    %v446 = vsub.s32 32, %v445
    %v447 = vshll.u32 %v438, %v445
    %v448 = vshrl.u32 %v430, %v446
    %v449 = vor.u32 %v447, %v448
    %v450 = vsub.s32 4294967266, %v445
    %v451 = vadd.s32 %v450, 127
    %v452 = vshll.u32 %v451, 23
    %v453 = vor.u32 4788187, %v452
    %v454 = vand.u32 2147483647, %v453
    %v456 = vcvt.s32.f32 %v449
    %v457 = vmul.f32 %v456, %v454
    %v458 = vxor.u32 %v457, 2147483648
    %v459 = vsel %vm376, %v458, %v457
    %v460 = vsub.s32 4, %v436
    %v461 = vsel %vm376, %v460, %v436
    %v462 = vsel %vm375, %v160, %v459
    %v463 = vsel %vm375, 0, %v461
    %v464 = vcosq.f32.pop %v462
    %v465 = vsinq.f32.pop %v462
    %vm466 = vweird.f32 %v160
    %v467 = vadd.s32 %v463, 3
    %v468 = vand.u32 %v467, 3
    %vm469 = vcmp.lt.s32.totalorder %v468, 2
    %vm470 = vcmp.eq.s32.totalorder %v468, 0
    %v471 = vxor.u32 %v465, 2147483648
    %v472 = vsel %vm470, %v464, %v471
    %vm473 = vcmp.eq.s32.totalorder %v468, 2
    %v474 = vxor.u32 %v464, 2147483648
    %v475 = vsel %vm473, %v474, %v465
    %v476 = vsel %vm469, %v472, %v475
    %v477 = vsel %vm466, nan, %v476
    %v478 = vand.u32 2147483647, %v161
    %vm479 = vcmp.le.f32.partialorder %v478, 0.7853982
    %vm480 = vcmp.lt.s32.totalorder %v161, 0
    %v481 = vand.u32 %v161, 2139095040
    %v482 = vshrl.u32 %v481, 23
    %v483 = vsub.s32 %v482, 127
    %v484 = vand.u32 2147483647, %v161
    %v485 = vand.u32 %v484, 8388607
    %v486 = vor.u32 %v485, 8388608
    %v487 = vsub.s32 0, %v486
    %v488 = vadd.s32 %v483, 1
    %vm489 = vcmp.gt.s32.totalorder %v488, 0
    %v490 = vsel %vm489, %v488, 0
    %v491 = vshrl.u32 %v490, 5
    %v492 = vand.u32 %v490, 31
    %v493 = vsub.s32 32, %v492
    %v494 = vshrl.u32 683565275, %v493
    %v495 = vshll.u32 683565275, %v492
    %v496 = vshrl.u32 2475754826, %v493
    %v497 = vor.u32 %v495, %v496
    %v498 = vshll.u32 2475754826, %v492
    %v499 = vshrl.u32 2131351028, %v493
    %v500 = vor.u32 %v498, %v499
    %v501 = vshll.u32 2131351028, %v492
    %v502 = vshrl.u32 2102212464, %v493
    %v503 = vor.u32 %v501, %v502
    %v504 = vshll.u32 2102212464, %v492
    %v505 = vshrl.u32 920167782, %v493
    %v506 = vor.u32 %v504, %v505
    %v507 = vshll.u32 920167782, %v492
    %v508 = vshrl.u32 1326507024, %v493
    %v509 = vor.u32 %v507, %v508
    %vm510 = vcmp.lt.s32.totalorder %v491, 1
    %vm511 = vcmp.lt.s32.totalorder %v491, 2
    %vm512 = vcmp.lt.s32.totalorder %v491, 3
    %vm513 = vcmp.lt.s32.totalorder %v491, 4
    %v514 = vsel %vm510, %v494, %v497
    %v515 = vsel %vm513, %v503, 2102212464
    %v516 = vsel %vm512, %v500, %v515
    %v517 = vsel %vm511, %v514, %v516
    %v518 = vsel %vm510, %v497, %v500
    %v519 = vsel %vm513, %v506, 920167782
    %v520 = vsel %vm512, %v503, %v519
    %v521 = vsel %vm511, %v518, %v520
    %v522 = vsel %vm510, %v500, %v503
    %v523 = vsel %vm513, %v509, 1326507024
    %v524 = vsel %vm512, %v506, %v523
    %v525 = vsel %vm511, %v522, %v524
    %v526 = vshll.u32 %v486, 8
    %v527 = vmul.u32.u64.compose %v526, %v525
    %v528 = vextract.low.u32 %v527
    %v529 = vextract.high.u32 %v527
    %v530 = vmul.u32.u64.compose %v526, %v521
    %v531 = vextract.low.u32 %v530
    %v532 = vextract.high.u32 %v530
    %v533 = vmul.u32 %v526, %v517
    %v534 = vadd.s32 %v529, %v531
    %vm535 = vc.u32 %v529, %v531
    %v536 = vadd.s32 %v532, 1
    %v537 = vsel %vm535, %v536, %v532
    %v538 = vadd.s32 %v533, %v537
    %v539 = vadd.s32 %v538, 536870912
    %v540 = vshrl.u32 %v539, 30
    %v541 = vshll.u32 %v540, 30
    %v542 = vsub.s32 %v538, %v541
    %vm543 = vcmp.lt.s32.totalorder %v542, 0
    %v544 = vsub.s32 0, %v542
    %v545 = vsel %vm543, %v544, %v542
    %v546 = vclz %v545
    %v547 = vsub.s32 %v546, 2
    %vm548 = vcmp.gt.s32.totalorder 0, %v547
    %v549 = vsel %vm548, 0, %v547
    %v550 = vsub.s32 32, %v549
    %v551 = vshll.u32 %v542, %v549
    %v552 = vshrl.u32 %v534, %v550
    %v553 = vor.u32 %v551, %v552
    %v554 = vsub.s32 4294967266, %v549
    %v555 = vadd.s32 %v554, 127
    %v556 = vshll.u32 %v555, 23
    %v557 = vor.u32 4788187, %v556
    %v558 = vand.u32 2147483647, %v557
    %v560 = vcvt.s32.f32 %v553
    %v561 = vmul.f32 %v560, %v558
    %v562 = vxor.u32 %v561, 2147483648
    %v563 = vsel %vm480, %v562, %v561
    %v564 = vsub.s32 4, %v540
    %v565 = vsel %vm480, %v564, %v540
    %v566 = vsel %vm479, %v161, %v563
    %v567 = vsel %vm479, 0, %v565
    %v568 = vcosq.f32.pop %v566
    %v569 = vsinq.f32.pop %v566
    %vm570 = vweird.f32 %v161
    %v571 = vadd.s32 %v567, 3
    %v572 = vand.u32 %v571, 3
    %vm573 = vcmp.lt.s32.totalorder %v572, 2
    %vm574 = vcmp.eq.s32.totalorder %v572, 0
    %v575 = vxor.u32 %v569, 2147483648
    %v576 = vsel %vm574, %v568, %v575
    %vm577 = vcmp.eq.s32.totalorder %v572, 2
    %v578 = vxor.u32 %v568, 2147483648
    %v579 = vsel %vm577, %v578, %v569
    %v580 = vsel %vm573, %v576, %v579
    %v581 = vsel %vm570, nan, %v580
    %v582 = vand.u32 2147483647, %v162
    %vm583 = vcmp.le.f32.partialorder %v582, 0.7853982
    %vm584 = vcmp.lt.s32.totalorder %v162, 0
    %v585 = vand.u32 %v162, 2139095040
    %v586 = vshrl.u32 %v585, 23
    %v587 = vsub.s32 %v586, 127
    %v588 = vand.u32 2147483647, %v162
    %v589 = vand.u32 %v588, 8388607
    %v590 = vor.u32 %v589, 8388608
    %v591 = vsub.s32 0, %v590
    %v592 = vadd.s32 %v587, 1
    %vm593 = vcmp.gt.s32.totalorder %v592, 0
    %v594 = vsel %vm593, %v592, 0
    %v595 = vshrl.u32 %v594, 5
    %v596 = vand.u32 %v594, 31
    %v597 = vsub.s32 32, %v596
    %v598 = vshrl.u32 683565275, %v597
    %v599 = vshll.u32 683565275, %v596
    %v600 = vshrl.u32 2475754826, %v597
    %v601 = vor.u32 %v599, %v600
    %v602 = vshll.u32 2475754826, %v596
    %v603 = vshrl.u32 2131351028, %v597
    %v604 = vor.u32 %v602, %v603
    %v605 = vshll.u32 2131351028, %v596
    %v606 = vshrl.u32 2102212464, %v597
    %v607 = vor.u32 %v605, %v606
    %v608 = vshll.u32 2102212464, %v596
    %v609 = vshrl.u32 920167782, %v597
    %v610 = vor.u32 %v608, %v609
    %v611 = vshll.u32 920167782, %v596
    %v612 = vshrl.u32 1326507024, %v597
    %v613 = vor.u32 %v611, %v612
    %vm614 = vcmp.lt.s32.totalorder %v595, 1
    %vm615 = vcmp.lt.s32.totalorder %v595, 2
    %vm616 = vcmp.lt.s32.totalorder %v595, 3
    %vm617 = vcmp.lt.s32.totalorder %v595, 4
    %v618 = vsel %vm614, %v598, %v601
    %v619 = vsel %vm617, %v607, 2102212464
    %v620 = vsel %vm616, %v604, %v619
    %v621 = vsel %vm615, %v618, %v620
    %v622 = vsel %vm614, %v601, %v604
    %v623 = vsel %vm617, %v610, 920167782
    %v624 = vsel %vm616, %v607, %v623
    %v625 = vsel %vm615, %v622, %v624
    %v626 = vsel %vm614, %v604, %v607
    %v627 = vsel %vm617, %v613, 1326507024
    %v628 = vsel %vm616, %v610, %v627
    %v629 = vsel %vm615, %v626, %v628
    %v630 = vshll.u32 %v590, 8
    %v631 = vmul.u32.u64.compose %v630, %v629
    %v632 = vextract.low.u32 %v631
    %v633 = vextract.high.u32 %v631
    %v634 = vmul.u32.u64.compose %v630, %v625
    %v635 = vextract.low.u32 %v634
    %v636 = vextract.high.u32 %v634
    %v637 = vmul.u32 %v630, %v621
    %v638 = vadd.s32 %v633, %v635
    %vm639 = vc.u32 %v633, %v635
    %v640 = vadd.s32 %v636, 1
    %v641 = vsel %vm639, %v640, %v636
    %v642 = vadd.s32 %v637, %v641
    %v643 = vadd.s32 %v642, 536870912
    %v644 = vshrl.u32 %v643, 30
    %v645 = vshll.u32 %v644, 30
    %v646 = vsub.s32 %v642, %v645
    %vm647 = vcmp.lt.s32.totalorder %v646, 0
    %v648 = vsub.s32 0, %v646
    %v649 = vsel %vm647, %v648, %v646
    %v650 = vclz %v649
    %v651 = vsub.s32 %v650, 2
    %vm652 = vcmp.gt.s32.totalorder 0, %v651
    %v653 = vsel %vm652, 0, %v651
    %v654 = vsub.s32 32, %v653
    %v655 = vshll.u32 %v646, %v653
    %v656 = vshrl.u32 %v638, %v654
    %v657 = vor.u32 %v655, %v656
    %v658 = vsub.s32 4294967266, %v653
    %v659 = vadd.s32 %v658, 127
    %v660 = vshll.u32 %v659, 23
    %v661 = vor.u32 4788187, %v660
    %v662 = vand.u32 2147483647, %v661
    %v664 = vcvt.s32.f32 %v657
    %v665 = vmul.f32 %v664, %v662
    %v666 = vxor.u32 %v665, 2147483648
    %v667 = vsel %vm584, %v666, %v665
    %v668 = vsub.s32 4, %v644
    %v669 = vsel %vm584, %v668, %v644
    %v670 = vsel %vm583, %v162, %v667
    %v671 = vsel %vm583, 0, %v669
    %v672 = vcosq.f32.pop %v670
    %v673 = vsinq.f32.pop %v670
    %vm674 = vweird.f32 %v162
    %v675 = vadd.s32 %v671, 3
    %v676 = vand.u32 %v675, 3
    %vm677 = vcmp.lt.s32.totalorder %v676, 2
    %vm678 = vcmp.eq.s32.totalorder %v676, 0
    %v679 = vxor.u32 %v673, 2147483648
    %v680 = vsel %vm678, %v672, %v679
    %vm681 = vcmp.eq.s32.totalorder %v676, 2
    %v682 = vxor.u32 %v672, 2147483648
    %v683 = vsel %vm681, %v682, %v673
    %v684 = vsel %vm677, %v680, %v683
    %v685 = vsel %vm674, nan, %v684
    %v686 = vand.u32 2147483647, %v163
    %vm687 = vcmp.le.f32.partialorder %v686, 0.7853982
    %vm688 = vcmp.lt.s32.totalorder %v163, 0
    %v689 = vand.u32 %v163, 2139095040
    %v690 = vshrl.u32 %v689, 23
    %v691 = vsub.s32 %v690, 127
    %v692 = vand.u32 2147483647, %v163
    %v693 = vand.u32 %v692, 8388607
    %v694 = vor.u32 %v693, 8388608
    %v695 = vsub.s32 0, %v694
    %v696 = vadd.s32 %v691, 1
    %vm697 = vcmp.gt.s32.totalorder %v696, 0
    %v698 = vsel %vm697, %v696, 0
    %v699 = vshrl.u32 %v698, 5
    %v700 = vand.u32 %v698, 31
    %v701 = vsub.s32 32, %v700
    %v702 = vshrl.u32 683565275, %v701
    %v703 = vshll.u32 683565275, %v700
    %v704 = vshrl.u32 2475754826, %v701
    %v705 = vor.u32 %v703, %v704
    %v706 = vshll.u32 2475754826, %v700
    %v707 = vshrl.u32 2131351028, %v701
    %v708 = vor.u32 %v706, %v707
    %v709 = vshll.u32 2131351028, %v700
    %v710 = vshrl.u32 2102212464, %v701
    %v711 = vor.u32 %v709, %v710
    %v712 = vshll.u32 2102212464, %v700
    %v713 = vshrl.u32 920167782, %v701
    %v714 = vor.u32 %v712, %v713
    %v715 = vshll.u32 920167782, %v700
    %v716 = vshrl.u32 1326507024, %v701
    %v717 = vor.u32 %v715, %v716
    %vm718 = vcmp.lt.s32.totalorder %v699, 1
    %vm719 = vcmp.lt.s32.totalorder %v699, 2
    %vm720 = vcmp.lt.s32.totalorder %v699, 3
    %vm721 = vcmp.lt.s32.totalorder %v699, 4
    %v722 = vsel %vm718, %v702, %v705
    %v723 = vsel %vm721, %v711, 2102212464
    %v724 = vsel %vm720, %v708, %v723
    %v725 = vsel %vm719, %v722, %v724
    %v726 = vsel %vm718, %v705, %v708
    %v727 = vsel %vm721, %v714, 920167782
    %v728 = vsel %vm720, %v711, %v727
    %v729 = vsel %vm719, %v726, %v728
    %v730 = vsel %vm718, %v708, %v711
    %v731 = vsel %vm721, %v717, 1326507024
    %v732 = vsel %vm720, %v714, %v731
    %v733 = vsel %vm719, %v730, %v732
    %v734 = vshll.u32 %v694, 8
    %v735 = vmul.u32.u64.compose %v734, %v733
    %v736 = vextract.low.u32 %v735
    %v737 = vextract.high.u32 %v735
    %v738 = vmul.u32.u64.compose %v734, %v729
    %v739 = vextract.low.u32 %v738
    %v740 = vextract.high.u32 %v738
    %v741 = vmul.u32 %v734, %v725
    %v742 = vadd.s32 %v737, %v739
    %vm743 = vc.u32 %v737, %v739
    %v744 = vadd.s32 %v740, 1
    %v745 = vsel %vm743, %v744, %v740
    %v746 = vadd.s32 %v741, %v745
    %v747 = vadd.s32 %v746, 536870912
    %v748 = vshrl.u32 %v747, 30
    %v749 = vshll.u32 %v748, 30
    %v750 = vsub.s32 %v746, %v749
    %vm751 = vcmp.lt.s32.totalorder %v750, 0
    %v752 = vsub.s32 0, %v750
    %v753 = vsel %vm751, %v752, %v750
    %v754 = vclz %v753
    %v755 = vsub.s32 %v754, 2
    %vm756 = vcmp.gt.s32.totalorder 0, %v755
    %v757 = vsel %vm756, 0, %v755
    %v758 = vsub.s32 32, %v757
    %v759 = vshll.u32 %v750, %v757
    %v760 = vshrl.u32 %v742, %v758
    %v761 = vor.u32 %v759, %v760
    %v762 = vsub.s32 4294967266, %v757
    %v763 = vadd.s32 %v762, 127
    %v764 = vshll.u32 %v763, 23
    %v765 = vor.u32 4788187, %v764
    %v766 = vand.u32 2147483647, %v765
    %v768 = vcvt.s32.f32 %v761
    %v769 = vmul.f32 %v768, %v766
    %v770 = vxor.u32 %v769, 2147483648
    %v771 = vsel %vm688, %v770, %v769
    %v772 = vsub.s32 4, %v748
    %v773 = vsel %vm688, %v772, %v748
    %v774 = vsel %vm687, %v163, %v771
    %v775 = vsel %vm687, 0, %v773
    %v776 = vcosq.f32.pop %v774
    %v777 = vsinq.f32.pop %v774
    %vm778 = vweird.f32 %v163
    %v779 = vadd.s32 %v775, 3
    %v780 = vand.u32 %v779, 3
    %vm781 = vcmp.lt.s32.totalorder %v780, 2
    %vm782 = vcmp.eq.s32.totalorder %v780, 0
    %v783 = vxor.u32 %v777, 2147483648
    %v784 = vsel %vm782, %v776, %v783
    %vm785 = vcmp.eq.s32.totalorder %v780, 2
    %v786 = vxor.u32 %v776, 2147483648
    %v787 = vsel %vm785, %v786, %v777
    %v788 = vsel %vm781, %v784, %v787
    %v789 = vsel %vm778, nan, %v788
    %v790 = vand.u32 2147483647, %v164
    %vm791 = vcmp.le.f32.partialorder %v790, 0.7853982
    %vm792 = vcmp.lt.s32.totalorder %v164, 0
    %v793 = vand.u32 %v164, 2139095040
    %v794 = vshrl.u32 %v793, 23
    %v795 = vsub.s32 %v794, 127
    %v796 = vand.u32 2147483647, %v164
    %v797 = vand.u32 %v796, 8388607
    %v798 = vor.u32 %v797, 8388608
    %v799 = vsub.s32 0, %v798
    %v800 = vadd.s32 %v795, 1
    %vm801 = vcmp.gt.s32.totalorder %v800, 0
    %v802 = vsel %vm801, %v800, 0
    %v803 = vshrl.u32 %v802, 5
    %v804 = vand.u32 %v802, 31
    %v805 = vsub.s32 32, %v804
    %v806 = vshrl.u32 683565275, %v805
    %v807 = vshll.u32 683565275, %v804
    %v808 = vshrl.u32 2475754826, %v805
    %v809 = vor.u32 %v807, %v808
    %v810 = vshll.u32 2475754826, %v804
    %v811 = vshrl.u32 2131351028, %v805
    %v812 = vor.u32 %v810, %v811
    %v813 = vshll.u32 2131351028, %v804
    %v814 = vshrl.u32 2102212464, %v805
    %v815 = vor.u32 %v813, %v814
    %v816 = vshll.u32 2102212464, %v804
    %v817 = vshrl.u32 920167782, %v805
    %v818 = vor.u32 %v816, %v817
    %v819 = vshll.u32 920167782, %v804
    %v820 = vshrl.u32 1326507024, %v805
    %v821 = vor.u32 %v819, %v820
    %vm822 = vcmp.lt.s32.totalorder %v803, 1
    %vm823 = vcmp.lt.s32.totalorder %v803, 2
    %vm824 = vcmp.lt.s32.totalorder %v803, 3
    %vm825 = vcmp.lt.s32.totalorder %v803, 4
    %v826 = vsel %vm822, %v806, %v809
    %v827 = vsel %vm825, %v815, 2102212464
    %v828 = vsel %vm824, %v812, %v827
    %v829 = vsel %vm823, %v826, %v828
    %v830 = vsel %vm822, %v809, %v812
    %v831 = vsel %vm825, %v818, 920167782
    %v832 = vsel %vm824, %v815, %v831
    %v833 = vsel %vm823, %v830, %v832
    %v834 = vsel %vm822, %v812, %v815
    %v835 = vsel %vm825, %v821, 1326507024
    %v836 = vsel %vm824, %v818, %v835
    %v837 = vsel %vm823, %v834, %v836
    %v838 = vshll.u32 %v798, 8
    %v839 = vmul.u32.u64.compose %v838, %v837
    %v840 = vextract.low.u32 %v839
    %v841 = vextract.high.u32 %v839
    %v842 = vmul.u32.u64.compose %v838, %v833
    %v843 = vextract.low.u32 %v842
    %v844 = vextract.high.u32 %v842
    %v845 = vmul.u32 %v838, %v829
    %v846 = vadd.s32 %v841, %v843
    %vm847 = vc.u32 %v841, %v843
    %v848 = vadd.s32 %v844, 1
    %v849 = vsel %vm847, %v848, %v844
    %v850 = vadd.s32 %v845, %v849
    %v851 = vadd.s32 %v850, 536870912
    %v852 = vshrl.u32 %v851, 30
    %v853 = vshll.u32 %v852, 30
    %v854 = vsub.s32 %v850, %v853
    %vm855 = vcmp.lt.s32.totalorder %v854, 0
    %v856 = vsub.s32 0, %v854
    %v857 = vsel %vm855, %v856, %v854
    %v858 = vclz %v857
    %v859 = vsub.s32 %v858, 2
    %vm860 = vcmp.gt.s32.totalorder 0, %v859
    %v861 = vsel %vm860, 0, %v859
    %v862 = vsub.s32 32, %v861
    %v863 = vshll.u32 %v854, %v861
    %v864 = vshrl.u32 %v846, %v862
    %v865 = vor.u32 %v863, %v864
    %v866 = vsub.s32 4294967266, %v861
    %v867 = vadd.s32 %v866, 127
    %v868 = vshll.u32 %v867, 23
    %v869 = vor.u32 4788187, %v868
    %v870 = vand.u32 2147483647, %v869
    %v872 = vcvt.s32.f32 %v865
    %v873 = vmul.f32 %v872, %v870
    %v874 = vxor.u32 %v873, 2147483648
    %v875 = vsel %vm792, %v874, %v873
    %v876 = vsub.s32 4, %v852
    %v877 = vsel %vm792, %v876, %v852
    %v878 = vsel %vm791, %v164, %v875
    %v879 = vsel %vm791, 0, %v877
    %v880 = vcosq.f32.pop %v878
    %v881 = vsinq.f32.pop %v878
    %vm882 = vweird.f32 %v164
    %v883 = vadd.s32 %v879, 3
    %v884 = vand.u32 %v883, 3
    %vm885 = vcmp.lt.s32.totalorder %v884, 2
    %vm886 = vcmp.eq.s32.totalorder %v884, 0
    %v887 = vxor.u32 %v881, 2147483648
    %v888 = vsel %vm886, %v880, %v887
    %vm889 = vcmp.eq.s32.totalorder %v884, 2
    %v890 = vxor.u32 %v880, 2147483648
    %v891 = vsel %vm889, %v890, %v881
    %v892 = vsel %vm885, %v888, %v891
    %v893 = vsel %vm882, nan, %v892
    %v894 = vand.u32 2147483647, %v165
    %vm895 = vcmp.le.f32.partialorder %v894, 0.7853982
    %vm896 = vcmp.lt.s32.totalorder %v165, 0
    %v897 = vand.u32 %v165, 2139095040
    %v898 = vshrl.u32 %v897, 23
    %v899 = vsub.s32 %v898, 127
    %v900 = vand.u32 2147483647, %v165
    %v901 = vand.u32 %v900, 8388607
    %v902 = vor.u32 %v901, 8388608
    %v903 = vsub.s32 0, %v902
    %v904 = vadd.s32 %v899, 1
    %vm905 = vcmp.gt.s32.totalorder %v904, 0
    %v906 = vsel %vm905, %v904, 0
    %v907 = vshrl.u32 %v906, 5
    %v908 = vand.u32 %v906, 31
    %v909 = vsub.s32 32, %v908
    %v910 = vshrl.u32 683565275, %v909
    %v911 = vshll.u32 683565275, %v908
    %v912 = vshrl.u32 2475754826, %v909
    %v913 = vor.u32 %v911, %v912
    %v914 = vshll.u32 2475754826, %v908
    %v915 = vshrl.u32 2131351028, %v909
    %v916 = vor.u32 %v914, %v915
    %v917 = vshll.u32 2131351028, %v908
    %v918 = vshrl.u32 2102212464, %v909
    %v919 = vor.u32 %v917, %v918
    %v920 = vshll.u32 2102212464, %v908
    %v921 = vshrl.u32 920167782, %v909
    %v922 = vor.u32 %v920, %v921
    %v923 = vshll.u32 920167782, %v908
    %v924 = vshrl.u32 1326507024, %v909
    %v925 = vor.u32 %v923, %v924
    %vm926 = vcmp.lt.s32.totalorder %v907, 1
    %vm927 = vcmp.lt.s32.totalorder %v907, 2
    %vm928 = vcmp.lt.s32.totalorder %v907, 3
    %vm929 = vcmp.lt.s32.totalorder %v907, 4
    %v930 = vsel %vm926, %v910, %v913
    %v931 = vsel %vm929, %v919, 2102212464
    %v932 = vsel %vm928, %v916, %v931
    %v933 = vsel %vm927, %v930, %v932
    %v934 = vsel %vm926, %v913, %v916
    %v935 = vsel %vm929, %v922, 920167782
    %v936 = vsel %vm928, %v919, %v935
    %v937 = vsel %vm927, %v934, %v936
    %v938 = vsel %vm926, %v916, %v919
    %v939 = vsel %vm929, %v925, 1326507024
    %v940 = vsel %vm928, %v922, %v939
    %v941 = vsel %vm927, %v938, %v940
    %v942 = vshll.u32 %v902, 8
    %v943 = vmul.u32.u64.compose %v942, %v941
    %v944 = vextract.low.u32 %v943
    %v945 = vextract.high.u32 %v943
    %v946 = vmul.u32.u64.compose %v942, %v937
    %v947 = vextract.low.u32 %v946
    %v948 = vextract.high.u32 %v946
    %v949 = vmul.u32 %v942, %v933
    %v950 = vadd.s32 %v945, %v947
    %vm951 = vc.u32 %v945, %v947
    %v952 = vadd.s32 %v948, 1
    %v953 = vsel %vm951, %v952, %v948
    %v954 = vadd.s32 %v949, %v953
    %v955 = vadd.s32 %v954, 536870912
    %v956 = vshrl.u32 %v955, 30
    %v957 = vshll.u32 %v956, 30
    %v958 = vsub.s32 %v954, %v957
    %vm959 = vcmp.lt.s32.totalorder %v958, 0
    %v960 = vsub.s32 0, %v958
    %v961 = vsel %vm959, %v960, %v958
    %v962 = vclz %v961
    %v963 = vsub.s32 %v962, 2
    %vm964 = vcmp.gt.s32.totalorder 0, %v963
    %v965 = vsel %vm964, 0, %v963
    %v966 = vsub.s32 32, %v965
    %v967 = vshll.u32 %v958, %v965
    %v968 = vshrl.u32 %v950, %v966
    %v969 = vor.u32 %v967, %v968
    %v970 = vsub.s32 4294967266, %v965
    %v971 = vadd.s32 %v970, 127
    %v972 = vshll.u32 %v971, 23
    %v973 = vor.u32 4788187, %v972
    %v974 = vand.u32 2147483647, %v973
    %v976 = vcvt.s32.f32 %v969
    %v977 = vmul.f32 %v976, %v974
    %v978 = vxor.u32 %v977, 2147483648
    %v979 = vsel %vm896, %v978, %v977
    %v980 = vsub.s32 4, %v956
    %v981 = vsel %vm896, %v980, %v956
    %v982 = vsel %vm895, %v165, %v979
    %v983 = vsel %vm895, 0, %v981
    %v984 = vcosq.f32.pop %v982
    %v985 = vsinq.f32.pop %v982
    %vm986 = vweird.f32 %v165
    %v987 = vadd.s32 %v983, 3
    %v988 = vand.u32 %v987, 3
    %vm989 = vcmp.lt.s32.totalorder %v988, 2
    %vm990 = vcmp.eq.s32.totalorder %v988, 0
    %v991 = vxor.u32 %v985, 2147483648
    %v992 = vsel %vm990, %v984, %v991
    %vm993 = vcmp.eq.s32.totalorder %v988, 2
    %v994 = vxor.u32 %v984, 2147483648
    %v995 = vsel %vm993, %v994, %v985
    %v996 = vsel %vm989, %v992, %v995
    %v997 = vsel %vm986, nan, %v996
    %v998 = vld [vmem:[%s3] sm:$0xff]
    %v999 = vld [vmem:[%s3 + $0x8] sm:$0xff]
    %v1000 = vld [vmem:[%s3 + $0x10] sm:$0xff]
    %v1001 = vld [vmem:[%s3 + $0x18] sm:$0xff]
    %v1002 = vld [vmem:[%s4] sm:$0xff]
    %v1003 = vld [vmem:[%s4 + $0x8] sm:$0xff]
    %v1004 = vld [vmem:[%s4 + $0x10] sm:$0xff]
    %v1005 = vld [vmem:[%s4 + $0x18] sm:$0xff]
    %1007 = vset.pattern.permute.xlu0 0
    %1008 = vperm.xlu0 %1007, %v1002
    %v1009 = vpop.permute.xlu0 %1008
    %1012 = vset.pattern.permute.xlu0 0
    %1013 = vperm.xlu0 %1012, %v1003
    %v1014 = vpop.permute.xlu0 %1013
    %1017 = vset.pattern.permute.xlu0 0
    %1018 = vperm.xlu0 %1017, %v1004
    %v1019 = vpop.permute.xlu0 %1018
    %1022 = vset.pattern.permute.xlu0 0
    %1023 = vperm.xlu0 %1022, %v1005
    %v1024 = vpop.permute.xlu0 %1023
    %vm1026 = vcmask 523264
    %v1028 = vsel %vm1026, %v998, 0
    %v1031 = vsel %vm1026, %v999, 0
    %v1034 = vsel %vm1026, %v1000, 0
    %v1037 = vsel %vm1026, %v1001, 0
    %1039 = vmatprep.subr.mxu0 0.0
    %1040 = vmatpush1.msra.mxu0 %v269
    %1041 = vmatprep.subr.mxu0 0.0
    %1042 = vmatpush1.msra.mxu0 %v373
    %1043 = vmatprep.subr.mxu0 0.0
    %1044 = vmatpush1.msra.mxu0 %v477
    %1045 = vmatprep.subr.mxu0 0.0
    %1046 = vmatpush1.msra.mxu0 %v581
    %1047 = vmatprep.subr.mxu0 0.0
    %1048 = vmatpush1.msra.mxu0 %v685
    %1049 = vmatprep.subr.mxu0 0.0
    %1050 = vmatpush1.msra.mxu0 %v789
    %1051 = vmatprep.subr.mxu0 0.0
    %1052 = vmatpush1.msra.mxu0 %v893
    %1053 = vmatprep.subr.mxu0 0.0
    %1054 = vmatpush1.msra.mxu0 %v997
    %1055 = vmatprep.subr.mxu0 0.0
    %1056 = vmatpush1.msra.mxu0 0.0
    %1057 = vmatprep.subr.mxu0 0.0
    %1058 = vmatpush1.msra.mxu0 0.0
    %1059 = vmatprep.subr.mxu0 0.0
    %1060 = vmatpush1.msra.mxu0 0.0
    %1061 = vmatprep.subr.mxu0 0.0
    %1062 = vmatpush1.msra.mxu0 0.0
    %1063 = vmatprep.subr.mxu0 0.0
    %1064 = vmatpush1.msra.mxu0 0.0
    %1065 = vmatprep.subr.mxu0 0.0
    %1066 = vmatpush1.msra.mxu0 0.0
    %1067 = vmatprep.subr.mxu0 0.0
    %1068 = vmatpush1.msra.mxu0 0.0
    %1069 = vmatprep.subr.mxu0 0.0
    %1070 = vmatpush1.msra.mxu0 0.0
    %1071 = vmatprep.subr.mxu0 0.0
    %1072 = vmatpush1.msra.mxu0 0.0
    %1073 = vmatprep.subr.mxu0 0.0
    %1074 = vmatpush1.msra.mxu0 0.0
    %1075 = vmatprep.subr.mxu0 0.0
    %1076 = vmatpush1.msra.mxu0 0.0
    %1077 = vmatprep.subr.mxu0 0.0
    %1078 = vmatpush1.msra.mxu0 0.0
    %1079 = vmatprep.subr.mxu0 0.0
    %1080 = vmatpush1.msra.mxu0 0.0
    %1081 = vmatprep.subr.mxu0 0.0
    %1082 = vmatpush1.msra.mxu0 0.0
    %1083 = vmatprep.subr.mxu0 0.0
    %1084 = vmatpush1.msra.mxu0 0.0
    %1085 = vmatprep.subr.mxu0 0.0
    %1086 = vmatpush1.msra.mxu0 0.0
    %1087 = vmatprep.subr.mxu0 0.0
    %1088 = vmatpush1.msra.mxu0 0.0
    %1089 = vmatprep.subr.mxu0 0.0
    %1090 = vmatpush1.msra.mxu0 0.0
    %1091 = vmatprep.subr.mxu0 0.0
    %1092 = vmatpush1.msra.mxu0 0.0
    %1093 = vmatprep.subr.mxu0 0.0
    %1094 = vmatpush1.msra.mxu0 0.0
    %1095 = vmatprep.subr.mxu0 0.0
    %1096 = vmatpush1.msra.mxu0 0.0
    %1097 = vmatprep.subr.mxu0 0.0
    %1098 = vmatpush1.msra.mxu0 0.0
    %1099 = vmatprep.subr.mxu0 0.0
    %1100 = vmatpush1.msra.mxu0 0.0
    %1101 = vmatprep.subr.mxu0 0.0
    %1102 = vmatpush1.msra.mxu0 0.0
    %1103 = vmatprep.mubr.f32.mxu0 0.0
    %1104 = vmatmul.mubr.f32.gmra.mrb[0].mxu0 %v1028
    %v1105 = vpop.f32.mrb[0].mxu0
    %v1106 = vadd.f32 %v1009, %v1105
    %v1107 = vpop.f32.mrb[0].mxu0
    %1108 = vmatprep.mubr.f32.mxu0 0.0
    %1109 = vmatmul.mubr.f32.gmra.mrb[0].mxu0 %v1031
    %v1110 = vpop.f32.mrb[0].mxu0
    %v1111 = vadd.f32 %v1014, %v1110
    %v1112 = vpop.f32.mrb[0].mxu0
    %1113 = vmatprep.mubr.f32.mxu0 0.0
    %1114 = vmatmul.mubr.f32.gmra.mrb[0].mxu0 %v1034
    %v1115 = vpop.f32.mrb[0].mxu0
    %v1116 = vadd.f32 %v1019, %v1115
    %v1117 = vpop.f32.mrb[0].mxu0
    %1118 = vmatprep.mubr.f32.mxu0 0.0
    %1119 = vmatmul.mubr.f32.gmra.mrb[0].mxu0 %v1037
    %v1120 = vpop.f32.mrb[0].mxu0
    %v1121 = vadd.f32 %v1024, %v1120
    %v1122 = vpop.f32.mrb[0].mxu0
    %1123 = vdwg.mxu0
    %v1124 = vtanh.pop %v1106
    %v1125 = vtanh.pop %v1111
    %v1126 = vtanh.pop %v1116
    %v1127 = vtanh.pop %v1121
    %v1128 = vld [vmem:[%s5] sm:$0xff]
    %v1129 = vld [vmem:[%s5 + $0x8] sm:$0xff]
    %v1130 = vld [vmem:[%s5 + $0x10] sm:$0xff]
    %v1131 = vld [vmem:[%s5 + $0x18] sm:$0xff]
    %v1132 = vld [vmem:[%s6] sm:$0xff]
    %v1133 = vld [vmem:[%s6 + $0x8] sm:$0xff]
    %v1134 = vld [vmem:[%s6 + $0x10] sm:$0xff]
    %v1135 = vld [vmem:[%s6 + $0x18] sm:$0xff]
    %1137 = vset.pattern.permute.xlu0 0
    %1138 = vperm.xlu0 %1137, %v1132
    %v1139 = vpop.permute.xlu0 %1138
    %1142 = vset.pattern.permute.xlu0 0
    %1143 = vperm.xlu0 %1142, %v1133
    %v1144 = vpop.permute.xlu0 %1143
    %1147 = vset.pattern.permute.xlu0 0
    %1148 = vperm.xlu0 %1147, %v1134
    %v1149 = vpop.permute.xlu0 %1148
    %1152 = vset.pattern.permute.xlu0 0
    %1153 = vperm.xlu0 %1152, %v1135
    %v1154 = vpop.permute.xlu0 %1153
    %vm1156 = vcmask 261120
    %v1158 = vsel %vm1156, %v1128, 0
    %v1161 = vsel %vm1156, %v1129, 0
    %v1164 = vsel %vm1156, %v1130, 0
    %v1167 = vsel %vm1156, %v1131, 0
    %1169 = vmatprep.subr.mxu0 0.0
    %1170 = vmatpush1.msra.mxu0 %v1124
    %1171 = vmatprep.subr.mxu0 0.0
    %1172 = vmatpush1.msra.mxu0 %v1125
    %1173 = vmatprep.subr.mxu0 0.0
    %1174 = vmatpush1.msra.mxu0 %v1126
    %1175 = vmatprep.subr.mxu0 0.0
    %1176 = vmatpush1.msra.mxu0 %v1127
    %1177 = vmatprep.subr.mxu0 0.0
    %1178 = vmatpush1.msra.mxu0 0.0
    %1179 = vmatprep.subr.mxu0 0.0
    %1180 = vmatpush1.msra.mxu0 0.0
    %1181 = vmatprep.subr.mxu0 0.0
    %1182 = vmatpush1.msra.mxu0 0.0
    %1183 = vmatprep.subr.mxu0 0.0
    %1184 = vmatpush1.msra.mxu0 0.0
    %1185 = vmatprep.subr.mxu0 0.0
    %1186 = vmatpush1.msra.mxu0 0.0
    %1187 = vmatprep.subr.mxu0 0.0
    %1188 = vmatpush1.msra.mxu0 0.0
    %1189 = vmatprep.subr.mxu0 0.0
    %1190 = vmatpush1.msra.mxu0 0.0
    %1191 = vmatprep.subr.mxu0 0.0
    %1192 = vmatpush1.msra.mxu0 0.0
    %1193 = vmatprep.subr.mxu0 0.0
    %1194 = vmatpush1.msra.mxu0 0.0
    %1195 = vmatprep.subr.mxu0 0.0
    %1196 = vmatpush1.msra.mxu0 0.0
    %1197 = vmatprep.subr.mxu0 0.0
    %1198 = vmatpush1.msra.mxu0 0.0
    %1199 = vmatprep.subr.mxu0 0.0
    %1200 = vmatpush1.msra.mxu0 0.0
    %1201 = vmatprep.subr.mxu0 0.0
    %1202 = vmatpush1.msra.mxu0 0.0
    %1203 = vmatprep.subr.mxu0 0.0
    %1204 = vmatpush1.msra.mxu0 0.0
    %1205 = vmatprep.subr.mxu0 0.0
    %1206 = vmatpush1.msra.mxu0 0.0
    %1207 = vmatprep.subr.mxu0 0.0
    %1208 = vmatpush1.msra.mxu0 0.0
    %1209 = vmatprep.subr.mxu0 0.0
    %1210 = vmatpush1.msra.mxu0 0.0
    %1211 = vmatprep.subr.mxu0 0.0
    %1212 = vmatpush1.msra.mxu0 0.0
    %1213 = vmatprep.subr.mxu0 0.0
    %1214 = vmatpush1.msra.mxu0 0.0
    %1215 = vmatprep.subr.mxu0 0.0
    %1216 = vmatpush1.msra.mxu0 0.0
    %1217 = vmatprep.subr.mxu0 0.0
    %1218 = vmatpush1.msra.mxu0 0.0
    %1219 = vmatprep.subr.mxu0 0.0
    %1220 = vmatpush1.msra.mxu0 0.0
    %1221 = vmatprep.subr.mxu0 0.0
    %1222 = vmatpush1.msra.mxu0 0.0
    %1223 = vmatprep.subr.mxu0 0.0
    %1224 = vmatpush1.msra.mxu0 0.0
    %1225 = vmatprep.subr.mxu0 0.0
    %1226 = vmatpush1.msra.mxu0 0.0
    %1227 = vmatprep.subr.mxu0 0.0
    %1228 = vmatpush1.msra.mxu0 0.0
    %1229 = vmatprep.subr.mxu0 0.0
    %1230 = vmatpush1.msra.mxu0 0.0
    %1231 = vmatprep.subr.mxu0 0.0
    %1232 = vmatpush1.msra.mxu0 0.0
    %1233 = vmatprep.mubr.f32.mxu0 0.0
    %1234 = vmatmul.mubr.f32.gmra.mrb[0].mxu0 %v1158
    %v1235 = vpop.f32.mrb[0].mxu0
    %v1236 = vadd.f32 %v1139, %v1235
    %v1237 = vpop.f32.mrb[0].mxu0
    %1238 = vmatprep.mubr.f32.mxu0 0.0
    %1239 = vmatmul.mubr.f32.gmra.mrb[0].mxu0 %v1161
    %v1240 = vpop.f32.mrb[0].mxu0
    %v1241 = vadd.f32 %v1144, %v1240
    %v1242 = vpop.f32.mrb[0].mxu0
    %1243 = vmatprep.mubr.f32.mxu0 0.0
    %1244 = vmatmul.mubr.f32.gmra.mrb[0].mxu0 %v1164
    %v1245 = vpop.f32.mrb[0].mxu0
    %v1246 = vadd.f32 %v1149, %v1245
    %v1247 = vpop.f32.mrb[0].mxu0
    %1248 = vmatprep.mubr.f32.mxu0 0.0
    %1249 = vmatmul.mubr.f32.gmra.mrb[0].mxu0 %v1167
    %v1250 = vpop.f32.mrb[0].mxu0
    %v1251 = vadd.f32 %v1154, %v1250
    %v1252 = vpop.f32.mrb[0].mxu0
    %1253 = vdwg.mxu0
    %v1254 = vtanh.pop %v1236
    %v1255 = vtanh.pop %v1241
    %v1256 = vtanh.pop %v1246
    %v1257 = vtanh.pop %v1251
    %v1258 = vld [vmem:[%s7] sm:$0xff]
    %v1259 = vld [vmem:[%s7 + $0x8] sm:$0xff]
    %v1260 = vld [vmem:[%s7 + $0x10] sm:$0xff]
    %v1261 = vld [vmem:[%s7 + $0x18] sm:$0xff]
    %v1262 = vld [vmem:[%s8] sm:$0xff]
    %v1263 = vld [vmem:[%s8 + $0x8] sm:$0xff]
    %v1264 = vld [vmem:[%s8 + $0x10] sm:$0xff]
    %v1265 = vld [vmem:[%s8 + $0x18] sm:$0xff]
    %1267 = vset.pattern.permute.xlu0 0
    %1268 = vperm.xlu0 %1267, %v1262
    %v1269 = vpop.permute.xlu0 %1268
    %1272 = vset.pattern.permute.xlu0 0
    %1273 = vperm.xlu0 %1272, %v1263
    %v1274 = vpop.permute.xlu0 %1273
    %1277 = vset.pattern.permute.xlu0 0
    %1278 = vperm.xlu0 %1277, %v1264
    %v1279 = vpop.permute.xlu0 %1278
    %1282 = vset.pattern.permute.xlu0 0
    %1283 = vperm.xlu0 %1282, %v1265
    %v1284 = vpop.permute.xlu0 %1283
    %v1287 = vsel %vm1156, %v1258, 0
    %v1290 = vsel %vm1156, %v1259, 0
    %v1293 = vsel %vm1156, %v1260, 0
    %v1296 = vsel %vm1156, %v1261, 0
    %1298 = vmatprep.subr.mxu0 0.0
    %1299 = vmatpush1.msra.mxu0 %v1254
    %1300 = vmatprep.subr.mxu0 0.0
    %1301 = vmatpush1.msra.mxu0 %v1255
    %1302 = vmatprep.subr.mxu0 0.0
    %1303 = vmatpush1.msra.mxu0 %v1256
    %1304 = vmatprep.subr.mxu0 0.0
    %1305 = vmatpush1.msra.mxu0 %v1257
    %1306 = vmatprep.subr.mxu0 0.0
    %1307 = vmatpush1.msra.mxu0 0.0
    %1308 = vmatprep.subr.mxu0 0.0
    %1309 = vmatpush1.msra.mxu0 0.0
    %1310 = vmatprep.subr.mxu0 0.0
    %1311 = vmatpush1.msra.mxu0 0.0
    %1312 = vmatprep.subr.mxu0 0.0
    %1313 = vmatpush1.msra.mxu0 0.0
    %1314 = vmatprep.subr.mxu0 0.0
    %1315 = vmatpush1.msra.mxu0 0.0
    %1316 = vmatprep.subr.mxu0 0.0
    %1317 = vmatpush1.msra.mxu0 0.0
    %1318 = vmatprep.subr.mxu0 0.0
    %1319 = vmatpush1.msra.mxu0 0.0
    %1320 = vmatprep.subr.mxu0 0.0
    %1321 = vmatpush1.msra.mxu0 0.0
    %1322 = vmatprep.subr.mxu0 0.0
    %1323 = vmatpush1.msra.mxu0 0.0
    %1324 = vmatprep.subr.mxu0 0.0
    %1325 = vmatpush1.msra.mxu0 0.0
    %1326 = vmatprep.subr.mxu0 0.0
    %1327 = vmatpush1.msra.mxu0 0.0
    %1328 = vmatprep.subr.mxu0 0.0
    %1329 = vmatpush1.msra.mxu0 0.0
    %1330 = vmatprep.subr.mxu0 0.0
    %1331 = vmatpush1.msra.mxu0 0.0
    %1332 = vmatprep.subr.mxu0 0.0
    %1333 = vmatpush1.msra.mxu0 0.0
    %1334 = vmatprep.subr.mxu0 0.0
    %1335 = vmatpush1.msra.mxu0 0.0
    %1336 = vmatprep.subr.mxu0 0.0
    %1337 = vmatpush1.msra.mxu0 0.0
    %1338 = vmatprep.subr.mxu0 0.0
    %1339 = vmatpush1.msra.mxu0 0.0
    %1340 = vmatprep.subr.mxu0 0.0
    %1341 = vmatpush1.msra.mxu0 0.0
    %1342 = vmatprep.subr.mxu0 0.0
    %1343 = vmatpush1.msra.mxu0 0.0
    %1344 = vmatprep.subr.mxu0 0.0
    %1345 = vmatpush1.msra.mxu0 0.0
    %1346 = vmatprep.subr.mxu0 0.0
    %1347 = vmatpush1.msra.mxu0 0.0
    %1348 = vmatprep.subr.mxu0 0.0
    %1349 = vmatpush1.msra.mxu0 0.0
    %1350 = vmatprep.subr.mxu0 0.0
    %1351 = vmatpush1.msra.mxu0 0.0
    %1352 = vmatprep.subr.mxu0 0.0
    %1353 = vmatpush1.msra.mxu0 0.0
    %1354 = vmatprep.subr.mxu0 0.0
    %1355 = vmatpush1.msra.mxu0 0.0
    %1356 = vmatprep.subr.mxu0 0.0
    %1357 = vmatpush1.msra.mxu0 0.0
    %1358 = vmatprep.subr.mxu0 0.0
    %1359 = vmatpush1.msra.mxu0 0.0
    %1360 = vmatprep.subr.mxu0 0.0
    %1361 = vmatpush1.msra.mxu0 0.0
    %1362 = vmatprep.mubr.f32.mxu0 0.0
    %1363 = vmatmul.mubr.f32.gmra.mrb[0].mxu0 %v1287
    %v1364 = vpop.f32.mrb[0].mxu0
    %v1365 = vadd.f32 %v1269, %v1364
    %v1366 = vpop.f32.mrb[0].mxu0
    %1367 = vmatprep.mubr.f32.mxu0 0.0
    %1368 = vmatmul.mubr.f32.gmra.mrb[0].mxu0 %v1290
    %v1369 = vpop.f32.mrb[0].mxu0
    %v1370 = vadd.f32 %v1274, %v1369
    %v1371 = vpop.f32.mrb[0].mxu0
    %1372 = vmatprep.mubr.f32.mxu0 0.0
    %1373 = vmatmul.mubr.f32.gmra.mrb[0].mxu0 %v1293
    %v1374 = vpop.f32.mrb[0].mxu0
    %v1375 = vadd.f32 %v1279, %v1374
    %v1376 = vpop.f32.mrb[0].mxu0
    %1377 = vmatprep.mubr.f32.mxu0 0.0
    %1378 = vmatmul.mubr.f32.gmra.mrb[0].mxu0 %v1296
    %v1379 = vpop.f32.mrb[0].mxu0
    %v1380 = vadd.f32 %v1284, %v1379
    %v1381 = vpop.f32.mrb[0].mxu0
    %1382 = vdwg.mxu0
    %v1383 = vtanh.pop %v1365
    %v1384 = vtanh.pop %v1370
    %v1385 = vtanh.pop %v1375
    %v1386 = vtanh.pop %v1380
    %v1387 = vld [vmem:[%s9] sm:$0xff]
    %v1388 = vld [vmem:[%s9 + $0x8] sm:$0xff]
    %v1389 = vld [vmem:[%s9 + $0x10] sm:$0xff]
    %v1390 = vld [vmem:[%s9 + $0x18] sm:$0xff]
    %v1391 = vld [vmem:[%s10] sm:$0xff]
    %v1392 = vld [vmem:[%s10 + $0x8] sm:$0xff]
    %v1393 = vld [vmem:[%s10 + $0x10] sm:$0xff]
    %v1394 = vld [vmem:[%s10 + $0x18] sm:$0xff]
    %1396 = vset.pattern.permute.xlu0 0
    %1397 = vperm.xlu0 %1396, %v1391
    %v1398 = vpop.permute.xlu0 %1397
    %1401 = vset.pattern.permute.xlu0 0
    %1402 = vperm.xlu0 %1401, %v1392
    %v1403 = vpop.permute.xlu0 %1402
    %1406 = vset.pattern.permute.xlu0 0
    %1407 = vperm.xlu0 %1406, %v1393
    %v1408 = vpop.permute.xlu0 %1407
    %1411 = vset.pattern.permute.xlu0 0
    %1412 = vperm.xlu0 %1411, %v1394
    %v1413 = vpop.permute.xlu0 %1412
    %v1416 = vsel %vm1156, %v1387, 0
    %v1419 = vsel %vm1156, %v1388, 0
    %v1422 = vsel %vm1156, %v1389, 0
    %v1425 = vsel %vm1156, %v1390, 0
    %1427 = vmatprep.subr.mxu0 0.0
    %1428 = vmatpush1.msra.mxu0 %v1383
    %1429 = vmatprep.subr.mxu0 0.0
    %1430 = vmatpush1.msra.mxu0 %v1384
    %1431 = vmatprep.subr.mxu0 0.0
    %1432 = vmatpush1.msra.mxu0 %v1385
    %1433 = vmatprep.subr.mxu0 0.0
    %1434 = vmatpush1.msra.mxu0 %v1386
    %1435 = vmatprep.subr.mxu0 0.0
    %1436 = vmatpush1.msra.mxu0 0.0
    %1437 = vmatprep.subr.mxu0 0.0
    %1438 = vmatpush1.msra.mxu0 0.0
    %1439 = vmatprep.subr.mxu0 0.0
    %1440 = vmatpush1.msra.mxu0 0.0
    %1441 = vmatprep.subr.mxu0 0.0
    %1442 = vmatpush1.msra.mxu0 0.0
    %1443 = vmatprep.subr.mxu0 0.0
    %1444 = vmatpush1.msra.mxu0 0.0
    %1445 = vmatprep.subr.mxu0 0.0
    %1446 = vmatpush1.msra.mxu0 0.0
    %1447 = vmatprep.subr.mxu0 0.0
    %1448 = vmatpush1.msra.mxu0 0.0
    %1449 = vmatprep.subr.mxu0 0.0
    %1450 = vmatpush1.msra.mxu0 0.0
    %1451 = vmatprep.subr.mxu0 0.0
    %1452 = vmatpush1.msra.mxu0 0.0
    %1453 = vmatprep.subr.mxu0 0.0
    %1454 = vmatpush1.msra.mxu0 0.0
    %1455 = vmatprep.subr.mxu0 0.0
    %1456 = vmatpush1.msra.mxu0 0.0
    %1457 = vmatprep.subr.mxu0 0.0
    %1458 = vmatpush1.msra.mxu0 0.0
    %1459 = vmatprep.subr.mxu0 0.0
    %1460 = vmatpush1.msra.mxu0 0.0
    %1461 = vmatprep.subr.mxu0 0.0
    %1462 = vmatpush1.msra.mxu0 0.0
    %1463 = vmatprep.subr.mxu0 0.0
    %1464 = vmatpush1.msra.mxu0 0.0
    %1465 = vmatprep.subr.mxu0 0.0
    %1466 = vmatpush1.msra.mxu0 0.0
    %1467 = vmatprep.subr.mxu0 0.0
    %1468 = vmatpush1.msra.mxu0 0.0
    %1469 = vmatprep.subr.mxu0 0.0
    %1470 = vmatpush1.msra.mxu0 0.0
    %1471 = vmatprep.subr.mxu0 0.0
    %1472 = vmatpush1.msra.mxu0 0.0
    %1473 = vmatprep.subr.mxu0 0.0
    %1474 = vmatpush1.msra.mxu0 0.0
    %1475 = vmatprep.subr.mxu0 0.0
    %1476 = vmatpush1.msra.mxu0 0.0
    %1477 = vmatprep.subr.mxu0 0.0
    %1478 = vmatpush1.msra.mxu0 0.0
    %1479 = vmatprep.subr.mxu0 0.0
    %1480 = vmatpush1.msra.mxu0 0.0
    %1481 = vmatprep.subr.mxu0 0.0
    %1482 = vmatpush1.msra.mxu0 0.0
    %1483 = vmatprep.subr.mxu0 0.0
    %1484 = vmatpush1.msra.mxu0 0.0
    %1485 = vmatprep.subr.mxu0 0.0
    %1486 = vmatpush1.msra.mxu0 0.0
    %1487 = vmatprep.subr.mxu0 0.0
    %1488 = vmatpush1.msra.mxu0 0.0
    %1489 = vmatprep.subr.mxu0 0.0
    %1490 = vmatpush1.msra.mxu0 0.0
    %1491 = vmatprep.mubr.f32.mxu0 0.0
    %1492 = vmatmul.mubr.f32.gmra.mrb[0].mxu0 %v1416
    %v1493 = vpop.f32.mrb[0].mxu0
    %v1494 = vadd.f32 %v1398, %v1493
    %v1495 = vpop.f32.mrb[0].mxu0
    %1496 = vmatprep.mubr.f32.mxu0 0.0
    %1497 = vmatmul.mubr.f32.gmra.mrb[0].mxu0 %v1419
    %v1498 = vpop.f32.mrb[0].mxu0
    %v1499 = vadd.f32 %v1403, %v1498
    %v1500 = vpop.f32.mrb[0].mxu0
    %1501 = vmatprep.mubr.f32.mxu0 0.0
    %1502 = vmatmul.mubr.f32.gmra.mrb[0].mxu0 %v1422
    %v1503 = vpop.f32.mrb[0].mxu0
    %v1504 = vadd.f32 %v1408, %v1503
    %v1505 = vpop.f32.mrb[0].mxu0
    %1506 = vmatprep.mubr.f32.mxu0 0.0
    %1507 = vmatmul.mubr.f32.gmra.mrb[0].mxu0 %v1425
    %v1508 = vpop.f32.mrb[0].mxu0
    %v1509 = vadd.f32 %v1413, %v1508
    %v1510 = vpop.f32.mrb[0].mxu0
    %1511 = vdwg.mxu0
    %v1512 = vtanh.pop %v1494
    %v1513 = vtanh.pop %v1499
    %v1514 = vtanh.pop %v1504
    %v1515 = vtanh.pop %v1509
    %v1516 = vld [vmem:[%s11] sm:$0x1]
    %v1517 = vld [vmem:[#allocation2] sm:$0x1]
    %1519 = vset.pattern.permute.xlu0 0
    %1520 = vperm.xlu0 %1519, %v1517
    %v1521 = vpop.permute.xlu0 %1520
    %v1523 = vlaneseq
    %v1524 = vshrl.u32 %v1523, 7
    %v1525 = vsub.s32 0, %v1524
    %v1526 = vrot.slane %v1521, %v1525
    %v1528 = vsel %vm1156, %v1516, 0
    %1530 = vmatprep.subr.mxu0 0.0
    %1531 = vmatpush1.msra.mxu0 %v1512
    %1532 = vmatprep.subr.mxu0 0.0
    %1533 = vmatpush1.msra.mxu0 %v1513
    %1534 = vmatprep.subr.mxu0 0.0
    %1535 = vmatpush1.msra.mxu0 %v1514
    %1536 = vmatprep.subr.mxu0 0.0
    %1537 = vmatpush1.msra.mxu0 %v1515
    %1538 = vmatprep.subr.mxu0 0.0
    %1539 = vmatpush1.msra.mxu0 0.0
    %1540 = vmatprep.subr.mxu0 0.0
    %1541 = vmatpush1.msra.mxu0 0.0
    %1542 = vmatprep.subr.mxu0 0.0
    %1543 = vmatpush1.msra.mxu0 0.0
    %1544 = vmatprep.subr.mxu0 0.0
    %1545 = vmatpush1.msra.mxu0 0.0
    %1546 = vmatprep.subr.mxu0 0.0
    %1547 = vmatpush1.msra.mxu0 0.0
    %1548 = vmatprep.subr.mxu0 0.0
    %1549 = vmatpush1.msra.mxu0 0.0
    %1550 = vmatprep.subr.mxu0 0.0
    %1551 = vmatpush1.msra.mxu0 0.0
    %1552 = vmatprep.subr.mxu0 0.0
    %1553 = vmatpush1.msra.mxu0 0.0
    %1554 = vmatprep.subr.mxu0 0.0
    %1555 = vmatpush1.msra.mxu0 0.0
    %1556 = vmatprep.subr.mxu0 0.0
    %1557 = vmatpush1.msra.mxu0 0.0
    %1558 = vmatprep.subr.mxu0 0.0
    %1559 = vmatpush1.msra.mxu0 0.0
    %1560 = vmatprep.subr.mxu0 0.0
    %1561 = vmatpush1.msra.mxu0 0.0
    %1562 = vmatprep.subr.mxu0 0.0
    %1563 = vmatpush1.msra.mxu0 0.0
    %1564 = vmatprep.subr.mxu0 0.0
    %1565 = vmatpush1.msra.mxu0 0.0
    %1566 = vmatprep.subr.mxu0 0.0
    %1567 = vmatpush1.msra.mxu0 0.0
    %1568 = vmatprep.subr.mxu0 0.0
    %1569 = vmatpush1.msra.mxu0 0.0
    %1570 = vmatprep.subr.mxu0 0.0
    %1571 = vmatpush1.msra.mxu0 0.0
    %1572 = vmatprep.subr.mxu0 0.0
    %1573 = vmatpush1.msra.mxu0 0.0
    %1574 = vmatprep.subr.mxu0 0.0
    %1575 = vmatpush1.msra.mxu0 0.0
    %1576 = vmatprep.subr.mxu0 0.0
    %1577 = vmatpush1.msra.mxu0 0.0
    %1578 = vmatprep.subr.mxu0 0.0
    %1579 = vmatpush1.msra.mxu0 0.0
    %1580 = vmatprep.subr.mxu0 0.0
    %1581 = vmatpush1.msra.mxu0 0.0
    %1582 = vmatprep.subr.mxu0 0.0
    %1583 = vmatpush1.msra.mxu0 0.0
    %1584 = vmatprep.subr.mxu0 0.0
    %1585 = vmatpush1.msra.mxu0 0.0
    %1586 = vmatprep.subr.mxu0 0.0
    %1587 = vmatpush1.msra.mxu0 0.0
    %1588 = vmatprep.subr.mxu0 0.0
    %1589 = vmatpush1.msra.mxu0 0.0
    %1590 = vmatprep.subr.mxu0 0.0
    %1591 = vmatpush1.msra.mxu0 0.0
    %1592 = vmatprep.subr.mxu0 0.0
    %1593 = vmatpush1.msra.mxu0 0.0
    %1594 = vmatprep.mubr.f32.mxu0 0.0
    %1595 = vmatmul.mubr.f32.gmra.mrb[0].mxu0 %v1528
    %v1596 = vpop.f32.mrb[0].mxu0
    %v1597 = vadd.f32 %v1526, %v1596
    %v1598 = vpop.f32.mrb[0].mxu0
    %1599 = vdwg.mxu0
    %1600 = vst [vmem:[#allocation3] sm:$0x1] %v1597
    // Predicated region
    $region54: #{tpu_custom_call.1} parent=1 // pred_check
      _
    $region55: #{tpu_custom_call.1} parent=1 // pred_check_branch
      %1602 = sbr.rel (0) target = $region57
    $region56: #{tpu_custom_call.1} parent=1 // pred_region
      %s1604 = ssub.s32 16, 16
      %1605 = vsyncadd [#allocation4], %s1604
      %s1607 = sshll.u32 [#allocation3], 4
      %s1608 = int_to_ptr.vmem [resolvable:$true] %s1607
      %1610 = dma.vmem_to_hbm [thread:$0]  %s1608, 16, %s13, [#allocation4]
    $region57: #{tpu_custom_call.1} parent=1 // pred_fallthru
      _
    // Predicated region
    $region58: #{tpu_custom_call.1} parent=1 // pred_check
      _
    $region59: #{tpu_custom_call.1} parent=1 // pred_check_branch
      %1612 = sbr.rel (0) target = $region61
    $region60: #{tpu_custom_call.1} parent=1 // pred_region
      %1613 = dma.done [#allocation4], 16
    $region61: #{tpu_custom_call.1} parent=1 // pred_fallthru
      _
    %1614 = vsyncpa [#allocation4], 1

</llo_original>
